<compile_context>
chip_gen: v7x
topology: tpu7x:2x2x1
jax: 0.10.0
libtpu: 0.0.40
codegen_flags: <defaults>
</compile_context>

<pallas_src>
import math

import jax
import jax.numpy as jnp
from jax.experimental import pallas as pl
from jax.experimental.pallas import tpu as pltpu

_LANE = 128
_SMALL_BYPASS_BYTES = 1 << 20  # below ~1 MiB, XLA's slice copy beats 2 launches

_HW_CACHE = None


def _hw_budget():
    """(per-block byte budget, vmem_limit_bytes) tuned per TPU generation."""
    global _HW_CACHE
    if _HW_CACHE is None:
        try:
            kind = jax.devices()[0].device_kind.lower()
        except Exception:  # pragma: no cover - defensive
            kind = ""
        if "v5" in kind:
            _HW_CACHE = (4 << 20, 32 << 20)   # 128 MiB VMEM, 0.82 TB/s HBM
        elif "v6" in kind:
            _HW_CACHE = (8 << 20, 64 << 20)   # 128 MiB VMEM, ~1.4 TB/s HBM
        elif "v7" in kind or "7x" in kind:
            _HW_CACHE = (6 << 20, 48 << 20)   # 64 MiB VMEM/TC, ~3.2 TB/s HBM
        else:
            _HW_CACHE = (4 << 20, 48 << 20)   # conservative default
    return _HW_CACHE


def _copy_kernel(x_ref, o_ref):
    # Pure tile-to-tile copy: DMA in, DMA out, no vector work on the critical path.
    o_ref[...] = x_ref[...]


def _split_kernel(x_ref, o1_ref, o2_ref):
    # Fallback: read the full (flattened) row slab once, write both halves.
    split = o1_ref.shape[1]  # static Python int
    o1_ref[...] = x_ref[:, :split]
    o2_ref[...] = x_ref[:, split:]


def _largest_aligned_divisor(value, cap):
    """Largest multiple of 128 dividing `value` that is <= cap (None if impossible)."""
    if value % _LANE != 0 or cap < _LANE:
        return None
    q = value // _LANE
    cap_q = cap // _LANE
    best = 0
    d = 1
    while d * d <= q:
        if q % d == 0:
            for cand in (d, q // d):
                if cand <= cap_q and cand > best:
                    best = cand
        d += 1
    return best * _LANE if best else None


def _block_dims(rows, width, col_gcd, itemsize, budget):
    """Jointly size (row_block, col_block) against the per-block byte budget."""
    sub = max(8, 32 // itemsize)                 # dtype sublane multiple
    rb_floor = rows if rows < sub else sub
    col_cap = (budget // max(1, rb_floor * itemsize)) // _LANE * _LANE
    cb = _largest_aligned_divisor(col_gcd, min(col_cap, width))
    if cb is None:
        return None, None                        # unaligned -> caller falls back
    rb_cap = budget // max(1, cb * itemsize)
    if rb_cap >= rows:
        rb = rows                                # full extent (always legal)
    else:
        rb = min(rows, max(sub, (rb_cap // sub) * sub))
    # Keep >=2 "parallel" grid iterations so v7x's second TensorCore gets work.
    if ((rows + rb - 1) // rb) * ((width + cb - 1) // cb) < 2:
        if cb % (2 * _LANE) == 0:
            cb //= 2
        elif rows >= 2 * sub:
            rb = ((rows // 2 + sub - 1) // sub) * sub
    return rb, cb


def _extract_cols(x2d, col_start, width, rb, cb, vmem_limit):
    """out[:, :] = x2d[:, col_start:col_start+width] via a tiled pure-copy kernel."""
    rows, _ = x2d.shape
    off_blocks = col_start // cb                 # exact: cb | col_start by construction
    nbytes = rows * width * x2d.dtype.itemsize
    return pl.pallas_call(
        _copy_kernel,
        out_shape=jax.ShapeDtypeStruct((rows, width), x2d.dtype),
        grid=(pl.cdiv(rows, rb), pl.cdiv(width, cb)),
        in_specs=[pl.BlockSpec((rb, cb), lambda i, j, ob=off_blocks: (i, j + ob))],
        out_specs=pl.BlockSpec((rb, cb), lambda i, j: (i, j)),
        compiler_params=pltpu.CompilerParams(
            dimension_semantics=("parallel", "parallel"),
            vmem_limit_bytes=vmem_limit),
        cost_estimate=pl.CostEstimate(
            flops=0, transcendentals=0, bytes_accessed=2 * nbytes),
    )(x2d)


def _split_cols_fallback(x2d, off, budget, vmem_limit):
    """Unaligned split: single call, row-tiled; reads each row once, writes both halves."""
    rows, feat = x2d.shape
    itemsize = x2d.dtype.itemsize
    sub = max(8, 32 // itemsize)
    # VMEM ~= 4 * rb * feat * itemsize (input + both halves, double-buffered):
    rb_cap = budget // max(1, feat * itemsize)
    if rb_cap >= rows:
        rb = rows
    else:
        rb = min(rows, max(sub, (rb_cap // sub) * sub))
    nbytes = rows * feat * itemsize
    return pl.pallas_call(
        _split_kernel,
        out_shape=(jax.ShapeDtypeStruct((rows, off), x2d.dtype),
                   jax.ShapeDtypeStruct((rows, feat - off), x2d.dtype)),
        grid=(pl.cdiv(rows, rb),),
        in_specs=[pl.BlockSpec((rb, feat), lambda i: (i, 0))],
        out_specs=(pl.BlockSpec((rb, off), lambda i: (i, 0)),
                   pl.BlockSpec((rb, feat - off), lambda i: (i, 0))),
        compiler_params=pltpu.CompilerParams(
            dimension_semantics=("parallel",),
            vmem_limit_bytes=vmem_limit),
        cost_estimate=pl.CostEstimate(
            flops=0, transcendentals=0, bytes_accessed=2 * nbytes),
    )(x2d)


def _slice_cols(x2d, off):
    rows, feat = x2d.shape
    w1, w2 = off, feat - off
    itemsize = x2d.dtype.itemsize
    total_bytes = rows * feat * itemsize
    # Tiny tensors or sub-128-lane halves: plain jnp slices (avoids two kernel
    # launches and masked partial stores).
    if total_bytes < _SMALL_BYPASS_BYTES or w1 < _LANE or w2 < _LANE:
        return x2d[:, :off], x2d[:, off:]
    budget, vmem_limit = _hw_budget()
    rb1, cb1 = _block_dims(rows, w1, w1, itemsize, budget)               # col_start = 0
    rb2, cb2 = _block_dims(rows, w2, math.gcd(off, w2), itemsize, budget)  # aligned offset
    if cb1 is not None and cb2 is not None:
        return (_extract_cols(x2d, 0, w1, rb1, cb1, vmem_limit),
                _extract_cols(x2d, off, w2, rb2, cb2, vmem_limit))
    return _split_cols_fallback(x2d, off, budget, vmem_limit)


def slice_layer(x, slice_point=2):
    """Pallas equivalent of SliceLayer.forward: (x[:, :split], x[:, split:])."""
    split = x.shape[1] // slice_point
    if x.ndim == 2:
        rows, feat = x.shape
        x2d = x
        off = split
        shape1 = (rows, split)
        shape2 = (rows, feat - split)
    else:
        n, c = x.shape[0], x.shape[1]
        spatial = tuple(x.shape[2:])
        hw = int(math.prod(spatial))
        x2d = x.reshape(n, c * hw)   # contiguous row-major -> free reshape
        off = split * hw
        shape1 = (n, split) + spatial
        shape2 = (n, c - split) + spatial
    out1, out2 = _slice_cols(x2d, off)
    return out1.reshape(shape1), out2.reshape(shape2)


if __name__ == "__main__":
    key = jax.random.PRNGKey(0)
    k1, k2, k3, k4 = jax.random.split(key, 4)

    # 1) Spec-implied 4-D case (tiny): NCHW, split channels in half.
    x4 = jax.random.normal(k1, (2, 4, 16, 16), dtype=jnp.float32)
    a4, b4 = slice_layer(x4, slice_point=2)
    jax.block_until_ready((a4, b4))
    assert a4.shape == (2, 2, 16, 16) and b4.shape == (2, 2, 16, 16)
    assert jnp.allclose(a4, x4[:, :2, :, :])
    assert jnp.allclose(b4, x4[:, 2:, :, :])

    # 2) Spec-implied 2-D case (tiny): (batch, hidden).
    x2 = jax.random.normal(k2, (2, 32), dtype=jnp.float32)
    a2, b2 = slice_layer(x2, slice_point=2)
    jax.block_until_ready((a2, b2))
    assert a2.shape == (2, 16) and b2.shape == (2, 16)
    assert jnp.allclose(a2, x2[:, :16])
    assert jnp.allclose(b2, x2[:, 16:])

    # 3) Medium 4-D case: flattened split offset = 8*32*32 = 8192 (128-aligned)
    #    -> aligned pure-copy Pallas fast path (two lane-dense tiled copies).
    xm = jax.random.normal(k3, (8, 16, 32, 32), dtype=jnp.float32)
    am, bm = slice_layer(xm, slice_point=2)
    jax.block_until_ready((am, bm))
    assert am.shape == (8, 8, 32, 32) and bm.shape == (8, 8, 32, 32)
    assert jnp.allclose(am, xm[:, :8, :, :])
    assert jnp.allclose(bm, xm[:, 8:, :, :])

    # 4) Medium 2-D case with a non-128-aligned split (offset 608) and both
    #    halves >=128 lanes -> VMEM-bounded single-call fallback Pallas path.
    xu = jax.random.normal(k4, (1024, 1216), dtype=jnp.float32)
    au, bu = slice_layer(xu, slice_point=2)
    jax.block_until_ready((au, bu))
    assert au.shape == (1024, 608) and bu.shape == (1024, 608)
    assert jnp.allclose(au, xu[:, :608])
    assert jnp.allclose(bu, xu[:, 608:])

    print("KERNEL_OK")
</pallas_src>

<mosaic_0001>
module attributes {stable_mosaic.version = 11 : i64} {
  func.func @_split_kernel(%arg0: i32, %arg1: memref<856x1216xf32, #tpu.memory_space<vmem>>, %arg2: memref<856x608xf32, #tpu.memory_space<vmem>>, %arg3: memref<856x608xf32, #tpu.memory_space<vmem>>) attributes {dimension_semantics = [#tpu.dimension_semantics<parallel>], iteration_bounds = array<i64: 2>, scalar_prefetch = 0 : i64, scratch_operands = 0 : i64, tpu.core_type = #tpu.core_type<tc>, window_params = [{transform_indices = @transform_0, window_bounds = array<i64: 856, 1216>}, {transform_indices = @transform_1, window_bounds = array<i64: 856, 608>}, {transform_indices = @transform_2, window_bounds = array<i64: 856, 608>}]} {
    %c0 = arith.constant 0 : index
    %c0_0 = arith.constant 0 : index
    %0 = vector.load %arg1[%c0, %c0_0] : memref<856x1216xf32, #tpu.memory_space<vmem>>, vector<856x608xf32>
    %c0_1 = arith.constant 0 : index
    %c0_2 = arith.constant 0 : index
    %1 = vector.load %arg2[%c0_1, %c0_2] : memref<856x608xf32, #tpu.memory_space<vmem>>, vector<856x608xf32>
    tpu.vector_store %arg2[%c0_1, %c0_2], %0 {strides = array<i32>} : memref<856x608xf32, #tpu.memory_space<vmem>>, vector<856x608xf32>,
    %c0_3 = arith.constant 0 : index
    %c608 = arith.constant 608 : index
    %2 = vector.load %arg1[%c0_3, %c608] : memref<856x1216xf32, #tpu.memory_space<vmem>>, vector<856x608xf32>
    %c0_4 = arith.constant 0 : index
    %c0_5 = arith.constant 0 : index
    %3 = vector.load %arg3[%c0_4, %c0_5] : memref<856x608xf32, #tpu.memory_space<vmem>>, vector<856x608xf32>
    tpu.vector_store %arg3[%c0_4, %c0_5], %2 {strides = array<i32>} : memref<856x608xf32, #tpu.memory_space<vmem>>, vector<856x608xf32>,
    return
  }
  func.func @transform_0(%arg0: i32) -> (i32, i32) {
    %c0_i32 = arith.constant 0 : i32
    %c0_i32_0 = arith.constant 0 : i32
    return %arg0, %c0_i32 : i32, i32
  }
  func.func @transform_1(%arg0: i32) -> (i32, i32) {
    %c0_i32 = arith.constant 0 : i32
    %c0_i32_0 = arith.constant 0 : i32
    return %arg0, %c0_i32 : i32, i32
  }
  func.func @transform_2(%arg0: i32) -> (i32, i32) {
    %c0_i32 = arith.constant 0 : i32
    %c0_i32_0 = arith.constant 0 : i32
    return %arg0, %c0_i32 : i32, i32
  }
}

</mosaic_0001>

<llo_original>
// kernel: tpu_custom_call.1
$region0: #{tpu_custom_call.1}
  #allocation0 [shape = 'u32[]', space=smem, size = 0x4, offset = 0x4, fixed_abs, tag = 'smem constant byte address 0x4 - core index']
  #allocation1 [shape = 'u32[144,128]{1,0:T(1,128)}', space=vmem, size = 0x12000, scoped, tag = 'internal scratch']
  %s0 = inlined_call_operand.vmem [shape: f32[1024,1216], index: 0, kind: input, shape index: {}]
  %s1 = inlined_call_operand.vmem [shape: f32[1024,608], index: 1, kind: output, shape index: {0}]
  %s2 = inlined_call_operand.vmem [shape: f32[1024,608], index: 2, kind: output, shape index: {1}]
  %3 = xla_tuple %s1, %s2
  %s4 = sld [smem:[#allocation0]]
  $region97: #{tpu_custom_call.1} parent=0
    _
  %s6 = ssub.s32 1, %s4
  %s7 = scalar_select 0, %s6, %s4
  $region1: #{tpu_custom_call.1} parent=0
    #allocation2 [shape = 'u8[4382720]{0}', space=vmem, size = 0x42e000, scoped, tag = 'output window, operand 0']
    #allocation3 [shape = 'u8[4382720]{0}', space=vmem, size = 0x42e000, scoped, tag = 'output window, operand 1']
    loop: start=0, step=1, limit=4
    $region2: #{tpu_custom_call.1} parent=1 // loop_pre_header
      _
    $region3: #{tpu_custom_call.1} parent=1 // loop_header
      %s9 = sphi 0, %s13
      %p10 = scmp.ge.s32.totalorder %s9, 4
      %s19 = sphi 0, %s21
      %s22 = sphi 0, %s19
      %s23 = sphi 0, %s22
      %s39 = sphi 0, %s23
      %s45 = sphi 0, %s47
      %s48 = sphi 0, %s45
      %s49 = sphi 0, %s48
      %s65 = sphi 0, %s49
      %s71 = sphi 0, %s73
      %s74 = sphi 0, %s71
      %s75 = sphi 0, %s74
      %s91 = sphi 0, %s75
    $region4: #{tpu_custom_call.1} parent=1 // loop_header_branch
      %12 = sbr.rel (%p10) target = $region8
    $region5: #{tpu_custom_call.1} parent=1 // loop_body
      %s14 = ssub.s32 %s9, 1
      %s15 = ssub.s32 %s9, 2
      %s16 = sadd.s32 %s9, 1
      %s17 = ssub.s32 %s9, %s16
      %p18 = scmp.eq.s32.totalorder %s17, 0
      %s20 = sadd.s32 %s19, 1
      %s21 = scalar_select %p18, %s19, %s20
      %p24 = pneg %p18
      %p25 = scmp.eq.s32.totalorder %s9, 1
      %p26 = por %p24, %p25
      %p27 = scmp.ne.s32.totalorder %s19, %s22
      %p28 = scmp.eq.s32.totalorder %s9, 0
      %p29 = por %p27, %p28
      %p30 = scmp.ne.s32.totalorder %s19, %s22
      %p31 = scmp.eq.s32.totalorder %s14, 1
      %p32 = por %p30, %p31
      %p33 = scmp.ne.s32.totalorder %s22, %s23
      %p34 = scmp.eq.s32.totalorder %s14, 0
      %p35 = por %p33, %p34
      %p36 = scmp.ne.s32.totalorder %s22, %s23
      %p37 = scmp.eq.s32.totalorder %s15, 1
      %p38 = por %p36, %p37
      %p40 = scmp.ne.s32.totalorder %s23, %s39
      %p41 = scmp.eq.s32.totalorder %s15, 0
      %p42 = por %p40, %p41
      %s43 = ssub.s32 %s9, %s16
      %p44 = scmp.eq.s32.totalorder %s43, 0
      %s46 = sadd.s32 %s45, 1
      %s47 = scalar_select %p44, %s45, %s46
      %p50 = pneg %p44
      %p51 = scmp.eq.s32.totalorder %s9, 1
      %p52 = por %p50, %p51
      %p53 = scmp.ne.s32.totalorder %s45, %s48
      %p54 = scmp.eq.s32.totalorder %s9, 0
      %p55 = por %p53, %p54
      %p56 = scmp.ne.s32.totalorder %s45, %s48
      %p57 = scmp.eq.s32.totalorder %s14, 1
      %p58 = por %p56, %p57
      %p59 = scmp.ne.s32.totalorder %s48, %s49
      %p60 = scmp.eq.s32.totalorder %s14, 0
      %p61 = por %p59, %p60
      %p62 = scmp.ne.s32.totalorder %s48, %s49
      %p63 = scmp.eq.s32.totalorder %s15, 1
      %p64 = por %p62, %p63
      %p66 = scmp.ne.s32.totalorder %s49, %s65
      %p67 = scmp.eq.s32.totalorder %s15, 0
      %p68 = por %p66, %p67
      %s69 = ssub.s32 %s9, %s16
      %p70 = scmp.eq.s32.totalorder %s69, 0
      %s72 = sadd.s32 %s71, 1
      %s73 = scalar_select %p70, %s71, %s72
      %p76 = pneg %p70
      %p77 = scmp.eq.s32.totalorder %s9, 1
      %p78 = por %p76, %p77
      %p79 = scmp.ne.s32.totalorder %s71, %s74
      %p80 = scmp.eq.s32.totalorder %s9, 0
      %p81 = por %p79, %p80
      %p82 = scmp.ne.s32.totalorder %s71, %s74
      %p83 = scmp.eq.s32.totalorder %s14, 1
      %p84 = por %p82, %p83
      %p85 = scmp.ne.s32.totalorder %s74, %s75
      %p86 = scmp.eq.s32.totalorder %s14, 0
      %p87 = por %p85, %p86
      %p88 = scmp.ne.s32.totalorder %s74, %s75
      %p89 = scmp.eq.s32.totalorder %s15, 1
      %p90 = por %p88, %p89
      %p92 = scmp.ne.s32.totalorder %s75, %s91
      %p93 = scmp.eq.s32.totalorder %s15, 0
      %p94 = por %p92, %p93
      %p95 = scmp.le.s32.totalorder 1, %s9
      %p96 = scmp.lt.s32.totalorder %s9, 3
      %p97 = pnand %p95, %p96
      %p98 = pneg %p97
      // Predicated region
      $region9: #{tpu_custom_call.1} parent=5 // pred_check
        _
      $region10: #{tpu_custom_call.1} parent=5 // pred_check_branch
        %100 = sbr.rel (%p97) target = $region12
      $region11: #{tpu_custom_call.1} parent=5 // pred_region
        %s101 = ssub.s32 %s9, 1
      $region12: #{tpu_custom_call.1} parent=5 // pred_fallthru
        _
      %p102 = scmp.lt.s32.totalorder %s9, 2
      // Predicated region
      $region13: #{tpu_custom_call.1} parent=5 // pred_check
        %p103 = pneg %p102
      $region14: #{tpu_custom_call.1} parent=5 // pred_check_branch
        %105 = sbr.rel (%p103) target = $region16
      $region15: #{tpu_custom_call.1} parent=5 // pred_region
        // Predicated region
        $region17: #{tpu_custom_call.1} parent=15 // pred_check
          %p106 = pneg %p29
        $region18: #{tpu_custom_call.1} parent=15 // pred_check_branch
          %108 = sbr.rel (%p106) target = $region20
        $region19: #{tpu_custom_call.1} parent=15 // pred_region
          %s109 = smul.u32 107, %s9
          %s110 = ssub.s32 128, %s109
          %p111 = scmp.lt.s32.totalorder %s110, 107
          %s112 = scalar_select %p111, %s110, 107
          %s113 = smul.u32 128, %s112
          %s114 = smul.u32 %s113, 10
          %p115 = scmp.lt.s32.totalorder %s109, 127
          %s116 = scalar_select %p115, %s109, 127
          %s117 = smul.addr %s116, 10
          %s118 = smul.addr %s117, 8
          %s119 = scalar_lea.vmem %s0, %s118
          %s120 = smul.u32 107, %s9
          %s121 = ssub.s32 128, %s120
          %p122 = scmp.lt.s32.totalorder %s121, 107
          %s123 = scalar_select %p122, %s121, 107
          %s124 = smul.u32 128, %s123
          %s125 = smul.u32 %s124, 10
        $region20: #{tpu_custom_call.1} parent=15 // pred_fallthru
          _
      $region16: #{tpu_custom_call.1} parent=5 // pred_fallthru
        _
      %p126 = scmp.le.s32.totalorder 1, %s9
      %p127 = scmp.lt.s32.totalorder %s9, 3
      %p128 = pnand %p126, %p127
      %p129 = pneg %p128
      // Predicated region
      $region21: #{tpu_custom_call.1} parent=5 // pred_check
        _
      $region22: #{tpu_custom_call.1} parent=5 // pred_check_branch
        %131 = sbr.rel (%p128) target = $region24
      $region23: #{tpu_custom_call.1} parent=5 // pred_region
        %s132 = ssub.s32 %s9, 1
        %s133 = smul.u32 107, %s14
        %s134 = ssub.s32 128, %s133
        %p135 = scmp.lt.s32.totalorder %s134, 107
        %s136 = scalar_select %p135, %s134, 107
        %s137 = smul.u32 128, %s136
        %s138 = smul.u32 %s137, 10
        %p139 = scmp.lt.s32.totalorder %s133, 127
        %s140 = scalar_select %p139, %s133, 127
        %s141 = smul.addr %s140, 10
        %s142 = smul.addr %s141, 8
        %s143 = scalar_lea.vmem %s0, %s142
        %p144 = pneg %p35
        %p145 = pneg %p32
        %p146 = pneg %p61
        %p147 = pneg %p58
        %s148 = sand.u32 %s48, 1
        %s149 = sand.u32 %s48, 1
        %s150 = smul.addr %s149, 4280
        %s151 = scalar_lea.vmem [#allocation2], %s150
        %p152 = pneg %p87
        %p153 = pneg %p84
        %s154 = sand.u32 %s74, 1
        %s155 = sand.u32 %s74, 1
        %s156 = smul.addr %s155, 4280
        %s157 = scalar_lea.vmem [#allocation3], %s156
        %s158 = smul.u32 107, %s14
        %s159 = ssub.s32 128, %s158
        %p160 = scmp.lt.s32.totalorder %s159, 107
        %s161 = scalar_select %p160, %s159, 107
        %s162 = smul.u32 128, %s161
        %s163 = smul.u32 %s162, 10
        %p164 = scmp.lt.s32.totalorder %s158, 127
        %s165 = scalar_select %p164, %s158, 127
        %s166 = smul.addr %s165, 10
        %s167 = smul.addr %s166, 8
        %s168 = scalar_lea.vmem %s0, %s167
        %s169 = smul.u32 107, %s14
        %s170 = ssub.s32 128, %s169
        %p171 = scmp.lt.s32.totalorder %s170, 107
        %s172 = scalar_select %p171, %s170, 107
        %s173 = smul.u32 128, %s172
        %s174 = smul.u32 %s173, 10
        %s175 = smul.u32 107, %s14
        %s176 = ssub.s32 128, %s175
        %p177 = scmp.lt.s32.totalorder %s176, 107
        %s178 = scalar_select %p177, %s176, 107
        %s179 = smul.u32 128, %s178
        %s180 = smul.u32 %s179, 5
        %s181 = smul.u32 107, %s14
        %s182 = ssub.s32 128, %s181
        %p183 = scmp.lt.s32.totalorder %s182, 107
        %s184 = scalar_select %p183, %s182, 107
        %s185 = smul.u32 128, %s184
        %s186 = smul.u32 %s185, 5
        %v187 = vld [vmem:[%s168] sm:$0xff]
        %v188 = vld [vmem:[%s168 + $0x8] sm:$0xff]
        %v189 = vld [vmem:[%s168 + $0x10] sm:$0xff]
        %v190 = vld [vmem:[%s168 + $0x18] sm:$0xff]
        %v191 = vld [vmem:[%s168 + $0x20] sm:$0xff]
        %v192 = vld [vmem:[%s168 + $0x50] sm:$0xff]
        %v193 = vld [vmem:[%s168 + $0x58] sm:$0xff]
        %v194 = vld [vmem:[%s168 + $0x60] sm:$0xff]
        %v195 = vld [vmem:[%s168 + $0x68] sm:$0xff]
        %v196 = vld [vmem:[%s168 + $0x70] sm:$0xff]
        %v197 = vld [vmem:[%s168 + $0xa0] sm:$0xff]
        %v198 = vld [vmem:[%s168 + $0xa8] sm:$0xff]
        %v199 = vld [vmem:[%s168 + $0xb0] sm:$0xff]
        %v200 = vld [vmem:[%s168 + $0xb8] sm:$0xff]
        %v201 = vld [vmem:[%s168 + $0xc0] sm:$0xff]
        %v202 = vld [vmem:[%s168 + $0xf0] sm:$0xff]
        %v203 = vld [vmem:[%s168 + $0xf8] sm:$0xff]
        %v204 = vld [vmem:[%s168 + $0x100] sm:$0xff]
        %v205 = vld [vmem:[%s168 + $0x108] sm:$0xff]
        %v206 = vld [vmem:[%s168 + $0x110] sm:$0xff]
        %v207 = vld [vmem:[%s168 + $0x140] sm:$0xff]
        %v208 = vld [vmem:[%s168 + $0x148] sm:$0xff]
        %v209 = vld [vmem:[%s168 + $0x150] sm:$0xff]
        %v210 = vld [vmem:[%s168 + $0x158] sm:$0xff]
        %v211 = vld [vmem:[%s168 + $0x160] sm:$0xff]
        %v212 = vld [vmem:[%s168 + $0x190] sm:$0xff]
        %v213 = vld [vmem:[%s168 + $0x198] sm:$0xff]
        %v214 = vld [vmem:[%s168 + $0x1a0] sm:$0xff]
        %v215 = vld [vmem:[%s168 + $0x1a8] sm:$0xff]
        %v216 = vld [vmem:[%s168 + $0x1b0] sm:$0xff]
        %v217 = vld [vmem:[%s168 + $0x1e0] sm:$0xff]
        %v218 = vld [vmem:[%s168 + $0x1e8] sm:$0xff]
        %v219 = vld [vmem:[%s168 + $0x1f0] sm:$0xff]
        %v220 = vld [vmem:[%s168 + $0x1f8] sm:$0xff]
        %v221 = vld [vmem:[%s168 + $0x200] sm:$0xff]
        %v222 = vld [vmem:[%s168 + $0x230] sm:$0xff]
        %v223 = vld [vmem:[%s168 + $0x238] sm:$0xff]
        %v224 = vld [vmem:[%s168 + $0x240] sm:$0xff]
        %v225 = vld [vmem:[%s168 + $0x248] sm:$0xff]
        %v226 = vld [vmem:[%s168 + $0x250] sm:$0xff]
        %v227 = vld [vmem:[%s168 + $0x280] sm:$0xff]
        %v228 = vld [vmem:[%s168 + $0x288] sm:$0xff]
        %v229 = vld [vmem:[%s168 + $0x290] sm:$0xff]
        %v230 = vld [vmem:[%s168 + $0x298] sm:$0xff]
        %v231 = vld [vmem:[%s168 + $0x2a0] sm:$0xff]
        %v232 = vld [vmem:[%s168 + $0x2d0] sm:$0xff]
        %v233 = vld [vmem:[%s168 + $0x2d8] sm:$0xff]
        %v234 = vld [vmem:[%s168 + $0x2e0] sm:$0xff]
        %v235 = vld [vmem:[%s168 + $0x2e8] sm:$0xff]
        %v236 = vld [vmem:[%s168 + $0x2f0] sm:$0xff]
        %v237 = vld [vmem:[%s168 + $0x320] sm:$0xff]
        %v238 = vld [vmem:[%s168 + $0x328] sm:$0xff]
        %v239 = vld [vmem:[%s168 + $0x330] sm:$0xff]
        %v240 = vld [vmem:[%s168 + $0x338] sm:$0xff]
        %v241 = vld [vmem:[%s168 + $0x340] sm:$0xff]
        %v242 = vld [vmem:[%s168 + $0x370] sm:$0xff]
        %v243 = vld [vmem:[%s168 + $0x378] sm:$0xff]
        %v244 = vld [vmem:[%s168 + $0x380] sm:$0xff]
        %v245 = vld [vmem:[%s168 + $0x388] sm:$0xff]
        %v246 = vld [vmem:[%s168 + $0x390] sm:$0xff]
        %v247 = vld [vmem:[%s168 + $0x3c0] sm:$0xff]
        %v248 = vld [vmem:[%s168 + $0x3c8] sm:$0xff]
        %v249 = vld [vmem:[%s168 + $0x3d0] sm:$0xff]
        %v250 = vld [vmem:[%s168 + $0x3d8] sm:$0xff]
        %v251 = vld [vmem:[%s168 + $0x3e0] sm:$0xff]
        %v252 = vld [vmem:[%s168 + $0x410] sm:$0xff]
        %v253 = vld [vmem:[%s168 + $0x418] sm:$0xff]
        %v254 = vld [vmem:[%s168 + $0x420] sm:$0xff]
        %v255 = vld [vmem:[%s168 + $0x428] sm:$0xff]
        %v256 = vld [vmem:[%s168 + $0x430] sm:$0xff]
        %v257 = vld [vmem:[%s168 + $0x460] sm:$0xff]
        %v258 = vld [vmem:[%s168 + $0x468] sm:$0xff]
        %v259 = vld [vmem:[%s168 + $0x470] sm:$0xff]
        %v260 = vld [vmem:[%s168 + $0x478] sm:$0xff]
        %v261 = vld [vmem:[%s168 + $0x480] sm:$0xff]
        %v262 = vld [vmem:[%s168 + $0x4b0] sm:$0xff]
        %v263 = vld [vmem:[%s168 + $0x4b8] sm:$0xff]
        %v264 = vld [vmem:[%s168 + $0x4c0] sm:$0xff]
        %v265 = vld [vmem:[%s168 + $0x4c8] sm:$0xff]
        %v266 = vld [vmem:[%s168 + $0x4d0] sm:$0xff]
        %v267 = vld [vmem:[%s168 + $0x500] sm:$0xff]
        %v268 = vld [vmem:[%s168 + $0x508] sm:$0xff]
        %v269 = vld [vmem:[%s168 + $0x510] sm:$0xff]
        %v270 = vld [vmem:[%s168 + $0x518] sm:$0xff]
        %v271 = vld [vmem:[%s168 + $0x520] sm:$0xff]
        %v272 = vld [vmem:[%s168 + $0x550] sm:$0xff]
        %v273 = vld [vmem:[%s168 + $0x558] sm:$0xff]
        %v274 = vld [vmem:[%s168 + $0x560] sm:$0xff]
        %v275 = vld [vmem:[%s168 + $0x568] sm:$0xff]
        %v276 = vld [vmem:[%s168 + $0x570] sm:$0xff]
        %v277 = vld [vmem:[%s168 + $0x5a0] sm:$0xff]
        %v278 = vld [vmem:[%s168 + $0x5a8] sm:$0xff]
        %v279 = vld [vmem:[%s168 + $0x5b0] sm:$0xff]
        %v280 = vld [vmem:[%s168 + $0x5b8] sm:$0xff]
        %v281 = vld [vmem:[%s168 + $0x5c0] sm:$0xff]
        %v282 = vld [vmem:[%s168 + $0x5f0] sm:$0xff]
        %v283 = vld [vmem:[%s168 + $0x5f8] sm:$0xff]
        %v284 = vld [vmem:[%s168 + $0x600] sm:$0xff]
        %v285 = vld [vmem:[%s168 + $0x608] sm:$0xff]
        %v286 = vld [vmem:[%s168 + $0x610] sm:$0xff]
        %v287 = vld [vmem:[%s168 + $0x640] sm:$0xff]
        %v288 = vld [vmem:[%s168 + $0x648] sm:$0xff]
        %v289 = vld [vmem:[%s168 + $0x650] sm:$0xff]
        %v290 = vld [vmem:[%s168 + $0x658] sm:$0xff]
        %v291 = vld [vmem:[%s168 + $0x660] sm:$0xff]
        %v292 = vld [vmem:[%s168 + $0x690] sm:$0xff]
        %v293 = vld [vmem:[%s168 + $0x698] sm:$0xff]
        %v294 = vld [vmem:[%s168 + $0x6a0] sm:$0xff]
        %v295 = vld [vmem:[%s168 + $0x6a8] sm:$0xff]
        %v296 = vld [vmem:[%s168 + $0x6b0] sm:$0xff]
        %v297 = vld [vmem:[%s168 + $0x6e0] sm:$0xff]
        %v298 = vld [vmem:[%s168 + $0x6e8] sm:$0xff]
        %v299 = vld [vmem:[%s168 + $0x6f0] sm:$0xff]
        %v300 = vld [vmem:[%s168 + $0x6f8] sm:$0xff]
        %v301 = vld [vmem:[%s168 + $0x700] sm:$0xff]
        %v302 = vld [vmem:[%s168 + $0x730] sm:$0xff]
        %v303 = vld [vmem:[%s168 + $0x738] sm:$0xff]
        %v304 = vld [vmem:[%s168 + $0x740] sm:$0xff]
        %v305 = vld [vmem:[%s168 + $0x748] sm:$0xff]
        %v306 = vld [vmem:[%s168 + $0x750] sm:$0xff]
        %v307 = vld [vmem:[%s168 + $0x780] sm:$0xff]
        %v308 = vld [vmem:[%s168 + $0x788] sm:$0xff]
        %v309 = vld [vmem:[%s168 + $0x790] sm:$0xff]
        %v310 = vld [vmem:[%s168 + $0x798] sm:$0xff]
        %v311 = vld [vmem:[%s168 + $0x7a0] sm:$0xff]
        %v312 = vld [vmem:[%s168 + $0x7d0] sm:$0xff]
        %v313 = vld [vmem:[%s168 + $0x7d8] sm:$0xff]
        %v314 = vld [vmem:[%s168 + $0x7e0] sm:$0xff]
        %v315 = vld [vmem:[%s168 + $0x7e8] sm:$0xff]
        %v316 = vld [vmem:[%s168 + $0x7f0] sm:$0xff]
        %v317 = vld [vmem:[%s168 + $0x820] sm:$0xff]
        %v318 = vld [vmem:[%s168 + $0x828] sm:$0xff]
        %v319 = vld [vmem:[%s168 + $0x830] sm:$0xff]
        %v320 = vld [vmem:[%s168 + $0x838] sm:$0xff]
        %v321 = vld [vmem:[%s168 + $0x840] sm:$0xff]
        %v322 = vld [vmem:[%s168 + $0x870] sm:$0xff]
        %v323 = vld [vmem:[%s168 + $0x878] sm:$0xff]
        %v324 = vld [vmem:[%s168 + $0x880] sm:$0xff]
        %v325 = vld [vmem:[%s168 + $0x888] sm:$0xff]
        %v326 = vld [vmem:[%s168 + $0x890] sm:$0xff]
        %v327 = vld [vmem:[%s168 + $0x8c0] sm:$0xff]
        %v328 = vld [vmem:[%s168 + $0x8c8] sm:$0xff]
        %v329 = vld [vmem:[%s168 + $0x8d0] sm:$0xff]
        %v330 = vld [vmem:[%s168 + $0x8d8] sm:$0xff]
        %v331 = vld [vmem:[%s168 + $0x8e0] sm:$0xff]
        %v332 = vld [vmem:[%s168 + $0x910] sm:$0xff]
        %v333 = vld [vmem:[%s168 + $0x918] sm:$0xff]
        %v334 = vld [vmem:[%s168 + $0x920] sm:$0xff]
        %v335 = vld [vmem:[%s168 + $0x928] sm:$0xff]
        %v336 = vld [vmem:[%s168 + $0x930] sm:$0xff]
        %v337 = vld [vmem:[%s168 + $0x960] sm:$0xff]
        %v338 = vld [vmem:[%s168 + $0x968] sm:$0xff]
        %v339 = vld [vmem:[%s168 + $0x970] sm:$0xff]
        %v340 = vld [vmem:[%s168 + $0x978] sm:$0xff]
        %v341 = vld [vmem:[%s168 + $0x980] sm:$0xff]
        %v342 = vld [vmem:[%s168 + $0x9b0] sm:$0xff]
        %v343 = vld [vmem:[%s168 + $0x9b8] sm:$0xff]
        %v344 = vld [vmem:[%s168 + $0x9c0] sm:$0xff]
        %v345 = vld [vmem:[%s168 + $0x9c8] sm:$0xff]
        %v346 = vld [vmem:[%s168 + $0x9d0] sm:$0xff]
        %v347 = vld [vmem:[%s168 + $0xa00] sm:$0xff]
        %v348 = vld [vmem:[%s168 + $0xa08] sm:$0xff]
        %v349 = vld [vmem:[%s168 + $0xa10] sm:$0xff]
        %v350 = vld [vmem:[%s168 + $0xa18] sm:$0xff]
        %v351 = vld [vmem:[%s168 + $0xa20] sm:$0xff]
        %v352 = vld [vmem:[%s168 + $0xa50] sm:$0xff]
        %v353 = vld [vmem:[%s168 + $0xa58] sm:$0xff]
        %v354 = vld [vmem:[%s168 + $0xa60] sm:$0xff]
        %v355 = vld [vmem:[%s168 + $0xa68] sm:$0xff]
        %v356 = vld [vmem:[%s168 + $0xa70] sm:$0xff]
        %v357 = vld [vmem:[%s168 + $0xaa0] sm:$0xff]
        %v358 = vld [vmem:[%s168 + $0xaa8] sm:$0xff]
        %v359 = vld [vmem:[%s168 + $0xab0] sm:$0xff]
        %v360 = vld [vmem:[%s168 + $0xab8] sm:$0xff]
        %v361 = vld [vmem:[%s168 + $0xac0] sm:$0xff]
        %v362 = vld [vmem:[%s168 + $0xaf0] sm:$0xff]
        %v363 = vld [vmem:[%s168 + $0xaf8] sm:$0xff]
        %v364 = vld [vmem:[%s168 + $0xb00] sm:$0xff]
        %v365 = vld [vmem:[%s168 + $0xb08] sm:$0xff]
        %v366 = vld [vmem:[%s168 + $0xb10] sm:$0xff]
        %v367 = vld [vmem:[%s168 + $0xb40] sm:$0xff]
        %v368 = vld [vmem:[%s168 + $0xb48] sm:$0xff]
        %v369 = vld [vmem:[%s168 + $0xb50] sm:$0xff]
        %v370 = vld [vmem:[%s168 + $0xb58] sm:$0xff]
        %v371 = vld [vmem:[%s168 + $0xb60] sm:$0xff]
        %v372 = vld [vmem:[%s168 + $0xb90] sm:$0xff]
        %v373 = vld [vmem:[%s168 + $0xb98] sm:$0xff]
        %v374 = vld [vmem:[%s168 + $0xba0] sm:$0xff]
        %v375 = vld [vmem:[%s168 + $0xba8] sm:$0xff]
        %v376 = vld [vmem:[%s168 + $0xbb0] sm:$0xff]
        %v377 = vld [vmem:[%s168 + $0xbe0] sm:$0xff]
        %v378 = vld [vmem:[%s168 + $0xbe8] sm:$0xff]
        %v379 = vld [vmem:[%s168 + $0xbf0] sm:$0xff]
        %v380 = vld [vmem:[%s168 + $0xbf8] sm:$0xff]
        %v381 = vld [vmem:[%s168 + $0xc00] sm:$0xff]
        %v382 = vld [vmem:[%s168 + $0xc30] sm:$0xff]
        %v383 = vld [vmem:[%s168 + $0xc38] sm:$0xff]
        %v384 = vld [vmem:[%s168 + $0xc40] sm:$0xff]
        %v385 = vld [vmem:[%s168 + $0xc48] sm:$0xff]
        %v386 = vld [vmem:[%s168 + $0xc50] sm:$0xff]
        %v387 = vld [vmem:[%s168 + $0xc80] sm:$0xff]
        %v388 = vld [vmem:[%s168 + $0xc88] sm:$0xff]
        %v389 = vld [vmem:[%s168 + $0xc90] sm:$0xff]
        %v390 = vld [vmem:[%s168 + $0xc98] sm:$0xff]
        %v391 = vld [vmem:[%s168 + $0xca0] sm:$0xff]
        %v392 = vld [vmem:[%s168 + $0xcd0] sm:$0xff]
        %v393 = vld [vmem:[%s168 + $0xcd8] sm:$0xff]
        %v394 = vld [vmem:[%s168 + $0xce0] sm:$0xff]
        %v395 = vld [vmem:[%s168 + $0xce8] sm:$0xff]
        %v396 = vld [vmem:[%s168 + $0xcf0] sm:$0xff]
        %v397 = vld [vmem:[%s168 + $0xd20] sm:$0xff]
        %v398 = vld [vmem:[%s168 + $0xd28] sm:$0xff]
        %v399 = vld [vmem:[%s168 + $0xd30] sm:$0xff]
        %v400 = vld [vmem:[%s168 + $0xd38] sm:$0xff]
        %v401 = vld [vmem:[%s168 + $0xd40] sm:$0xff]
        %v402 = vld [vmem:[%s168 + $0xd70] sm:$0xff]
        %v403 = vld [vmem:[%s168 + $0xd78] sm:$0xff]
        %v404 = vld [vmem:[%s168 + $0xd80] sm:$0xff]
        %v405 = vld [vmem:[%s168 + $0xd88] sm:$0xff]
        %v406 = vld [vmem:[%s168 + $0xd90] sm:$0xff]
        %v407 = vld [vmem:[%s168 + $0xdc0] sm:$0xff]
        %v408 = vld [vmem:[%s168 + $0xdc8] sm:$0xff]
        %v409 = vld [vmem:[%s168 + $0xdd0] sm:$0xff]
        %v410 = vld [vmem:[%s168 + $0xdd8] sm:$0xff]
        %v411 = vld [vmem:[%s168 + $0xde0] sm:$0xff]
        %v412 = vld [vmem:[%s168 + $0xe10] sm:$0xff]
        %v413 = vld [vmem:[%s168 + $0xe18] sm:$0xff]
        %v414 = vld [vmem:[%s168 + $0xe20] sm:$0xff]
        %v415 = vld [vmem:[%s168 + $0xe28] sm:$0xff]
        %v416 = vld [vmem:[%s168 + $0xe30] sm:$0xff]
        %v417 = vld [vmem:[%s168 + $0xe60] sm:$0xff]
        %v418 = vld [vmem:[%s168 + $0xe68] sm:$0xff]
        %v419 = vld [vmem:[%s168 + $0xe70] sm:$0xff]
        %v420 = vld [vmem:[%s168 + $0xe78] sm:$0xff]
        %v421 = vld [vmem:[%s168 + $0xe80] sm:$0xff]
        %v422 = vld [vmem:[%s168 + $0xeb0] sm:$0xff]
        %v423 = vld [vmem:[%s168 + $0xeb8] sm:$0xff]
        %v424 = vld [vmem:[%s168 + $0xec0] sm:$0xff]
        %v425 = vld [vmem:[%s168 + $0xec8] sm:$0xff]
        %v426 = vld [vmem:[%s168 + $0xed0] sm:$0xff]
        %v427 = vld [vmem:[%s168 + $0xf00] sm:$0xff]
        %v428 = vld [vmem:[%s168 + $0xf08] sm:$0xff]
        %v429 = vld [vmem:[%s168 + $0xf10] sm:$0xff]
        %v430 = vld [vmem:[%s168 + $0xf18] sm:$0xff]
        %v431 = vld [vmem:[%s168 + $0xf20] sm:$0xff]
        %v432 = vld [vmem:[%s168 + $0xf50] sm:$0xff]
        %v433 = vld [vmem:[%s168 + $0xf58] sm:$0xff]
        %v434 = vld [vmem:[%s168 + $0xf60] sm:$0xff]
        %v435 = vld [vmem:[%s168 + $0xf68] sm:$0xff]
        %v436 = vld [vmem:[%s168 + $0xf70] sm:$0xff]
        %v437 = vld [vmem:[%s168 + $0xfa0] sm:$0xff]
        %v438 = vld [vmem:[%s168 + $0xfa8] sm:$0xff]
        %v439 = vld [vmem:[%s168 + $0xfb0] sm:$0xff]
        %v440 = vld [vmem:[%s168 + $0xfb8] sm:$0xff]
        %v441 = vld [vmem:[%s168 + $0xfc0] sm:$0xff]
        %v442 = vld [vmem:[%s168 + $0xff0] sm:$0xff]
        %v443 = vld [vmem:[%s168 + $0xff8] sm:$0xff]
        %v444 = vld [vmem:[%s168 + $0x1000] sm:$0xff]
        %v445 = vld [vmem:[%s168 + $0x1008] sm:$0xff]
        %v446 = vld [vmem:[%s168 + $0x1010] sm:$0xff]
        %v447 = vld [vmem:[%s168 + $0x1040] sm:$0xff]
        %v448 = vld [vmem:[%s168 + $0x1048] sm:$0xff]
        %v449 = vld [vmem:[%s168 + $0x1050] sm:$0xff]
        %v450 = vld [vmem:[%s168 + $0x1058] sm:$0xff]
        %v451 = vld [vmem:[%s168 + $0x1060] sm:$0xff]
        %v452 = vld [vmem:[%s168 + $0x1090] sm:$0xff]
        %v453 = vld [vmem:[%s168 + $0x1098] sm:$0xff]
        %v454 = vld [vmem:[%s168 + $0x10a0] sm:$0xff]
        %v455 = vld [vmem:[%s168 + $0x10a8] sm:$0xff]
        %v456 = vld [vmem:[%s168 + $0x10b0] sm:$0xff]
        %v457 = vld [vmem:[%s168 + $0x10e0] sm:$0xff]
        %v458 = vld [vmem:[%s168 + $0x10e8] sm:$0xff]
        %v459 = vld [vmem:[%s168 + $0x10f0] sm:$0xff]
        %v460 = vld [vmem:[%s168 + $0x10f8] sm:$0xff]
        %v461 = vld [vmem:[%s168 + $0x1100] sm:$0xff]
        %v462 = vld [vmem:[%s168 + $0x1130] sm:$0xff]
        %v463 = vld [vmem:[%s168 + $0x1138] sm:$0xff]
        %v464 = vld [vmem:[%s168 + $0x1140] sm:$0xff]
        %v465 = vld [vmem:[%s168 + $0x1148] sm:$0xff]
        %v466 = vld [vmem:[%s168 + $0x1150] sm:$0xff]
        %v467 = vld [vmem:[%s168 + $0x1180] sm:$0xff]
        %v468 = vld [vmem:[%s168 + $0x1188] sm:$0xff]
        %v469 = vld [vmem:[%s168 + $0x1190] sm:$0xff]
        %v470 = vld [vmem:[%s168 + $0x1198] sm:$0xff]
        %v471 = vld [vmem:[%s168 + $0x11a0] sm:$0xff]
        %v472 = vld [vmem:[%s168 + $0x11d0] sm:$0xff]
        %v473 = vld [vmem:[%s168 + $0x11d8] sm:$0xff]
        %v474 = vld [vmem:[%s168 + $0x11e0] sm:$0xff]
        %v475 = vld [vmem:[%s168 + $0x11e8] sm:$0xff]
        %v476 = vld [vmem:[%s168 + $0x11f0] sm:$0xff]
        %v477 = vld [vmem:[%s168 + $0x1220] sm:$0xff]
        %v478 = vld [vmem:[%s168 + $0x1228] sm:$0xff]
        %v479 = vld [vmem:[%s168 + $0x1230] sm:$0xff]
        %v480 = vld [vmem:[%s168 + $0x1238] sm:$0xff]
        %v481 = vld [vmem:[%s168 + $0x1240] sm:$0xff]
        %v482 = vld [vmem:[%s168 + $0x1270] sm:$0xff]
        %v483 = vld [vmem:[%s168 + $0x1278] sm:$0xff]
        %v484 = vld [vmem:[%s168 + $0x1280] sm:$0xff]
        %v485 = vld [vmem:[%s168 + $0x1288] sm:$0xff]
        %v486 = vld [vmem:[%s168 + $0x1290] sm:$0xff]
        %v487 = vld [vmem:[%s168 + $0x12c0] sm:$0xff]
        %v488 = vld [vmem:[%s168 + $0x12c8] sm:$0xff]
        %v489 = vld [vmem:[%s168 + $0x12d0] sm:$0xff]
        %v490 = vld [vmem:[%s168 + $0x12d8] sm:$0xff]
        %v491 = vld [vmem:[%s168 + $0x12e0] sm:$0xff]
        %v492 = vld [vmem:[%s168 + $0x1310] sm:$0xff]
        %v493 = vld [vmem:[%s168 + $0x1318] sm:$0xff]
        %v494 = vld [vmem:[%s168 + $0x1320] sm:$0xff]
        %v495 = vld [vmem:[%s168 + $0x1328] sm:$0xff]
        %v496 = vld [vmem:[%s168 + $0x1330] sm:$0xff]
        %v497 = vld [vmem:[%s168 + $0x1360] sm:$0xff]
        %v498 = vld [vmem:[%s168 + $0x1368] sm:$0xff]
        %v499 = vld [vmem:[%s168 + $0x1370] sm:$0xff]
        %v500 = vld [vmem:[%s168 + $0x1378] sm:$0xff]
        %v501 = vld [vmem:[%s168 + $0x1380] sm:$0xff]
        %v502 = vld [vmem:[%s168 + $0x13b0] sm:$0xff]
        %v503 = vld [vmem:[%s168 + $0x13b8] sm:$0xff]
        %v504 = vld [vmem:[%s168 + $0x13c0] sm:$0xff]
        %v505 = vld [vmem:[%s168 + $0x13c8] sm:$0xff]
        %v506 = vld [vmem:[%s168 + $0x13d0] sm:$0xff]
        %v507 = vld [vmem:[%s168 + $0x1400] sm:$0xff]
        %v508 = vld [vmem:[%s168 + $0x1408] sm:$0xff]
        %v509 = vld [vmem:[%s168 + $0x1410] sm:$0xff]
        %v510 = vld [vmem:[%s168 + $0x1418] sm:$0xff]
        %v511 = vld [vmem:[%s168 + $0x1420] sm:$0xff]
        %v512 = vld [vmem:[%s168 + $0x1450] sm:$0xff]
        %v513 = vld [vmem:[%s168 + $0x1458] sm:$0xff]
        %v514 = vld [vmem:[%s168 + $0x1460] sm:$0xff]
        %v515 = vld [vmem:[%s168 + $0x1468] sm:$0xff]
        %v516 = vld [vmem:[%s168 + $0x1470] sm:$0xff]
        %v517 = vld [vmem:[%s168 + $0x14a0] sm:$0xff]
        %v518 = vld [vmem:[%s168 + $0x14a8] sm:$0xff]
        %v519 = vld [vmem:[%s168 + $0x14b0] sm:$0xff]
        %v520 = vld [vmem:[%s168 + $0x14b8] sm:$0xff]
        %v521 = vld [vmem:[%s168 + $0x14c0] sm:$0xff]
        %v522 = vld [vmem:[%s168 + $0x14f0] sm:$0xff]
        %v523 = vld [vmem:[%s168 + $0x14f8] sm:$0xff]
        %v524 = vld [vmem:[%s168 + $0x1500] sm:$0xff]
        %v525 = vld [vmem:[%s168 + $0x1508] sm:$0xff]
        %v526 = vld [vmem:[%s168 + $0x1510] sm:$0xff]
        %v527 = vld [vmem:[%s168 + $0x1540] sm:$0xff]
        %v528 = vld [vmem:[%s168 + $0x1548] sm:$0xff]
        %v529 = vld [vmem:[%s168 + $0x1550] sm:$0xff]
        %v530 = vld [vmem:[%s168 + $0x1558] sm:$0xff]
        %v531 = vld [vmem:[%s168 + $0x1560] sm:$0xff]
        %v532 = vld [vmem:[%s168 + $0x1590] sm:$0xff]
        %v533 = vld [vmem:[%s168 + $0x1598] sm:$0xff]
        %v534 = vld [vmem:[%s168 + $0x15a0] sm:$0xff]
        %v535 = vld [vmem:[%s168 + $0x15a8] sm:$0xff]
        %v536 = vld [vmem:[%s168 + $0x15b0] sm:$0xff]
        %v537 = vld [vmem:[%s168 + $0x15e0] sm:$0xff]
        %v538 = vld [vmem:[%s168 + $0x15e8] sm:$0xff]
        %v539 = vld [vmem:[%s168 + $0x15f0] sm:$0xff]
        %v540 = vld [vmem:[%s168 + $0x15f8] sm:$0xff]
        %v541 = vld [vmem:[%s168 + $0x1600] sm:$0xff]
        %v542 = vld [vmem:[%s168 + $0x1630] sm:$0xff]
        %v543 = vld [vmem:[%s168 + $0x1638] sm:$0xff]
        %v544 = vld [vmem:[%s168 + $0x1640] sm:$0xff]
        %v545 = vld [vmem:[%s168 + $0x1648] sm:$0xff]
        %v546 = vld [vmem:[%s168 + $0x1650] sm:$0xff]
        %v547 = vld [vmem:[%s168 + $0x1680] sm:$0xff]
        %v548 = vld [vmem:[%s168 + $0x1688] sm:$0xff]
        %v549 = vld [vmem:[%s168 + $0x1690] sm:$0xff]
        %v550 = vld [vmem:[%s168 + $0x1698] sm:$0xff]
        %v551 = vld [vmem:[%s168 + $0x16a0] sm:$0xff]
        %v552 = vld [vmem:[%s168 + $0x16d0] sm:$0xff]
        %v553 = vld [vmem:[%s168 + $0x16d8] sm:$0xff]
        %v554 = vld [vmem:[%s168 + $0x16e0] sm:$0xff]
        %v555 = vld [vmem:[%s168 + $0x16e8] sm:$0xff]
        %v556 = vld [vmem:[%s168 + $0x16f0] sm:$0xff]
        %v557 = vld [vmem:[%s168 + $0x1720] sm:$0xff]
        %v558 = vld [vmem:[%s168 + $0x1728] sm:$0xff]
        %v559 = vld [vmem:[%s168 + $0x1730] sm:$0xff]
        %v560 = vld [vmem:[%s168 + $0x1738] sm:$0xff]
        %v561 = vld [vmem:[%s168 + $0x1740] sm:$0xff]
        %v562 = vld [vmem:[%s168 + $0x1770] sm:$0xff]
        %v563 = vld [vmem:[%s168 + $0x1778] sm:$0xff]
        %v564 = vld [vmem:[%s168 + $0x1780] sm:$0xff]
        %v565 = vld [vmem:[%s168 + $0x1788] sm:$0xff]
        %v566 = vld [vmem:[%s168 + $0x1790] sm:$0xff]
        %v567 = vld [vmem:[%s168 + $0x17c0] sm:$0xff]
        %v568 = vld [vmem:[%s168 + $0x17c8] sm:$0xff]
        %v569 = vld [vmem:[%s168 + $0x17d0] sm:$0xff]
        %v570 = vld [vmem:[%s168 + $0x17d8] sm:$0xff]
        %v571 = vld [vmem:[%s168 + $0x17e0] sm:$0xff]
        %v572 = vld [vmem:[%s168 + $0x1810] sm:$0xff]
        %v573 = vld [vmem:[%s168 + $0x1818] sm:$0xff]
        %v574 = vld [vmem:[%s168 + $0x1820] sm:$0xff]
        %v575 = vld [vmem:[%s168 + $0x1828] sm:$0xff]
        %v576 = vld [vmem:[%s168 + $0x1830] sm:$0xff]
        %v577 = vld [vmem:[%s168 + $0x1860] sm:$0xff]
        %v578 = vld [vmem:[%s168 + $0x1868] sm:$0xff]
        %v579 = vld [vmem:[%s168 + $0x1870] sm:$0xff]
        %v580 = vld [vmem:[%s168 + $0x1878] sm:$0xff]
        %v581 = vld [vmem:[%s168 + $0x1880] sm:$0xff]
        %v582 = vld [vmem:[%s168 + $0x18b0] sm:$0xff]
        %v583 = vld [vmem:[%s168 + $0x18b8] sm:$0xff]
        %v584 = vld [vmem:[%s168 + $0x18c0] sm:$0xff]
        %v585 = vld [vmem:[%s168 + $0x18c8] sm:$0xff]
        %v586 = vld [vmem:[%s168 + $0x18d0] sm:$0xff]
        %v587 = vld [vmem:[%s168 + $0x1900] sm:$0xff]
        %v588 = vld [vmem:[%s168 + $0x1908] sm:$0xff]
        %v589 = vld [vmem:[%s168 + $0x1910] sm:$0xff]
        %v590 = vld [vmem:[%s168 + $0x1918] sm:$0xff]
        %v591 = vld [vmem:[%s168 + $0x1920] sm:$0xff]
        %v592 = vld [vmem:[%s168 + $0x1950] sm:$0xff]
        %v593 = vld [vmem:[%s168 + $0x1958] sm:$0xff]
        %v594 = vld [vmem:[%s168 + $0x1960] sm:$0xff]
        %v595 = vld [vmem:[%s168 + $0x1968] sm:$0xff]
        %v596 = vld [vmem:[%s168 + $0x1970] sm:$0xff]
        %v597 = vld [vmem:[%s168 + $0x19a0] sm:$0xff]
        %v598 = vld [vmem:[%s168 + $0x19a8] sm:$0xff]
        %v599 = vld [vmem:[%s168 + $0x19b0] sm:$0xff]
        %v600 = vld [vmem:[%s168 + $0x19b8] sm:$0xff]
        %v601 = vld [vmem:[%s168 + $0x19c0] sm:$0xff]
        %v602 = vld [vmem:[%s168 + $0x19f0] sm:$0xff]
        %v603 = vld [vmem:[%s168 + $0x19f8] sm:$0xff]
        %v604 = vld [vmem:[%s168 + $0x1a00] sm:$0xff]
        %v605 = vld [vmem:[%s168 + $0x1a08] sm:$0xff]
        %v606 = vld [vmem:[%s168 + $0x1a10] sm:$0xff]
        %v607 = vld [vmem:[%s168 + $0x1a40] sm:$0xff]
        %v608 = vld [vmem:[%s168 + $0x1a48] sm:$0xff]
        %v609 = vld [vmem:[%s168 + $0x1a50] sm:$0xff]
        %v610 = vld [vmem:[%s168 + $0x1a58] sm:$0xff]
        %v611 = vld [vmem:[%s168 + $0x1a60] sm:$0xff]
        %v612 = vld [vmem:[%s168 + $0x1a90] sm:$0xff]
        %v613 = vld [vmem:[%s168 + $0x1a98] sm:$0xff]
        %v614 = vld [vmem:[%s168 + $0x1aa0] sm:$0xff]
        %v615 = vld [vmem:[%s168 + $0x1aa8] sm:$0xff]
        %v616 = vld [vmem:[%s168 + $0x1ab0] sm:$0xff]
        %v617 = vld [vmem:[%s168 + $0x1ae0] sm:$0xff]
        %v618 = vld [vmem:[%s168 + $0x1ae8] sm:$0xff]
        %v619 = vld [vmem:[%s168 + $0x1af0] sm:$0xff]
        %v620 = vld [vmem:[%s168 + $0x1af8] sm:$0xff]
        %v621 = vld [vmem:[%s168 + $0x1b00] sm:$0xff]
        %v622 = vld [vmem:[%s168 + $0x1b30] sm:$0xff]
        %v623 = vld [vmem:[%s168 + $0x1b38] sm:$0xff]
        %v624 = vld [vmem:[%s168 + $0x1b40] sm:$0xff]
        %v625 = vld [vmem:[%s168 + $0x1b48] sm:$0xff]
        %v626 = vld [vmem:[%s168 + $0x1b50] sm:$0xff]
        %v627 = vld [vmem:[%s168 + $0x1b80] sm:$0xff]
        %v628 = vld [vmem:[%s168 + $0x1b88] sm:$0xff]
        %v629 = vld [vmem:[%s168 + $0x1b90] sm:$0xff]
        %v630 = vld [vmem:[%s168 + $0x1b98] sm:$0xff]
        %v631 = vld [vmem:[%s168 + $0x1ba0] sm:$0xff]
        %v632 = vld [vmem:[%s168 + $0x1bd0] sm:$0xff]
        %v633 = vld [vmem:[%s168 + $0x1bd8] sm:$0xff]
        %v634 = vld [vmem:[%s168 + $0x1be0] sm:$0xff]
        %v635 = vld [vmem:[%s168 + $0x1be8] sm:$0xff]
        %v636 = vld [vmem:[%s168 + $0x1bf0] sm:$0xff]
        %v637 = vld [vmem:[%s168 + $0x1c20] sm:$0xff]
        %v638 = vld [vmem:[%s168 + $0x1c28] sm:$0xff]
        %v639 = vld [vmem:[%s168 + $0x1c30] sm:$0xff]
        %v640 = vld [vmem:[%s168 + $0x1c38] sm:$0xff]
        %v641 = vld [vmem:[%s168 + $0x1c40] sm:$0xff]
        %v642 = vld [vmem:[%s168 + $0x1c70] sm:$0xff]
        %v643 = vld [vmem:[%s168 + $0x1c78] sm:$0xff]
        %v644 = vld [vmem:[%s168 + $0x1c80] sm:$0xff]
        %v645 = vld [vmem:[%s168 + $0x1c88] sm:$0xff]
        %v646 = vld [vmem:[%s168 + $0x1c90] sm:$0xff]
        %v647 = vld [vmem:[%s168 + $0x1cc0] sm:$0xff]
        %v648 = vld [vmem:[%s168 + $0x1cc8] sm:$0xff]
        %v649 = vld [vmem:[%s168 + $0x1cd0] sm:$0xff]
        %v650 = vld [vmem:[%s168 + $0x1cd8] sm:$0xff]
        %v651 = vld [vmem:[%s168 + $0x1ce0] sm:$0xff]
        %v652 = vld [vmem:[%s168 + $0x1d10] sm:$0xff]
        %v653 = vld [vmem:[%s168 + $0x1d18] sm:$0xff]
        %v654 = vld [vmem:[%s168 + $0x1d20] sm:$0xff]
        %v655 = vld [vmem:[%s168 + $0x1d28] sm:$0xff]
        %v656 = vld [vmem:[%s168 + $0x1d30] sm:$0xff]
        %v657 = vld [vmem:[%s168 + $0x1d60] sm:$0xff]
        %v658 = vld [vmem:[%s168 + $0x1d68] sm:$0xff]
        %v659 = vld [vmem:[%s168 + $0x1d70] sm:$0xff]
        %v660 = vld [vmem:[%s168 + $0x1d78] sm:$0xff]
        %v661 = vld [vmem:[%s168 + $0x1d80] sm:$0xff]
        %v662 = vld [vmem:[%s168 + $0x1db0] sm:$0xff]
        %v663 = vld [vmem:[%s168 + $0x1db8] sm:$0xff]
        %v664 = vld [vmem:[%s168 + $0x1dc0] sm:$0xff]
        %v665 = vld [vmem:[%s168 + $0x1dc8] sm:$0xff]
        %v666 = vld [vmem:[%s168 + $0x1dd0] sm:$0xff]
        %v667 = vld [vmem:[%s168 + $0x1e00] sm:$0xff]
        %v668 = vld [vmem:[%s168 + $0x1e08] sm:$0xff]
        %v669 = vld [vmem:[%s168 + $0x1e10] sm:$0xff]
        %v670 = vld [vmem:[%s168 + $0x1e18] sm:$0xff]
        %v671 = vld [vmem:[%s168 + $0x1e20] sm:$0xff]
        %v672 = vld [vmem:[%s168 + $0x1e50] sm:$0xff]
        %v673 = vld [vmem:[%s168 + $0x1e58] sm:$0xff]
        %v674 = vld [vmem:[%s168 + $0x1e60] sm:$0xff]
        %v675 = vld [vmem:[%s168 + $0x1e68] sm:$0xff]
        %v676 = vld [vmem:[%s168 + $0x1e70] sm:$0xff]
        %v677 = vld [vmem:[%s168 + $0x1ea0] sm:$0xff]
        %v678 = vld [vmem:[%s168 + $0x1ea8] sm:$0xff]
        %v679 = vld [vmem:[%s168 + $0x1eb0] sm:$0xff]
        %v680 = vld [vmem:[%s168 + $0x1eb8] sm:$0xff]
        %v681 = vld [vmem:[%s168 + $0x1ec0] sm:$0xff]
        %v682 = vld [vmem:[%s168 + $0x1ef0] sm:$0xff]
        %v683 = vld [vmem:[%s168 + $0x1ef8] sm:$0xff]
        %v684 = vld [vmem:[%s168 + $0x1f00] sm:$0xff]
        %v685 = vld [vmem:[%s168 + $0x1f08] sm:$0xff]
        %v686 = vld [vmem:[%s168 + $0x1f10] sm:$0xff]
        %v687 = vld [vmem:[%s168 + $0x1f40] sm:$0xff]
        %v688 = vld [vmem:[%s168 + $0x1f48] sm:$0xff]
        %v689 = vld [vmem:[%s168 + $0x1f50] sm:$0xff]
        %v690 = vld [vmem:[%s168 + $0x1f58] sm:$0xff]
        %v691 = vld [vmem:[%s168 + $0x1f60] sm:$0xff]
        %v692 = vld [vmem:[%s168 + $0x1f90] sm:$0xff]
        %v693 = vld [vmem:[%s168 + $0x1f98] sm:$0xff]
        %v694 = vld [vmem:[%s168 + $0x1fa0] sm:$0xff]
        %v695 = vld [vmem:[%s168 + $0x1fa8] sm:$0xff]
        %v696 = vld [vmem:[%s168 + $0x1fb0] sm:$0xff]
        %v697 = vld [vmem:[%s168 + $0x1fe0] sm:$0xff]
        %v698 = vld [vmem:[%s168 + $0x1fe8] sm:$0xff]
        %v699 = vld [vmem:[%s168 + $0x1ff0] sm:$0xff]
        %v700 = vld [vmem:[%s168 + $0x1ff8] sm:$0xff]
        %v701 = vld [vmem:[%s168 + $0x2000] sm:$0xff]
        %v702 = vld [vmem:[%s168 + $0x2030] sm:$0xff]
        %v703 = vld [vmem:[%s168 + $0x2038] sm:$0xff]
        %v704 = vld [vmem:[%s168 + $0x2040] sm:$0xff]
        %v705 = vld [vmem:[%s168 + $0x2048] sm:$0xff]
        %v706 = vld [vmem:[%s168 + $0x2050] sm:$0xff]
        %v707 = vld [vmem:[%s168 + $0x2080] sm:$0xff]
        %v708 = vld [vmem:[%s168 + $0x2088] sm:$0xff]
        %v709 = vld [vmem:[%s168 + $0x2090] sm:$0xff]
        %v710 = vld [vmem:[%s168 + $0x2098] sm:$0xff]
        %v711 = vld [vmem:[%s168 + $0x20a0] sm:$0xff]
        %v712 = vld [vmem:[%s168 + $0x20d0] sm:$0xff]
        %v713 = vld [vmem:[%s168 + $0x20d8] sm:$0xff]
        %v714 = vld [vmem:[%s168 + $0x20e0] sm:$0xff]
        %v715 = vld [vmem:[%s168 + $0x20e8] sm:$0xff]
        %v716 = vld [vmem:[%s168 + $0x20f0] sm:$0xff]
        %v717 = vld [vmem:[%s168 + $0x2120] sm:$0xff]
        %v718 = vld [vmem:[%s168 + $0x2128] sm:$0xff]
        %v719 = vld [vmem:[%s168 + $0x2130] sm:$0xff]
        %v720 = vld [vmem:[%s168 + $0x2138] sm:$0xff]
        %v721 = vld [vmem:[%s168 + $0x2140] sm:$0xff]
        %722 = vst [vmem:[%s151] sm:$0xff] %v187
        %723 = vst [vmem:[%s151 + $0x8] sm:$0xff] %v188
        %724 = vst [vmem:[%s151 + $0x10] sm:$0xff] %v189
        %725 = vst [vmem:[%s151 + $0x18] sm:$0xff] %v190
        %vm726 = vcmask 785408
        %727 = vst.msk [vmem:[%s151 + $0x20] sm:$0xff] %vm726, %v191
        %728 = vst [vmem:[%s151 + $0x28] sm:$0xff] %v192
        %729 = vst [vmem:[%s151 + $0x30] sm:$0xff] %v193
        %730 = vst [vmem:[%s151 + $0x38] sm:$0xff] %v194
        %731 = vst [vmem:[%s151 + $0x40] sm:$0xff] %v195
        %732 = vst.msk [vmem:[%s151 + $0x48] sm:$0xff] %vm726, %v196
        %733 = vst [vmem:[%s151 + $0x50] sm:$0xff] %v197
        %734 = vst [vmem:[%s151 + $0x58] sm:$0xff] %v198
        %735 = vst [vmem:[%s151 + $0x60] sm:$0xff] %v199
        %736 = vst [vmem:[%s151 + $0x68] sm:$0xff] %v200
        %737 = vst.msk [vmem:[%s151 + $0x70] sm:$0xff] %vm726, %v201
        %738 = vst [vmem:[%s151 + $0x78] sm:$0xff] %v202
        %739 = vst [vmem:[%s151 + $0x80] sm:$0xff] %v203
        %740 = vst [vmem:[%s151 + $0x88] sm:$0xff] %v204
        %741 = vst [vmem:[%s151 + $0x90] sm:$0xff] %v205
        %742 = vst.msk [vmem:[%s151 + $0x98] sm:$0xff] %vm726, %v206
        %743 = vst [vmem:[%s151 + $0xa0] sm:$0xff] %v207
        %744 = vst [vmem:[%s151 + $0xa8] sm:$0xff] %v208
        %745 = vst [vmem:[%s151 + $0xb0] sm:$0xff] %v209
        %746 = vst [vmem:[%s151 + $0xb8] sm:$0xff] %v210
        %747 = vst.msk [vmem:[%s151 + $0xc0] sm:$0xff] %vm726, %v211
        %748 = vst [vmem:[%s151 + $0xc8] sm:$0xff] %v212
        %749 = vst [vmem:[%s151 + $0xd0] sm:$0xff] %v213
        %750 = vst [vmem:[%s151 + $0xd8] sm:$0xff] %v214
        %751 = vst [vmem:[%s151 + $0xe0] sm:$0xff] %v215
        %752 = vst.msk [vmem:[%s151 + $0xe8] sm:$0xff] %vm726, %v216
        %753 = vst [vmem:[%s151 + $0xf0] sm:$0xff] %v217
        %754 = vst [vmem:[%s151 + $0xf8] sm:$0xff] %v218
        %755 = vst [vmem:[%s151 + $0x100] sm:$0xff] %v219
        %756 = vst [vmem:[%s151 + $0x108] sm:$0xff] %v220
        %757 = vst.msk [vmem:[%s151 + $0x110] sm:$0xff] %vm726, %v221
        %758 = vst [vmem:[%s151 + $0x118] sm:$0xff] %v222
        %759 = vst [vmem:[%s151 + $0x120] sm:$0xff] %v223
        %760 = vst [vmem:[%s151 + $0x128] sm:$0xff] %v224
        %761 = vst [vmem:[%s151 + $0x130] sm:$0xff] %v225
        %762 = vst.msk [vmem:[%s151 + $0x138] sm:$0xff] %vm726, %v226
        %763 = vst [vmem:[%s151 + $0x140] sm:$0xff] %v227
        %764 = vst [vmem:[%s151 + $0x148] sm:$0xff] %v228
        %765 = vst [vmem:[%s151 + $0x150] sm:$0xff] %v229
        %766 = vst [vmem:[%s151 + $0x158] sm:$0xff] %v230
        %767 = vst.msk [vmem:[%s151 + $0x160] sm:$0xff] %vm726, %v231
        %768 = vst [vmem:[%s151 + $0x168] sm:$0xff] %v232
        %769 = vst [vmem:[%s151 + $0x170] sm:$0xff] %v233
        %770 = vst [vmem:[%s151 + $0x178] sm:$0xff] %v234
        %771 = vst [vmem:[%s151 + $0x180] sm:$0xff] %v235
        %772 = vst.msk [vmem:[%s151 + $0x188] sm:$0xff] %vm726, %v236
        %773 = vst [vmem:[%s151 + $0x190] sm:$0xff] %v237
        %774 = vst [vmem:[%s151 + $0x198] sm:$0xff] %v238
        %775 = vst [vmem:[%s151 + $0x1a0] sm:$0xff] %v239
        %776 = vst [vmem:[%s151 + $0x1a8] sm:$0xff] %v240
        %777 = vst.msk [vmem:[%s151 + $0x1b0] sm:$0xff] %vm726, %v241
        %778 = vst [vmem:[%s151 + $0x1b8] sm:$0xff] %v242
        %779 = vst [vmem:[%s151 + $0x1c0] sm:$0xff] %v243
        %780 = vst [vmem:[%s151 + $0x1c8] sm:$0xff] %v244
        %781 = vst [vmem:[%s151 + $0x1d0] sm:$0xff] %v245
        %782 = vst.msk [vmem:[%s151 + $0x1d8] sm:$0xff] %vm726, %v246
        %783 = vst [vmem:[%s151 + $0x1e0] sm:$0xff] %v247
        %784 = vst [vmem:[%s151 + $0x1e8] sm:$0xff] %v248
        %785 = vst [vmem:[%s151 + $0x1f0] sm:$0xff] %v249
        %786 = vst [vmem:[%s151 + $0x1f8] sm:$0xff] %v250
        %787 = vst.msk [vmem:[%s151 + $0x200] sm:$0xff] %vm726, %v251
        %788 = vst [vmem:[%s151 + $0x208] sm:$0xff] %v252
        %789 = vst [vmem:[%s151 + $0x210] sm:$0xff] %v253
        %790 = vst [vmem:[%s151 + $0x218] sm:$0xff] %v254
        %791 = vst [vmem:[%s151 + $0x220] sm:$0xff] %v255
        %792 = vst.msk [vmem:[%s151 + $0x228] sm:$0xff] %vm726, %v256
        %793 = vst [vmem:[%s151 + $0x230] sm:$0xff] %v257
        %794 = vst [vmem:[%s151 + $0x238] sm:$0xff] %v258
        %795 = vst [vmem:[%s151 + $0x240] sm:$0xff] %v259
        %796 = vst [vmem:[%s151 + $0x248] sm:$0xff] %v260
        %797 = vst.msk [vmem:[%s151 + $0x250] sm:$0xff] %vm726, %v261
        %798 = vst [vmem:[%s151 + $0x258] sm:$0xff] %v262
        %799 = vst [vmem:[%s151 + $0x260] sm:$0xff] %v263
        %800 = vst [vmem:[%s151 + $0x268] sm:$0xff] %v264
        %801 = vst [vmem:[%s151 + $0x270] sm:$0xff] %v265
        %802 = vst.msk [vmem:[%s151 + $0x278] sm:$0xff] %vm726, %v266
        %803 = vst [vmem:[%s151 + $0x280] sm:$0xff] %v267
        %804 = vst [vmem:[%s151 + $0x288] sm:$0xff] %v268
        %805 = vst [vmem:[%s151 + $0x290] sm:$0xff] %v269
        %806 = vst [vmem:[%s151 + $0x298] sm:$0xff] %v270
        %807 = vst.msk [vmem:[%s151 + $0x2a0] sm:$0xff] %vm726, %v271
        %808 = vst [vmem:[%s151 + $0x2a8] sm:$0xff] %v272
        %809 = vst [vmem:[%s151 + $0x2b0] sm:$0xff] %v273
        %810 = vst [vmem:[%s151 + $0x2b8] sm:$0xff] %v274
        %811 = vst [vmem:[%s151 + $0x2c0] sm:$0xff] %v275
        %812 = vst.msk [vmem:[%s151 + $0x2c8] sm:$0xff] %vm726, %v276
        %813 = vst [vmem:[%s151 + $0x2d0] sm:$0xff] %v277
        %814 = vst [vmem:[%s151 + $0x2d8] sm:$0xff] %v278
        %815 = vst [vmem:[%s151 + $0x2e0] sm:$0xff] %v279
        %816 = vst [vmem:[%s151 + $0x2e8] sm:$0xff] %v280
        %817 = vst.msk [vmem:[%s151 + $0x2f0] sm:$0xff] %vm726, %v281
        %818 = vst [vmem:[%s151 + $0x2f8] sm:$0xff] %v282
        %819 = vst [vmem:[%s151 + $0x300] sm:$0xff] %v283
        %820 = vst [vmem:[%s151 + $0x308] sm:$0xff] %v284
        %821 = vst [vmem:[%s151 + $0x310] sm:$0xff] %v285
        %822 = vst.msk [vmem:[%s151 + $0x318] sm:$0xff] %vm726, %v286
        %823 = vst [vmem:[%s151 + $0x320] sm:$0xff] %v287
        %824 = vst [vmem:[%s151 + $0x328] sm:$0xff] %v288
        %825 = vst [vmem:[%s151 + $0x330] sm:$0xff] %v289
        %826 = vst [vmem:[%s151 + $0x338] sm:$0xff] %v290
        %827 = vst.msk [vmem:[%s151 + $0x340] sm:$0xff] %vm726, %v291
        %828 = vst [vmem:[%s151 + $0x348] sm:$0xff] %v292
        %829 = vst [vmem:[%s151 + $0x350] sm:$0xff] %v293
        %830 = vst [vmem:[%s151 + $0x358] sm:$0xff] %v294
        %831 = vst [vmem:[%s151 + $0x360] sm:$0xff] %v295
        %832 = vst.msk [vmem:[%s151 + $0x368] sm:$0xff] %vm726, %v296
        %833 = vst [vmem:[%s151 + $0x370] sm:$0xff] %v297
        %834 = vst [vmem:[%s151 + $0x378] sm:$0xff] %v298
        %835 = vst [vmem:[%s151 + $0x380] sm:$0xff] %v299
        %836 = vst [vmem:[%s151 + $0x388] sm:$0xff] %v300
        %837 = vst.msk [vmem:[%s151 + $0x390] sm:$0xff] %vm726, %v301
        %838 = vst [vmem:[%s151 + $0x398] sm:$0xff] %v302
        %839 = vst [vmem:[%s151 + $0x3a0] sm:$0xff] %v303
        %840 = vst [vmem:[%s151 + $0x3a8] sm:$0xff] %v304
        %841 = vst [vmem:[%s151 + $0x3b0] sm:$0xff] %v305
        %842 = vst.msk [vmem:[%s151 + $0x3b8] sm:$0xff] %vm726, %v306
        %843 = vst [vmem:[%s151 + $0x3c0] sm:$0xff] %v307
        %844 = vst [vmem:[%s151 + $0x3c8] sm:$0xff] %v308
        %845 = vst [vmem:[%s151 + $0x3d0] sm:$0xff] %v309
        %846 = vst [vmem:[%s151 + $0x3d8] sm:$0xff] %v310
        %847 = vst.msk [vmem:[%s151 + $0x3e0] sm:$0xff] %vm726, %v311
        %848 = vst [vmem:[%s151 + $0x3e8] sm:$0xff] %v312
        %849 = vst [vmem:[%s151 + $0x3f0] sm:$0xff] %v313
        %850 = vst [vmem:[%s151 + $0x3f8] sm:$0xff] %v314
        %851 = vst [vmem:[%s151 + $0x400] sm:$0xff] %v315
        %852 = vst.msk [vmem:[%s151 + $0x408] sm:$0xff] %vm726, %v316
        %853 = vst [vmem:[%s151 + $0x410] sm:$0xff] %v317
        %854 = vst [vmem:[%s151 + $0x418] sm:$0xff] %v318
        %855 = vst [vmem:[%s151 + $0x420] sm:$0xff] %v319
        %856 = vst [vmem:[%s151 + $0x428] sm:$0xff] %v320
        %857 = vst.msk [vmem:[%s151 + $0x430] sm:$0xff] %vm726, %v321
        %858 = vst [vmem:[%s151 + $0x438] sm:$0xff] %v322
        %859 = vst [vmem:[%s151 + $0x440] sm:$0xff] %v323
        %860 = vst [vmem:[%s151 + $0x448] sm:$0xff] %v324
        %861 = vst [vmem:[%s151 + $0x450] sm:$0xff] %v325
        %862 = vst.msk [vmem:[%s151 + $0x458] sm:$0xff] %vm726, %v326
        %863 = vst [vmem:[%s151 + $0x460] sm:$0xff] %v327
        %864 = vst [vmem:[%s151 + $0x468] sm:$0xff] %v328
        %865 = vst [vmem:[%s151 + $0x470] sm:$0xff] %v329
        %866 = vst [vmem:[%s151 + $0x478] sm:$0xff] %v330
        %867 = vst.msk [vmem:[%s151 + $0x480] sm:$0xff] %vm726, %v331
        %868 = vst [vmem:[%s151 + $0x488] sm:$0xff] %v332
        %869 = vst [vmem:[%s151 + $0x490] sm:$0xff] %v333
        %870 = vst [vmem:[%s151 + $0x498] sm:$0xff] %v334
        %871 = vst [vmem:[%s151 + $0x4a0] sm:$0xff] %v335
        %872 = vst.msk [vmem:[%s151 + $0x4a8] sm:$0xff] %vm726, %v336
        %873 = vst [vmem:[%s151 + $0x4b0] sm:$0xff] %v337
        %874 = vst [vmem:[%s151 + $0x4b8] sm:$0xff] %v338
        %875 = vst [vmem:[%s151 + $0x4c0] sm:$0xff] %v339
        %876 = vst [vmem:[%s151 + $0x4c8] sm:$0xff] %v340
        %877 = vst.msk [vmem:[%s151 + $0x4d0] sm:$0xff] %vm726, %v341
        %878 = vst [vmem:[%s151 + $0x4d8] sm:$0xff] %v342
        %879 = vst [vmem:[%s151 + $0x4e0] sm:$0xff] %v343
        %880 = vst [vmem:[%s151 + $0x4e8] sm:$0xff] %v344
        %881 = vst [vmem:[%s151 + $0x4f0] sm:$0xff] %v345
        %882 = vst.msk [vmem:[%s151 + $0x4f8] sm:$0xff] %vm726, %v346
        %883 = vst [vmem:[%s151 + $0x500] sm:$0xff] %v347
        %884 = vst [vmem:[%s151 + $0x508] sm:$0xff] %v348
        %885 = vst [vmem:[%s151 + $0x510] sm:$0xff] %v349
        %886 = vst [vmem:[%s151 + $0x518] sm:$0xff] %v350
        %887 = vst.msk [vmem:[%s151 + $0x520] sm:$0xff] %vm726, %v351
        %888 = vst [vmem:[%s151 + $0x528] sm:$0xff] %v352
        %889 = vst [vmem:[%s151 + $0x530] sm:$0xff] %v353
        %890 = vst [vmem:[%s151 + $0x538] sm:$0xff] %v354
        %891 = vst [vmem:[%s151 + $0x540] sm:$0xff] %v355
        %892 = vst.msk [vmem:[%s151 + $0x548] sm:$0xff] %vm726, %v356
        %893 = vst [vmem:[%s151 + $0x550] sm:$0xff] %v357
        %894 = vst [vmem:[%s151 + $0x558] sm:$0xff] %v358
        %895 = vst [vmem:[%s151 + $0x560] sm:$0xff] %v359
        %896 = vst [vmem:[%s151 + $0x568] sm:$0xff] %v360
        %897 = vst.msk [vmem:[%s151 + $0x570] sm:$0xff] %vm726, %v361
        %898 = vst [vmem:[%s151 + $0x578] sm:$0xff] %v362
        %899 = vst [vmem:[%s151 + $0x580] sm:$0xff] %v363
        %900 = vst [vmem:[%s151 + $0x588] sm:$0xff] %v364
        %901 = vst [vmem:[%s151 + $0x590] sm:$0xff] %v365
        %902 = vst.msk [vmem:[%s151 + $0x598] sm:$0xff] %vm726, %v366
        %903 = vst [vmem:[%s151 + $0x5a0] sm:$0xff] %v367
        %904 = vst [vmem:[%s151 + $0x5a8] sm:$0xff] %v368
        %905 = vst [vmem:[%s151 + $0x5b0] sm:$0xff] %v369
        %906 = vst [vmem:[%s151 + $0x5b8] sm:$0xff] %v370
        %907 = vst.msk [vmem:[%s151 + $0x5c0] sm:$0xff] %vm726, %v371
        %908 = vst [vmem:[%s151 + $0x5c8] sm:$0xff] %v372
        %909 = vst [vmem:[%s151 + $0x5d0] sm:$0xff] %v373
        %910 = vst [vmem:[%s151 + $0x5d8] sm:$0xff] %v374
        %911 = vst [vmem:[%s151 + $0x5e0] sm:$0xff] %v375
        %912 = vst.msk [vmem:[%s151 + $0x5e8] sm:$0xff] %vm726, %v376
        %913 = vst [vmem:[%s151 + $0x5f0] sm:$0xff] %v377
        %914 = vst [vmem:[%s151 + $0x5f8] sm:$0xff] %v378
        %915 = vst [vmem:[%s151 + $0x600] sm:$0xff] %v379
        %916 = vst [vmem:[%s151 + $0x608] sm:$0xff] %v380
        %917 = vst.msk [vmem:[%s151 + $0x610] sm:$0xff] %vm726, %v381
        %918 = vst [vmem:[%s151 + $0x618] sm:$0xff] %v382
        %919 = vst [vmem:[%s151 + $0x620] sm:$0xff] %v383
        %920 = vst [vmem:[%s151 + $0x628] sm:$0xff] %v384
        %921 = vst [vmem:[%s151 + $0x630] sm:$0xff] %v385
        %922 = vst.msk [vmem:[%s151 + $0x638] sm:$0xff] %vm726, %v386
        %923 = vst [vmem:[%s151 + $0x640] sm:$0xff] %v387
        %924 = vst [vmem:[%s151 + $0x648] sm:$0xff] %v388
        %925 = vst [vmem:[%s151 + $0x650] sm:$0xff] %v389
        %926 = vst [vmem:[%s151 + $0x658] sm:$0xff] %v390
        %927 = vst.msk [vmem:[%s151 + $0x660] sm:$0xff] %vm726, %v391
        %928 = vst [vmem:[%s151 + $0x668] sm:$0xff] %v392
        %929 = vst [vmem:[%s151 + $0x670] sm:$0xff] %v393
        %930 = vst [vmem:[%s151 + $0x678] sm:$0xff] %v394
        %931 = vst [vmem:[%s151 + $0x680] sm:$0xff] %v395
        %932 = vst.msk [vmem:[%s151 + $0x688] sm:$0xff] %vm726, %v396
        %933 = vst [vmem:[%s151 + $0x690] sm:$0xff] %v397
        %934 = vst [vmem:[%s151 + $0x698] sm:$0xff] %v398
        %935 = vst [vmem:[%s151 + $0x6a0] sm:$0xff] %v399
        %936 = vst [vmem:[%s151 + $0x6a8] sm:$0xff] %v400
        %937 = vst.msk [vmem:[%s151 + $0x6b0] sm:$0xff] %vm726, %v401
        %938 = vst [vmem:[%s151 + $0x6b8] sm:$0xff] %v402
        %939 = vst [vmem:[%s151 + $0x6c0] sm:$0xff] %v403
        %940 = vst [vmem:[%s151 + $0x6c8] sm:$0xff] %v404
        %941 = vst [vmem:[%s151 + $0x6d0] sm:$0xff] %v405
        %942 = vst.msk [vmem:[%s151 + $0x6d8] sm:$0xff] %vm726, %v406
        %943 = vst [vmem:[%s151 + $0x6e0] sm:$0xff] %v407
        %944 = vst [vmem:[%s151 + $0x6e8] sm:$0xff] %v408
        %945 = vst [vmem:[%s151 + $0x6f0] sm:$0xff] %v409
        %946 = vst [vmem:[%s151 + $0x6f8] sm:$0xff] %v410
        %947 = vst.msk [vmem:[%s151 + $0x700] sm:$0xff] %vm726, %v411
        %948 = vst [vmem:[%s151 + $0x708] sm:$0xff] %v412
        %949 = vst [vmem:[%s151 + $0x710] sm:$0xff] %v413
        %950 = vst [vmem:[%s151 + $0x718] sm:$0xff] %v414
        %951 = vst [vmem:[%s151 + $0x720] sm:$0xff] %v415
        %952 = vst.msk [vmem:[%s151 + $0x728] sm:$0xff] %vm726, %v416
        %953 = vst [vmem:[%s151 + $0x730] sm:$0xff] %v417
        %954 = vst [vmem:[%s151 + $0x738] sm:$0xff] %v418
        %955 = vst [vmem:[%s151 + $0x740] sm:$0xff] %v419
        %956 = vst [vmem:[%s151 + $0x748] sm:$0xff] %v420
        %957 = vst.msk [vmem:[%s151 + $0x750] sm:$0xff] %vm726, %v421
        %958 = vst [vmem:[%s151 + $0x758] sm:$0xff] %v422
        %959 = vst [vmem:[%s151 + $0x760] sm:$0xff] %v423
        %960 = vst [vmem:[%s151 + $0x768] sm:$0xff] %v424
        %961 = vst [vmem:[%s151 + $0x770] sm:$0xff] %v425
        %962 = vst.msk [vmem:[%s151 + $0x778] sm:$0xff] %vm726, %v426
        %963 = vst [vmem:[%s151 + $0x780] sm:$0xff] %v427
        %964 = vst [vmem:[%s151 + $0x788] sm:$0xff] %v428
        %965 = vst [vmem:[%s151 + $0x790] sm:$0xff] %v429
        %966 = vst [vmem:[%s151 + $0x798] sm:$0xff] %v430
        %967 = vst.msk [vmem:[%s151 + $0x7a0] sm:$0xff] %vm726, %v431
        %968 = vst [vmem:[%s151 + $0x7a8] sm:$0xff] %v432
        %969 = vst [vmem:[%s151 + $0x7b0] sm:$0xff] %v433
        %970 = vst [vmem:[%s151 + $0x7b8] sm:$0xff] %v434
        %971 = vst [vmem:[%s151 + $0x7c0] sm:$0xff] %v435
        %972 = vst.msk [vmem:[%s151 + $0x7c8] sm:$0xff] %vm726, %v436
        %973 = vst [vmem:[%s151 + $0x7d0] sm:$0xff] %v437
        %974 = vst [vmem:[%s151 + $0x7d8] sm:$0xff] %v438
        %975 = vst [vmem:[%s151 + $0x7e0] sm:$0xff] %v439
        %976 = vst [vmem:[%s151 + $0x7e8] sm:$0xff] %v440
        %977 = vst.msk [vmem:[%s151 + $0x7f0] sm:$0xff] %vm726, %v441
        %978 = vst [vmem:[%s151 + $0x7f8] sm:$0xff] %v442
        %979 = vst [vmem:[%s151 + $0x800] sm:$0xff] %v443
        %980 = vst [vmem:[%s151 + $0x808] sm:$0xff] %v444
        %981 = vst [vmem:[%s151 + $0x810] sm:$0xff] %v445
        %982 = vst.msk [vmem:[%s151 + $0x818] sm:$0xff] %vm726, %v446
        %983 = vst [vmem:[%s151 + $0x820] sm:$0xff] %v447
        %984 = vst [vmem:[%s151 + $0x828] sm:$0xff] %v448
        %985 = vst [vmem:[%s151 + $0x830] sm:$0xff] %v449
        %986 = vst [vmem:[%s151 + $0x838] sm:$0xff] %v450
        %987 = vst.msk [vmem:[%s151 + $0x840] sm:$0xff] %vm726, %v451
        %988 = vst [vmem:[%s151 + $0x848] sm:$0xff] %v452
        %989 = vst [vmem:[%s151 + $0x850] sm:$0xff] %v453
        %990 = vst [vmem:[%s151 + $0x858] sm:$0xff] %v454
        %991 = vst [vmem:[%s151 + $0x860] sm:$0xff] %v455
        %992 = vst.msk [vmem:[%s151 + $0x868] sm:$0xff] %vm726, %v456
        %993 = vst [vmem:[%s151 + $0x870] sm:$0xff] %v457
        %994 = vst [vmem:[%s151 + $0x878] sm:$0xff] %v458
        %995 = vst [vmem:[%s151 + $0x880] sm:$0xff] %v459
        %996 = vst [vmem:[%s151 + $0x888] sm:$0xff] %v460
        %997 = vst.msk [vmem:[%s151 + $0x890] sm:$0xff] %vm726, %v461
        %998 = vst [vmem:[%s151 + $0x898] sm:$0xff] %v462
        %999 = vst [vmem:[%s151 + $0x8a0] sm:$0xff] %v463
        %1000 = vst [vmem:[%s151 + $0x8a8] sm:$0xff] %v464
        %1001 = vst [vmem:[%s151 + $0x8b0] sm:$0xff] %v465
        %1002 = vst.msk [vmem:[%s151 + $0x8b8] sm:$0xff] %vm726, %v466
        %1003 = vst [vmem:[%s151 + $0x8c0] sm:$0xff] %v467
        %1004 = vst [vmem:[%s151 + $0x8c8] sm:$0xff] %v468
        %1005 = vst [vmem:[%s151 + $0x8d0] sm:$0xff] %v469
        %1006 = vst [vmem:[%s151 + $0x8d8] sm:$0xff] %v470
        %1007 = vst.msk [vmem:[%s151 + $0x8e0] sm:$0xff] %vm726, %v471
        %1008 = vst [vmem:[%s151 + $0x8e8] sm:$0xff] %v472
        %1009 = vst [vmem:[%s151 + $0x8f0] sm:$0xff] %v473
        %1010 = vst [vmem:[%s151 + $0x8f8] sm:$0xff] %v474
        %1011 = vst [vmem:[%s151 + $0x900] sm:$0xff] %v475
        %1012 = vst.msk [vmem:[%s151 + $0x908] sm:$0xff] %vm726, %v476
        %1013 = vst [vmem:[%s151 + $0x910] sm:$0xff] %v477
        %1014 = vst [vmem:[%s151 + $0x918] sm:$0xff] %v478
        %1015 = vst [vmem:[%s151 + $0x920] sm:$0xff] %v479
        %1016 = vst [vmem:[%s151 + $0x928] sm:$0xff] %v480
        %1017 = vst.msk [vmem:[%s151 + $0x930] sm:$0xff] %vm726, %v481
        %1018 = vst [vmem:[%s151 + $0x938] sm:$0xff] %v482
        %1019 = vst [vmem:[%s151 + $0x940] sm:$0xff] %v483
        %1020 = vst [vmem:[%s151 + $0x948] sm:$0xff] %v484
        %1021 = vst [vmem:[%s151 + $0x950] sm:$0xff] %v485
        %1022 = vst.msk [vmem:[%s151 + $0x958] sm:$0xff] %vm726, %v486
        %1023 = vst [vmem:[%s151 + $0x960] sm:$0xff] %v487
        %1024 = vst [vmem:[%s151 + $0x968] sm:$0xff] %v488
        %1025 = vst [vmem:[%s151 + $0x970] sm:$0xff] %v489
        %1026 = vst [vmem:[%s151 + $0x978] sm:$0xff] %v490
        %1027 = vst.msk [vmem:[%s151 + $0x980] sm:$0xff] %vm726, %v491
        %1028 = vst [vmem:[%s151 + $0x988] sm:$0xff] %v492
        %1029 = vst [vmem:[%s151 + $0x990] sm:$0xff] %v493
        %1030 = vst [vmem:[%s151 + $0x998] sm:$0xff] %v494
        %1031 = vst [vmem:[%s151 + $0x9a0] sm:$0xff] %v495
        %1032 = vst.msk [vmem:[%s151 + $0x9a8] sm:$0xff] %vm726, %v496
        %1033 = vst [vmem:[%s151 + $0x9b0] sm:$0xff] %v497
        %1034 = vst [vmem:[%s151 + $0x9b8] sm:$0xff] %v498
        %1035 = vst [vmem:[%s151 + $0x9c0] sm:$0xff] %v499
        %1036 = vst [vmem:[%s151 + $0x9c8] sm:$0xff] %v500
        %1037 = vst.msk [vmem:[%s151 + $0x9d0] sm:$0xff] %vm726, %v501
        %1038 = vst [vmem:[%s151 + $0x9d8] sm:$0xff] %v502
        %1039 = vst [vmem:[%s151 + $0x9e0] sm:$0xff] %v503
        %1040 = vst [vmem:[%s151 + $0x9e8] sm:$0xff] %v504
        %1041 = vst [vmem:[%s151 + $0x9f0] sm:$0xff] %v505
        %1042 = vst.msk [vmem:[%s151 + $0x9f8] sm:$0xff] %vm726, %v506
        %1043 = vst [vmem:[%s151 + $0xa00] sm:$0xff] %v507
        %1044 = vst [vmem:[%s151 + $0xa08] sm:$0xff] %v508
        %1045 = vst [vmem:[%s151 + $0xa10] sm:$0xff] %v509
        %1046 = vst [vmem:[%s151 + $0xa18] sm:$0xff] %v510
        %1047 = vst.msk [vmem:[%s151 + $0xa20] sm:$0xff] %vm726, %v511
        %1048 = vst [vmem:[%s151 + $0xa28] sm:$0xff] %v512
        %1049 = vst [vmem:[%s151 + $0xa30] sm:$0xff] %v513
        %1050 = vst [vmem:[%s151 + $0xa38] sm:$0xff] %v514
        %1051 = vst [vmem:[%s151 + $0xa40] sm:$0xff] %v515
        %1052 = vst.msk [vmem:[%s151 + $0xa48] sm:$0xff] %vm726, %v516
        %1053 = vst [vmem:[%s151 + $0xa50] sm:$0xff] %v517
        %1054 = vst [vmem:[%s151 + $0xa58] sm:$0xff] %v518
        %1055 = vst [vmem:[%s151 + $0xa60] sm:$0xff] %v519
        %1056 = vst [vmem:[%s151 + $0xa68] sm:$0xff] %v520
        %1057 = vst.msk [vmem:[%s151 + $0xa70] sm:$0xff] %vm726, %v521
        %1058 = vst [vmem:[%s151 + $0xa78] sm:$0xff] %v522
        %1059 = vst [vmem:[%s151 + $0xa80] sm:$0xff] %v523
        %1060 = vst [vmem:[%s151 + $0xa88] sm:$0xff] %v524
        %1061 = vst [vmem:[%s151 + $0xa90] sm:$0xff] %v525
        %1062 = vst.msk [vmem:[%s151 + $0xa98] sm:$0xff] %vm726, %v526
        %1063 = vst [vmem:[%s151 + $0xaa0] sm:$0xff] %v527
        %1064 = vst [vmem:[%s151 + $0xaa8] sm:$0xff] %v528
        %1065 = vst [vmem:[%s151 + $0xab0] sm:$0xff] %v529
        %1066 = vst [vmem:[%s151 + $0xab8] sm:$0xff] %v530
        %1067 = vst.msk [vmem:[%s151 + $0xac0] sm:$0xff] %vm726, %v531
        %1068 = vst [vmem:[%s151 + $0xac8] sm:$0xff] %v532
        %1069 = vst [vmem:[%s151 + $0xad0] sm:$0xff] %v533
        %1070 = vst [vmem:[%s151 + $0xad8] sm:$0xff] %v534
        %1071 = vst [vmem:[%s151 + $0xae0] sm:$0xff] %v535
        %1072 = vst.msk [vmem:[%s151 + $0xae8] sm:$0xff] %vm726, %v536
        %1073 = vst [vmem:[%s151 + $0xaf0] sm:$0xff] %v537
        %1074 = vst [vmem:[%s151 + $0xaf8] sm:$0xff] %v538
        %1075 = vst [vmem:[%s151 + $0xb00] sm:$0xff] %v539
        %1076 = vst [vmem:[%s151 + $0xb08] sm:$0xff] %v540
        %1077 = vst.msk [vmem:[%s151 + $0xb10] sm:$0xff] %vm726, %v541
        %1078 = vst [vmem:[%s151 + $0xb18] sm:$0xff] %v542
        %1079 = vst [vmem:[%s151 + $0xb20] sm:$0xff] %v543
        %1080 = vst [vmem:[%s151 + $0xb28] sm:$0xff] %v544
        %1081 = vst [vmem:[%s151 + $0xb30] sm:$0xff] %v545
        %1082 = vst.msk [vmem:[%s151 + $0xb38] sm:$0xff] %vm726, %v546
        %1083 = vst [vmem:[%s151 + $0xb40] sm:$0xff] %v547
        %1084 = vst [vmem:[%s151 + $0xb48] sm:$0xff] %v548
        %1085 = vst [vmem:[%s151 + $0xb50] sm:$0xff] %v549
        %1086 = vst [vmem:[%s151 + $0xb58] sm:$0xff] %v550
        %1087 = vst.msk [vmem:[%s151 + $0xb60] sm:$0xff] %vm726, %v551
        %1088 = vst [vmem:[%s151 + $0xb68] sm:$0xff] %v552
        %1089 = vst [vmem:[%s151 + $0xb70] sm:$0xff] %v553
        %1090 = vst [vmem:[%s151 + $0xb78] sm:$0xff] %v554
        %1091 = vst [vmem:[%s151 + $0xb80] sm:$0xff] %v555
        %1092 = vst.msk [vmem:[%s151 + $0xb88] sm:$0xff] %vm726, %v556
        %1093 = vst [vmem:[%s151 + $0xb90] sm:$0xff] %v557
        %1094 = vst [vmem:[%s151 + $0xb98] sm:$0xff] %v558
        %1095 = vst [vmem:[%s151 + $0xba0] sm:$0xff] %v559
        %1096 = vst [vmem:[%s151 + $0xba8] sm:$0xff] %v560
        %1097 = vst.msk [vmem:[%s151 + $0xbb0] sm:$0xff] %vm726, %v561
        %1098 = vst [vmem:[%s151 + $0xbb8] sm:$0xff] %v562
        %1099 = vst [vmem:[%s151 + $0xbc0] sm:$0xff] %v563
        %1100 = vst [vmem:[%s151 + $0xbc8] sm:$0xff] %v564
        %1101 = vst [vmem:[%s151 + $0xbd0] sm:$0xff] %v565
        %1102 = vst.msk [vmem:[%s151 + $0xbd8] sm:$0xff] %vm726, %v566
        %1103 = vst [vmem:[%s151 + $0xbe0] sm:$0xff] %v567
        %1104 = vst [vmem:[%s151 + $0xbe8] sm:$0xff] %v568
        %1105 = vst [vmem:[%s151 + $0xbf0] sm:$0xff] %v569
        %1106 = vst [vmem:[%s151 + $0xbf8] sm:$0xff] %v570
        %1107 = vst.msk [vmem:[%s151 + $0xc00] sm:$0xff] %vm726, %v571
        %1108 = vst [vmem:[%s151 + $0xc08] sm:$0xff] %v572
        %1109 = vst [vmem:[%s151 + $0xc10] sm:$0xff] %v573
        %1110 = vst [vmem:[%s151 + $0xc18] sm:$0xff] %v574
        %1111 = vst [vmem:[%s151 + $0xc20] sm:$0xff] %v575
        %1112 = vst.msk [vmem:[%s151 + $0xc28] sm:$0xff] %vm726, %v576
        %1113 = vst [vmem:[%s151 + $0xc30] sm:$0xff] %v577
        %1114 = vst [vmem:[%s151 + $0xc38] sm:$0xff] %v578
        %1115 = vst [vmem:[%s151 + $0xc40] sm:$0xff] %v579
        %1116 = vst [vmem:[%s151 + $0xc48] sm:$0xff] %v580
        %1117 = vst.msk [vmem:[%s151 + $0xc50] sm:$0xff] %vm726, %v581
        %1118 = vst [vmem:[%s151 + $0xc58] sm:$0xff] %v582
        %1119 = vst [vmem:[%s151 + $0xc60] sm:$0xff] %v583
        %1120 = vst [vmem:[%s151 + $0xc68] sm:$0xff] %v584
        %1121 = vst [vmem:[%s151 + $0xc70] sm:$0xff] %v585
        %1122 = vst.msk [vmem:[%s151 + $0xc78] sm:$0xff] %vm726, %v586
        %1123 = vst [vmem:[%s151 + $0xc80] sm:$0xff] %v587
        %1124 = vst [vmem:[%s151 + $0xc88] sm:$0xff] %v588
        %1125 = vst [vmem:[%s151 + $0xc90] sm:$0xff] %v589
        %1126 = vst [vmem:[%s151 + $0xc98] sm:$0xff] %v590
        %1127 = vst.msk [vmem:[%s151 + $0xca0] sm:$0xff] %vm726, %v591
        %1128 = vst [vmem:[%s151 + $0xca8] sm:$0xff] %v592
        %1129 = vst [vmem:[%s151 + $0xcb0] sm:$0xff] %v593
        %1130 = vst [vmem:[%s151 + $0xcb8] sm:$0xff] %v594
        %1131 = vst [vmem:[%s151 + $0xcc0] sm:$0xff] %v595
        %1132 = vst.msk [vmem:[%s151 + $0xcc8] sm:$0xff] %vm726, %v596
        %1133 = vst [vmem:[%s151 + $0xcd0] sm:$0xff] %v597
        %1134 = vst [vmem:[%s151 + $0xcd8] sm:$0xff] %v598
        %1135 = vst [vmem:[%s151 + $0xce0] sm:$0xff] %v599
        %1136 = vst [vmem:[%s151 + $0xce8] sm:$0xff] %v600
        %1137 = vst.msk [vmem:[%s151 + $0xcf0] sm:$0xff] %vm726, %v601
        %1138 = vst [vmem:[%s151 + $0xcf8] sm:$0xff] %v602
        %1139 = vst [vmem:[%s151 + $0xd00] sm:$0xff] %v603
        %1140 = vst [vmem:[%s151 + $0xd08] sm:$0xff] %v604
        %1141 = vst [vmem:[%s151 + $0xd10] sm:$0xff] %v605
        %1142 = vst.msk [vmem:[%s151 + $0xd18] sm:$0xff] %vm726, %v606
        %1143 = vst [vmem:[%s151 + $0xd20] sm:$0xff] %v607
        %1144 = vst [vmem:[%s151 + $0xd28] sm:$0xff] %v608
        %1145 = vst [vmem:[%s151 + $0xd30] sm:$0xff] %v609
        %1146 = vst [vmem:[%s151 + $0xd38] sm:$0xff] %v610
        %1147 = vst.msk [vmem:[%s151 + $0xd40] sm:$0xff] %vm726, %v611
        %1148 = vst [vmem:[%s151 + $0xd48] sm:$0xff] %v612
        %1149 = vst [vmem:[%s151 + $0xd50] sm:$0xff] %v613
        %1150 = vst [vmem:[%s151 + $0xd58] sm:$0xff] %v614
        %1151 = vst [vmem:[%s151 + $0xd60] sm:$0xff] %v615
        %1152 = vst.msk [vmem:[%s151 + $0xd68] sm:$0xff] %vm726, %v616
        %1153 = vst [vmem:[%s151 + $0xd70] sm:$0xff] %v617
        %1154 = vst [vmem:[%s151 + $0xd78] sm:$0xff] %v618
        %1155 = vst [vmem:[%s151 + $0xd80] sm:$0xff] %v619
        %1156 = vst [vmem:[%s151 + $0xd88] sm:$0xff] %v620
        %1157 = vst.msk [vmem:[%s151 + $0xd90] sm:$0xff] %vm726, %v621
        %1158 = vst [vmem:[%s151 + $0xd98] sm:$0xff] %v622
        %1159 = vst [vmem:[%s151 + $0xda0] sm:$0xff] %v623
        %1160 = vst [vmem:[%s151 + $0xda8] sm:$0xff] %v624
        %1161 = vst [vmem:[%s151 + $0xdb0] sm:$0xff] %v625
        %1162 = vst.msk [vmem:[%s151 + $0xdb8] sm:$0xff] %vm726, %v626
        %1163 = vst [vmem:[%s151 + $0xdc0] sm:$0xff] %v627
        %1164 = vst [vmem:[%s151 + $0xdc8] sm:$0xff] %v628
        %1165 = vst [vmem:[%s151 + $0xdd0] sm:$0xff] %v629
        %1166 = vst [vmem:[%s151 + $0xdd8] sm:$0xff] %v630
        %1167 = vst.msk [vmem:[%s151 + $0xde0] sm:$0xff] %vm726, %v631
        %1168 = vst [vmem:[%s151 + $0xde8] sm:$0xff] %v632
        %1169 = vst [vmem:[%s151 + $0xdf0] sm:$0xff] %v633
        %1170 = vst [vmem:[%s151 + $0xdf8] sm:$0xff] %v634
        %1171 = vst [vmem:[%s151 + $0xe00] sm:$0xff] %v635
        %1172 = vst.msk [vmem:[%s151 + $0xe08] sm:$0xff] %vm726, %v636
        %1173 = vst [vmem:[%s151 + $0xe10] sm:$0xff] %v637
        %1174 = vst [vmem:[%s151 + $0xe18] sm:$0xff] %v638
        %1175 = vst [vmem:[%s151 + $0xe20] sm:$0xff] %v639
        %1176 = vst [vmem:[%s151 + $0xe28] sm:$0xff] %v640
        %1177 = vst.msk [vmem:[%s151 + $0xe30] sm:$0xff] %vm726, %v641
        %1178 = vst [vmem:[%s151 + $0xe38] sm:$0xff] %v642
        %1179 = vst [vmem:[%s151 + $0xe40] sm:$0xff] %v643
        %1180 = vst [vmem:[%s151 + $0xe48] sm:$0xff] %v644
        %1181 = vst [vmem:[%s151 + $0xe50] sm:$0xff] %v645
        %1182 = vst.msk [vmem:[%s151 + $0xe58] sm:$0xff] %vm726, %v646
        %1183 = vst [vmem:[%s151 + $0xe60] sm:$0xff] %v647
        %1184 = vst [vmem:[%s151 + $0xe68] sm:$0xff] %v648
        %1185 = vst [vmem:[%s151 + $0xe70] sm:$0xff] %v649
        %1186 = vst [vmem:[%s151 + $0xe78] sm:$0xff] %v650
        %1187 = vst.msk [vmem:[%s151 + $0xe80] sm:$0xff] %vm726, %v651
        %1188 = vst [vmem:[%s151 + $0xe88] sm:$0xff] %v652
        %1189 = vst [vmem:[%s151 + $0xe90] sm:$0xff] %v653
        %1190 = vst [vmem:[%s151 + $0xe98] sm:$0xff] %v654
        %1191 = vst [vmem:[%s151 + $0xea0] sm:$0xff] %v655
        %1192 = vst.msk [vmem:[%s151 + $0xea8] sm:$0xff] %vm726, %v656
        %1193 = vst [vmem:[%s151 + $0xeb0] sm:$0xff] %v657
        %1194 = vst [vmem:[%s151 + $0xeb8] sm:$0xff] %v658
        %1195 = vst [vmem:[%s151 + $0xec0] sm:$0xff] %v659
        %1196 = vst [vmem:[%s151 + $0xec8] sm:$0xff] %v660
        %1197 = vst.msk [vmem:[%s151 + $0xed0] sm:$0xff] %vm726, %v661
        %1198 = vst [vmem:[%s151 + $0xed8] sm:$0xff] %v662
        %1199 = vst [vmem:[%s151 + $0xee0] sm:$0xff] %v663
        %1200 = vst [vmem:[%s151 + $0xee8] sm:$0xff] %v664
        %1201 = vst [vmem:[%s151 + $0xef0] sm:$0xff] %v665
        %1202 = vst.msk [vmem:[%s151 + $0xef8] sm:$0xff] %vm726, %v666
        %1203 = vst [vmem:[%s151 + $0xf00] sm:$0xff] %v667
        %1204 = vst [vmem:[%s151 + $0xf08] sm:$0xff] %v668
        %1205 = vst [vmem:[%s151 + $0xf10] sm:$0xff] %v669
        %1206 = vst [vmem:[%s151 + $0xf18] sm:$0xff] %v670
        %1207 = vst.msk [vmem:[%s151 + $0xf20] sm:$0xff] %vm726, %v671
        %1208 = vst [vmem:[%s151 + $0xf28] sm:$0xff] %v672
        %1209 = vst [vmem:[%s151 + $0xf30] sm:$0xff] %v673
        %1210 = vst [vmem:[%s151 + $0xf38] sm:$0xff] %v674
        %1211 = vst [vmem:[%s151 + $0xf40] sm:$0xff] %v675
        %1212 = vst.msk [vmem:[%s151 + $0xf48] sm:$0xff] %vm726, %v676
        %1213 = vst [vmem:[%s151 + $0xf50] sm:$0xff] %v677
        %1214 = vst [vmem:[%s151 + $0xf58] sm:$0xff] %v678
        %1215 = vst [vmem:[%s151 + $0xf60] sm:$0xff] %v679
        %1216 = vst [vmem:[%s151 + $0xf68] sm:$0xff] %v680
        %1217 = vst.msk [vmem:[%s151 + $0xf70] sm:$0xff] %vm726, %v681
        %1218 = vst [vmem:[%s151 + $0xf78] sm:$0xff] %v682
        %1219 = vst [vmem:[%s151 + $0xf80] sm:$0xff] %v683
        %1220 = vst [vmem:[%s151 + $0xf88] sm:$0xff] %v684
        %1221 = vst [vmem:[%s151 + $0xf90] sm:$0xff] %v685
        %1222 = vst.msk [vmem:[%s151 + $0xf98] sm:$0xff] %vm726, %v686
        %1223 = vst [vmem:[%s151 + $0xfa0] sm:$0xff] %v687
        %1224 = vst [vmem:[%s151 + $0xfa8] sm:$0xff] %v688
        %1225 = vst [vmem:[%s151 + $0xfb0] sm:$0xff] %v689
        %1226 = vst [vmem:[%s151 + $0xfb8] sm:$0xff] %v690
        %1227 = vst.msk [vmem:[%s151 + $0xfc0] sm:$0xff] %vm726, %v691
        %1228 = vst [vmem:[%s151 + $0xfc8] sm:$0xff] %v692
        %1229 = vst [vmem:[%s151 + $0xfd0] sm:$0xff] %v693
        %1230 = vst [vmem:[%s151 + $0xfd8] sm:$0xff] %v694
        %1231 = vst [vmem:[%s151 + $0xfe0] sm:$0xff] %v695
        %1232 = vst.msk [vmem:[%s151 + $0xfe8] sm:$0xff] %vm726, %v696
        %1233 = vst [vmem:[%s151 + $0xff0] sm:$0xff] %v697
        %1234 = vst [vmem:[%s151 + $0xff8] sm:$0xff] %v698
        %1235 = vst [vmem:[%s151 + $0x1000] sm:$0xff] %v699
        %1236 = vst [vmem:[%s151 + $0x1008] sm:$0xff] %v700
        %1237 = vst.msk [vmem:[%s151 + $0x1010] sm:$0xff] %vm726, %v701
        %1238 = vst [vmem:[%s151 + $0x1018] sm:$0xff] %v702
        %1239 = vst [vmem:[%s151 + $0x1020] sm:$0xff] %v703
        %1240 = vst [vmem:[%s151 + $0x1028] sm:$0xff] %v704
        %1241 = vst [vmem:[%s151 + $0x1030] sm:$0xff] %v705
        %1242 = vst.msk [vmem:[%s151 + $0x1038] sm:$0xff] %vm726, %v706
        %1243 = vst [vmem:[%s151 + $0x1040] sm:$0xff] %v707
        %1244 = vst [vmem:[%s151 + $0x1048] sm:$0xff] %v708
        %1245 = vst [vmem:[%s151 + $0x1050] sm:$0xff] %v709
        %1246 = vst [vmem:[%s151 + $0x1058] sm:$0xff] %v710
        %1247 = vst.msk [vmem:[%s151 + $0x1060] sm:$0xff] %vm726, %v711
        %1248 = vst [vmem:[%s151 + $0x1068] sm:$0xff] %v712
        %1249 = vst [vmem:[%s151 + $0x1070] sm:$0xff] %v713
        %1250 = vst [vmem:[%s151 + $0x1078] sm:$0xff] %v714
        %1251 = vst [vmem:[%s151 + $0x1080] sm:$0xff] %v715
        %1252 = vst.msk [vmem:[%s151 + $0x1088] sm:$0xff] %vm726, %v716
        %1253 = vst [vmem:[%s151 + $0x1090] sm:$0xff] %v717
        %1254 = vst [vmem:[%s151 + $0x1098] sm:$0xff] %v718
        %1255 = vst [vmem:[%s151 + $0x10a0] sm:$0xff] %v719
        %1256 = vst [vmem:[%s151 + $0x10a8] sm:$0xff] %v720
        %1257 = vst.msk [vmem:[%s151 + $0x10b0] sm:$0xff] %vm726, %v721
        %v1258 = vld [vmem:[%s168 + $0x20] sm:$0xff]
        %v1259 = vld [vmem:[%s168 + $0x28] sm:$0xff]
        %v1260 = vld [vmem:[%s168 + $0x30] sm:$0xff]
        %v1261 = vld [vmem:[%s168 + $0x38] sm:$0xff]
        %v1262 = vld [vmem:[%s168 + $0x40] sm:$0xff]
        %v1263 = vld [vmem:[%s168 + $0x48] sm:$0xff]
        %v1264 = vld [vmem:[%s168 + $0x70] sm:$0xff]
        %v1265 = vld [vmem:[%s168 + $0x78] sm:$0xff]
        %v1266 = vld [vmem:[%s168 + $0x80] sm:$0xff]
        %v1267 = vld [vmem:[%s168 + $0x88] sm:$0xff]
        %v1268 = vld [vmem:[%s168 + $0x90] sm:$0xff]
        %v1269 = vld [vmem:[%s168 + $0x98] sm:$0xff]
        %v1270 = vld [vmem:[%s168 + $0xc0] sm:$0xff]
        %v1271 = vld [vmem:[%s168 + $0xc8] sm:$0xff]
        %v1272 = vld [vmem:[%s168 + $0xd0] sm:$0xff]
        %v1273 = vld [vmem:[%s168 + $0xd8] sm:$0xff]
        %v1274 = vld [vmem:[%s168 + $0xe0] sm:$0xff]
        %v1275 = vld [vmem:[%s168 + $0xe8] sm:$0xff]
        %v1276 = vld [vmem:[%s168 + $0x110] sm:$0xff]
        %v1277 = vld [vmem:[%s168 + $0x118] sm:$0xff]
        %v1278 = vld [vmem:[%s168 + $0x120] sm:$0xff]
        %v1279 = vld [vmem:[%s168 + $0x128] sm:$0xff]
        %v1280 = vld [vmem:[%s168 + $0x130] sm:$0xff]
        %v1281 = vld [vmem:[%s168 + $0x138] sm:$0xff]
        %v1282 = vld [vmem:[%s168 + $0x160] sm:$0xff]
        %v1283 = vld [vmem:[%s168 + $0x168] sm:$0xff]
        %v1284 = vld [vmem:[%s168 + $0x170] sm:$0xff]
        %v1285 = vld [vmem:[%s168 + $0x178] sm:$0xff]
        %v1286 = vld [vmem:[%s168 + $0x180] sm:$0xff]
        %v1287 = vld [vmem:[%s168 + $0x188] sm:$0xff]
        %v1288 = vld [vmem:[%s168 + $0x1b0] sm:$0xff]
        %v1289 = vld [vmem:[%s168 + $0x1b8] sm:$0xff]
        %v1290 = vld [vmem:[%s168 + $0x1c0] sm:$0xff]
        %v1291 = vld [vmem:[%s168 + $0x1c8] sm:$0xff]
        %v1292 = vld [vmem:[%s168 + $0x1d0] sm:$0xff]
        %v1293 = vld [vmem:[%s168 + $0x1d8] sm:$0xff]
        %v1294 = vld [vmem:[%s168 + $0x200] sm:$0xff]
        %v1295 = vld [vmem:[%s168 + $0x208] sm:$0xff]
        %v1296 = vld [vmem:[%s168 + $0x210] sm:$0xff]
        %v1297 = vld [vmem:[%s168 + $0x218] sm:$0xff]
        %v1298 = vld [vmem:[%s168 + $0x220] sm:$0xff]
        %v1299 = vld [vmem:[%s168 + $0x228] sm:$0xff]
        %v1300 = vld [vmem:[%s168 + $0x250] sm:$0xff]
        %v1301 = vld [vmem:[%s168 + $0x258] sm:$0xff]
        %v1302 = vld [vmem:[%s168 + $0x260] sm:$0xff]
        %v1303 = vld [vmem:[%s168 + $0x268] sm:$0xff]
        %v1304 = vld [vmem:[%s168 + $0x270] sm:$0xff]
        %v1305 = vld [vmem:[%s168 + $0x278] sm:$0xff]
        %v1306 = vld [vmem:[%s168 + $0x2a0] sm:$0xff]
        %v1307 = vld [vmem:[%s168 + $0x2a8] sm:$0xff]
        %v1308 = vld [vmem:[%s168 + $0x2b0] sm:$0xff]
        %v1309 = vld [vmem:[%s168 + $0x2b8] sm:$0xff]
        %v1310 = vld [vmem:[%s168 + $0x2c0] sm:$0xff]
        %v1311 = vld [vmem:[%s168 + $0x2c8] sm:$0xff]
        %v1312 = vld [vmem:[%s168 + $0x2f0] sm:$0xff]
        %v1313 = vld [vmem:[%s168 + $0x2f8] sm:$0xff]
        %v1314 = vld [vmem:[%s168 + $0x300] sm:$0xff]
        %v1315 = vld [vmem:[%s168 + $0x308] sm:$0xff]
        %v1316 = vld [vmem:[%s168 + $0x310] sm:$0xff]
        %v1317 = vld [vmem:[%s168 + $0x318] sm:$0xff]
        %v1318 = vld [vmem:[%s168 + $0x340] sm:$0xff]
        %v1319 = vld [vmem:[%s168 + $0x348] sm:$0xff]
        %v1320 = vld [vmem:[%s168 + $0x350] sm:$0xff]
        %v1321 = vld [vmem:[%s168 + $0x358] sm:$0xff]
        %v1322 = vld [vmem:[%s168 + $0x360] sm:$0xff]
        %v1323 = vld [vmem:[%s168 + $0x368] sm:$0xff]
        %v1324 = vld [vmem:[%s168 + $0x390] sm:$0xff]
        %v1325 = vld [vmem:[%s168 + $0x398] sm:$0xff]
        %v1326 = vld [vmem:[%s168 + $0x3a0] sm:$0xff]
        %v1327 = vld [vmem:[%s168 + $0x3a8] sm:$0xff]
        %v1328 = vld [vmem:[%s168 + $0x3b0] sm:$0xff]
        %v1329 = vld [vmem:[%s168 + $0x3b8] sm:$0xff]
        %v1330 = vld [vmem:[%s168 + $0x3e0] sm:$0xff]
        %v1331 = vld [vmem:[%s168 + $0x3e8] sm:$0xff]
        %v1332 = vld [vmem:[%s168 + $0x3f0] sm:$0xff]
        %v1333 = vld [vmem:[%s168 + $0x3f8] sm:$0xff]
        %v1334 = vld [vmem:[%s168 + $0x400] sm:$0xff]
        %v1335 = vld [vmem:[%s168 + $0x408] sm:$0xff]
        %v1336 = vld [vmem:[%s168 + $0x430] sm:$0xff]
        %v1337 = vld [vmem:[%s168 + $0x438] sm:$0xff]
        %v1338 = vld [vmem:[%s168 + $0x440] sm:$0xff]
        %v1339 = vld [vmem:[%s168 + $0x448] sm:$0xff]
        %v1340 = vld [vmem:[%s168 + $0x450] sm:$0xff]
        %v1341 = vld [vmem:[%s168 + $0x458] sm:$0xff]
        %v1342 = vld [vmem:[%s168 + $0x480] sm:$0xff]
        %v1343 = vld [vmem:[%s168 + $0x488] sm:$0xff]
        %v1344 = vld [vmem:[%s168 + $0x490] sm:$0xff]
        %v1345 = vld [vmem:[%s168 + $0x498] sm:$0xff]
        %v1346 = vld [vmem:[%s168 + $0x4a0] sm:$0xff]
        %v1347 = vld [vmem:[%s168 + $0x4a8] sm:$0xff]
        %v1348 = vld [vmem:[%s168 + $0x4d0] sm:$0xff]
        %v1349 = vld [vmem:[%s168 + $0x4d8] sm:$0xff]
        %v1350 = vld [vmem:[%s168 + $0x4e0] sm:$0xff]
        %v1351 = vld [vmem:[%s168 + $0x4e8] sm:$0xff]
        %v1352 = vld [vmem:[%s168 + $0x4f0] sm:$0xff]
        %v1353 = vld [vmem:[%s168 + $0x4f8] sm:$0xff]
        %v1354 = vld [vmem:[%s168 + $0x520] sm:$0xff]
        %v1355 = vld [vmem:[%s168 + $0x528] sm:$0xff]
        %v1356 = vld [vmem:[%s168 + $0x530] sm:$0xff]
        %v1357 = vld [vmem:[%s168 + $0x538] sm:$0xff]
        %v1358 = vld [vmem:[%s168 + $0x540] sm:$0xff]
        %v1359 = vld [vmem:[%s168 + $0x548] sm:$0xff]
        %v1360 = vld [vmem:[%s168 + $0x570] sm:$0xff]
        %v1361 = vld [vmem:[%s168 + $0x578] sm:$0xff]
        %v1362 = vld [vmem:[%s168 + $0x580] sm:$0xff]
        %v1363 = vld [vmem:[%s168 + $0x588] sm:$0xff]
        %v1364 = vld [vmem:[%s168 + $0x590] sm:$0xff]
        %v1365 = vld [vmem:[%s168 + $0x598] sm:$0xff]
        %v1366 = vld [vmem:[%s168 + $0x5c0] sm:$0xff]
        %v1367 = vld [vmem:[%s168 + $0x5c8] sm:$0xff]
        %v1368 = vld [vmem:[%s168 + $0x5d0] sm:$0xff]
        %v1369 = vld [vmem:[%s168 + $0x5d8] sm:$0xff]
        %v1370 = vld [vmem:[%s168 + $0x5e0] sm:$0xff]
        %v1371 = vld [vmem:[%s168 + $0x5e8] sm:$0xff]
        %v1372 = vld [vmem:[%s168 + $0x610] sm:$0xff]
        %v1373 = vld [vmem:[%s168 + $0x618] sm:$0xff]
        %v1374 = vld [vmem:[%s168 + $0x620] sm:$0xff]
        %v1375 = vld [vmem:[%s168 + $0x628] sm:$0xff]
        %v1376 = vld [vmem:[%s168 + $0x630] sm:$0xff]
        %v1377 = vld [vmem:[%s168 + $0x638] sm:$0xff]
        %v1378 = vld [vmem:[%s168 + $0x660] sm:$0xff]
        %v1379 = vld [vmem:[%s168 + $0x668] sm:$0xff]
        %v1380 = vld [vmem:[%s168 + $0x670] sm:$0xff]
        %v1381 = vld [vmem:[%s168 + $0x678] sm:$0xff]
        %v1382 = vld [vmem:[%s168 + $0x680] sm:$0xff]
        %v1383 = vld [vmem:[%s168 + $0x688] sm:$0xff]
        %v1384 = vld [vmem:[%s168 + $0x6b0] sm:$0xff]
        %v1385 = vld [vmem:[%s168 + $0x6b8] sm:$0xff]
        %v1386 = vld [vmem:[%s168 + $0x6c0] sm:$0xff]
        %v1387 = vld [vmem:[%s168 + $0x6c8] sm:$0xff]
        %v1388 = vld [vmem:[%s168 + $0x6d0] sm:$0xff]
        %v1389 = vld [vmem:[%s168 + $0x6d8] sm:$0xff]
        %v1390 = vld [vmem:[%s168 + $0x700] sm:$0xff]
        %v1391 = vld [vmem:[%s168 + $0x708] sm:$0xff]
        %v1392 = vld [vmem:[%s168 + $0x710] sm:$0xff]
        %v1393 = vld [vmem:[%s168 + $0x718] sm:$0xff]
        %v1394 = vld [vmem:[%s168 + $0x720] sm:$0xff]
        %v1395 = vld [vmem:[%s168 + $0x728] sm:$0xff]
        %v1396 = vld [vmem:[%s168 + $0x750] sm:$0xff]
        %v1397 = vld [vmem:[%s168 + $0x758] sm:$0xff]
        %v1398 = vld [vmem:[%s168 + $0x760] sm:$0xff]
        %v1399 = vld [vmem:[%s168 + $0x768] sm:$0xff]
        %v1400 = vld [vmem:[%s168 + $0x770] sm:$0xff]
        %v1401 = vld [vmem:[%s168 + $0x778] sm:$0xff]
        %v1402 = vld [vmem:[%s168 + $0x7a0] sm:$0xff]
        %v1403 = vld [vmem:[%s168 + $0x7a8] sm:$0xff]
        %v1404 = vld [vmem:[%s168 + $0x7b0] sm:$0xff]
        %v1405 = vld [vmem:[%s168 + $0x7b8] sm:$0xff]
        %v1406 = vld [vmem:[%s168 + $0x7c0] sm:$0xff]
        %v1407 = vld [vmem:[%s168 + $0x7c8] sm:$0xff]
        %v1408 = vld [vmem:[%s168 + $0x7f0] sm:$0xff]
        %v1409 = vld [vmem:[%s168 + $0x7f8] sm:$0xff]
        %v1410 = vld [vmem:[%s168 + $0x800] sm:$0xff]
        %v1411 = vld [vmem:[%s168 + $0x808] sm:$0xff]
        %v1412 = vld [vmem:[%s168 + $0x810] sm:$0xff]
        %v1413 = vld [vmem:[%s168 + $0x818] sm:$0xff]
        %v1414 = vld [vmem:[%s168 + $0x840] sm:$0xff]
        %v1415 = vld [vmem:[%s168 + $0x848] sm:$0xff]
        %v1416 = vld [vmem:[%s168 + $0x850] sm:$0xff]
        %v1417 = vld [vmem:[%s168 + $0x858] sm:$0xff]
        %v1418 = vld [vmem:[%s168 + $0x860] sm:$0xff]
        %v1419 = vld [vmem:[%s168 + $0x868] sm:$0xff]
        %v1420 = vld [vmem:[%s168 + $0x890] sm:$0xff]
        %v1421 = vld [vmem:[%s168 + $0x898] sm:$0xff]
        %v1422 = vld [vmem:[%s168 + $0x8a0] sm:$0xff]
        %v1423 = vld [vmem:[%s168 + $0x8a8] sm:$0xff]
        %v1424 = vld [vmem:[%s168 + $0x8b0] sm:$0xff]
        %v1425 = vld [vmem:[%s168 + $0x8b8] sm:$0xff]
        %v1426 = vld [vmem:[%s168 + $0x8e0] sm:$0xff]
        %v1427 = vld [vmem:[%s168 + $0x8e8] sm:$0xff]
        %v1428 = vld [vmem:[%s168 + $0x8f0] sm:$0xff]
        %v1429 = vld [vmem:[%s168 + $0x8f8] sm:$0xff]
        %v1430 = vld [vmem:[%s168 + $0x900] sm:$0xff]
        %v1431 = vld [vmem:[%s168 + $0x908] sm:$0xff]
        %v1432 = vld [vmem:[%s168 + $0x930] sm:$0xff]
        %v1433 = vld [vmem:[%s168 + $0x938] sm:$0xff]
        %v1434 = vld [vmem:[%s168 + $0x940] sm:$0xff]
        %v1435 = vld [vmem:[%s168 + $0x948] sm:$0xff]
        %v1436 = vld [vmem:[%s168 + $0x950] sm:$0xff]
        %v1437 = vld [vmem:[%s168 + $0x958] sm:$0xff]
        %v1438 = vld [vmem:[%s168 + $0x980] sm:$0xff]
        %v1439 = vld [vmem:[%s168 + $0x988] sm:$0xff]
        %v1440 = vld [vmem:[%s168 + $0x990] sm:$0xff]
        %v1441 = vld [vmem:[%s168 + $0x998] sm:$0xff]
        %v1442 = vld [vmem:[%s168 + $0x9a0] sm:$0xff]
        %v1443 = vld [vmem:[%s168 + $0x9a8] sm:$0xff]
        %v1444 = vld [vmem:[%s168 + $0x9d0] sm:$0xff]
        %v1445 = vld [vmem:[%s168 + $0x9d8] sm:$0xff]
        %v1446 = vld [vmem:[%s168 + $0x9e0] sm:$0xff]
        %v1447 = vld [vmem:[%s168 + $0x9e8] sm:$0xff]
        %v1448 = vld [vmem:[%s168 + $0x9f0] sm:$0xff]
        %v1449 = vld [vmem:[%s168 + $0x9f8] sm:$0xff]
        %v1450 = vld [vmem:[%s168 + $0xa20] sm:$0xff]
        %v1451 = vld [vmem:[%s168 + $0xa28] sm:$0xff]
        %v1452 = vld [vmem:[%s168 + $0xa30] sm:$0xff]
        %v1453 = vld [vmem:[%s168 + $0xa38] sm:$0xff]
        %v1454 = vld [vmem:[%s168 + $0xa40] sm:$0xff]
        %v1455 = vld [vmem:[%s168 + $0xa48] sm:$0xff]
        %v1456 = vld [vmem:[%s168 + $0xa70] sm:$0xff]
        %v1457 = vld [vmem:[%s168 + $0xa78] sm:$0xff]
        %v1458 = vld [vmem:[%s168 + $0xa80] sm:$0xff]
        %v1459 = vld [vmem:[%s168 + $0xa88] sm:$0xff]
        %v1460 = vld [vmem:[%s168 + $0xa90] sm:$0xff]
        %v1461 = vld [vmem:[%s168 + $0xa98] sm:$0xff]
        %v1462 = vld [vmem:[%s168 + $0xac0] sm:$0xff]
        %v1463 = vld [vmem:[%s168 + $0xac8] sm:$0xff]
        %v1464 = vld [vmem:[%s168 + $0xad0] sm:$0xff]
        %v1465 = vld [vmem:[%s168 + $0xad8] sm:$0xff]
        %v1466 = vld [vmem:[%s168 + $0xae0] sm:$0xff]
        %v1467 = vld [vmem:[%s168 + $0xae8] sm:$0xff]
        %v1468 = vld [vmem:[%s168 + $0xb10] sm:$0xff]
        %v1469 = vld [vmem:[%s168 + $0xb18] sm:$0xff]
        %v1470 = vld [vmem:[%s168 + $0xb20] sm:$0xff]
        %v1471 = vld [vmem:[%s168 + $0xb28] sm:$0xff]
        %v1472 = vld [vmem:[%s168 + $0xb30] sm:$0xff]
        %v1473 = vld [vmem:[%s168 + $0xb38] sm:$0xff]
        %v1474 = vld [vmem:[%s168 + $0xb60] sm:$0xff]
        %v1475 = vld [vmem:[%s168 + $0xb68] sm:$0xff]
        %v1476 = vld [vmem:[%s168 + $0xb70] sm:$0xff]
        %v1477 = vld [vmem:[%s168 + $0xb78] sm:$0xff]
        %v1478 = vld [vmem:[%s168 + $0xb80] sm:$0xff]
        %v1479 = vld [vmem:[%s168 + $0xb88] sm:$0xff]
        %v1480 = vld [vmem:[%s168 + $0xbb0] sm:$0xff]
        %v1481 = vld [vmem:[%s168 + $0xbb8] sm:$0xff]
        %v1482 = vld [vmem:[%s168 + $0xbc0] sm:$0xff]
        %v1483 = vld [vmem:[%s168 + $0xbc8] sm:$0xff]
        %v1484 = vld [vmem:[%s168 + $0xbd0] sm:$0xff]
        %v1485 = vld [vmem:[%s168 + $0xbd8] sm:$0xff]
        %v1486 = vld [vmem:[%s168 + $0xc00] sm:$0xff]
        %v1487 = vld [vmem:[%s168 + $0xc08] sm:$0xff]
        %v1488 = vld [vmem:[%s168 + $0xc10] sm:$0xff]
        %v1489 = vld [vmem:[%s168 + $0xc18] sm:$0xff]
        %v1490 = vld [vmem:[%s168 + $0xc20] sm:$0xff]
        %v1491 = vld [vmem:[%s168 + $0xc28] sm:$0xff]
        %v1492 = vld [vmem:[%s168 + $0xc50] sm:$0xff]
        %v1493 = vld [vmem:[%s168 + $0xc58] sm:$0xff]
        %v1494 = vld [vmem:[%s168 + $0xc60] sm:$0xff]
        %v1495 = vld [vmem:[%s168 + $0xc68] sm:$0xff]
        %v1496 = vld [vmem:[%s168 + $0xc70] sm:$0xff]
        %v1497 = vld [vmem:[%s168 + $0xc78] sm:$0xff]
        %v1498 = vld [vmem:[%s168 + $0xca0] sm:$0xff]
        %v1499 = vld [vmem:[%s168 + $0xca8] sm:$0xff]
        %v1500 = vld [vmem:[%s168 + $0xcb0] sm:$0xff]
        %v1501 = vld [vmem:[%s168 + $0xcb8] sm:$0xff]
        %v1502 = vld [vmem:[%s168 + $0xcc0] sm:$0xff]
        %v1503 = vld [vmem:[%s168 + $0xcc8] sm:$0xff]
        %v1504 = vld [vmem:[%s168 + $0xcf0] sm:$0xff]
        %v1505 = vld [vmem:[%s168 + $0xcf8] sm:$0xff]
        %v1506 = vld [vmem:[%s168 + $0xd00] sm:$0xff]
        %v1507 = vld [vmem:[%s168 + $0xd08] sm:$0xff]
        %v1508 = vld [vmem:[%s168 + $0xd10] sm:$0xff]
        %v1509 = vld [vmem:[%s168 + $0xd18] sm:$0xff]
        %v1510 = vld [vmem:[%s168 + $0xd40] sm:$0xff]
        %v1511 = vld [vmem:[%s168 + $0xd48] sm:$0xff]
        %v1512 = vld [vmem:[%s168 + $0xd50] sm:$0xff]
        %v1513 = vld [vmem:[%s168 + $0xd58] sm:$0xff]
        %v1514 = vld [vmem:[%s168 + $0xd60] sm:$0xff]
        %v1515 = vld [vmem:[%s168 + $0xd68] sm:$0xff]
        %v1516 = vld [vmem:[%s168 + $0xd90] sm:$0xff]
        %v1517 = vld [vmem:[%s168 + $0xd98] sm:$0xff]
        %v1518 = vld [vmem:[%s168 + $0xda0] sm:$0xff]
        %v1519 = vld [vmem:[%s168 + $0xda8] sm:$0xff]
        %v1520 = vld [vmem:[%s168 + $0xdb0] sm:$0xff]
        %v1521 = vld [vmem:[%s168 + $0xdb8] sm:$0xff]
        %v1522 = vld [vmem:[%s168 + $0xde0] sm:$0xff]
        %v1523 = vld [vmem:[%s168 + $0xde8] sm:$0xff]
        %v1524 = vld [vmem:[%s168 + $0xdf0] sm:$0xff]
        %v1525 = vld [vmem:[%s168 + $0xdf8] sm:$0xff]
        %v1526 = vld [vmem:[%s168 + $0xe00] sm:$0xff]
        %v1527 = vld [vmem:[%s168 + $0xe08] sm:$0xff]
        %v1528 = vld [vmem:[%s168 + $0xe30] sm:$0xff]
        %v1529 = vld [vmem:[%s168 + $0xe38] sm:$0xff]
        %v1530 = vld [vmem:[%s168 + $0xe40] sm:$0xff]
        %v1531 = vld [vmem:[%s168 + $0xe48] sm:$0xff]
        %v1532 = vld [vmem:[%s168 + $0xe50] sm:$0xff]
        %v1533 = vld [vmem:[%s168 + $0xe58] sm:$0xff]
        %v1534 = vld [vmem:[%s168 + $0xe80] sm:$0xff]
        %v1535 = vld [vmem:[%s168 + $0xe88] sm:$0xff]
        %v1536 = vld [vmem:[%s168 + $0xe90] sm:$0xff]
        %v1537 = vld [vmem:[%s168 + $0xe98] sm:$0xff]
        %v1538 = vld [vmem:[%s168 + $0xea0] sm:$0xff]
        %v1539 = vld [vmem:[%s168 + $0xea8] sm:$0xff]
        %v1540 = vld [vmem:[%s168 + $0xed0] sm:$0xff]
        %v1541 = vld [vmem:[%s168 + $0xed8] sm:$0xff]
        %v1542 = vld [vmem:[%s168 + $0xee0] sm:$0xff]
        %v1543 = vld [vmem:[%s168 + $0xee8] sm:$0xff]
        %v1544 = vld [vmem:[%s168 + $0xef0] sm:$0xff]
        %v1545 = vld [vmem:[%s168 + $0xef8] sm:$0xff]
        %v1546 = vld [vmem:[%s168 + $0xf20] sm:$0xff]
        %v1547 = vld [vmem:[%s168 + $0xf28] sm:$0xff]
        %v1548 = vld [vmem:[%s168 + $0xf30] sm:$0xff]
        %v1549 = vld [vmem:[%s168 + $0xf38] sm:$0xff]
        %v1550 = vld [vmem:[%s168 + $0xf40] sm:$0xff]
        %v1551 = vld [vmem:[%s168 + $0xf48] sm:$0xff]
        %v1552 = vld [vmem:[%s168 + $0xf70] sm:$0xff]
        %v1553 = vld [vmem:[%s168 + $0xf78] sm:$0xff]
        %v1554 = vld [vmem:[%s168 + $0xf80] sm:$0xff]
        %v1555 = vld [vmem:[%s168 + $0xf88] sm:$0xff]
        %v1556 = vld [vmem:[%s168 + $0xf90] sm:$0xff]
        %v1557 = vld [vmem:[%s168 + $0xf98] sm:$0xff]
        %v1558 = vld [vmem:[%s168 + $0xfc0] sm:$0xff]
        %v1559 = vld [vmem:[%s168 + $0xfc8] sm:$0xff]
        %v1560 = vld [vmem:[%s168 + $0xfd0] sm:$0xff]
        %v1561 = vld [vmem:[%s168 + $0xfd8] sm:$0xff]
        %v1562 = vld [vmem:[%s168 + $0xfe0] sm:$0xff]
        %v1563 = vld [vmem:[%s168 + $0xfe8] sm:$0xff]
        %v1564 = vld [vmem:[%s168 + $0x1010] sm:$0xff]
        %v1565 = vld [vmem:[%s168 + $0x1018] sm:$0xff]
        %v1566 = vld [vmem:[%s168 + $0x1020] sm:$0xff]
        %v1567 = vld [vmem:[%s168 + $0x1028] sm:$0xff]
        %v1568 = vld [vmem:[%s168 + $0x1030] sm:$0xff]
        %v1569 = vld [vmem:[%s168 + $0x1038] sm:$0xff]
        %v1570 = vld [vmem:[%s168 + $0x1060] sm:$0xff]
        %v1571 = vld [vmem:[%s168 + $0x1068] sm:$0xff]
        %v1572 = vld [vmem:[%s168 + $0x1070] sm:$0xff]
        %v1573 = vld [vmem:[%s168 + $0x1078] sm:$0xff]
        %v1574 = vld [vmem:[%s168 + $0x1080] sm:$0xff]
        %v1575 = vld [vmem:[%s168 + $0x1088] sm:$0xff]
        %v1576 = vld [vmem:[%s168 + $0x10b0] sm:$0xff]
        %v1577 = vld [vmem:[%s168 + $0x10b8] sm:$0xff]
        %v1578 = vld [vmem:[%s168 + $0x10c0] sm:$0xff]
        %v1579 = vld [vmem:[%s168 + $0x10c8] sm:$0xff]
        %v1580 = vld [vmem:[%s168 + $0x10d0] sm:$0xff]
        %v1581 = vld [vmem:[%s168 + $0x10d8] sm:$0xff]
        %v1582 = vld [vmem:[%s168 + $0x1100] sm:$0xff]
        %v1583 = vld [vmem:[%s168 + $0x1108] sm:$0xff]
        %v1584 = vld [vmem:[%s168 + $0x1110] sm:$0xff]
        %v1585 = vld [vmem:[%s168 + $0x1118] sm:$0xff]
        %v1586 = vld [vmem:[%s168 + $0x1120] sm:$0xff]
        %v1587 = vld [vmem:[%s168 + $0x1128] sm:$0xff]
        %v1588 = vld [vmem:[%s168 + $0x1150] sm:$0xff]
        %v1589 = vld [vmem:[%s168 + $0x1158] sm:$0xff]
        %v1590 = vld [vmem:[%s168 + $0x1160] sm:$0xff]
        %v1591 = vld [vmem:[%s168 + $0x1168] sm:$0xff]
        %v1592 = vld [vmem:[%s168 + $0x1170] sm:$0xff]
        %v1593 = vld [vmem:[%s168 + $0x1178] sm:$0xff]
        %v1594 = vld [vmem:[%s168 + $0x11a0] sm:$0xff]
        %v1595 = vld [vmem:[%s168 + $0x11a8] sm:$0xff]
        %v1596 = vld [vmem:[%s168 + $0x11b0] sm:$0xff]
        %v1597 = vld [vmem:[%s168 + $0x11b8] sm:$0xff]
        %v1598 = vld [vmem:[%s168 + $0x11c0] sm:$0xff]
        %v1599 = vld [vmem:[%s168 + $0x11c8] sm:$0xff]
        %v1600 = vld [vmem:[%s168 + $0x11f0] sm:$0xff]
        %v1601 = vld [vmem:[%s168 + $0x11f8] sm:$0xff]
        %v1602 = vld [vmem:[%s168 + $0x1200] sm:$0xff]
        %v1603 = vld [vmem:[%s168 + $0x1208] sm:$0xff]
        %v1604 = vld [vmem:[%s168 + $0x1210] sm:$0xff]
        %v1605 = vld [vmem:[%s168 + $0x1218] sm:$0xff]
        %v1606 = vld [vmem:[%s168 + $0x1240] sm:$0xff]
        %v1607 = vld [vmem:[%s168 + $0x1248] sm:$0xff]
        %v1608 = vld [vmem:[%s168 + $0x1250] sm:$0xff]
        %v1609 = vld [vmem:[%s168 + $0x1258] sm:$0xff]
        %v1610 = vld [vmem:[%s168 + $0x1260] sm:$0xff]
        %v1611 = vld [vmem:[%s168 + $0x1268] sm:$0xff]
        %v1612 = vld [vmem:[%s168 + $0x1290] sm:$0xff]
        %v1613 = vld [vmem:[%s168 + $0x1298] sm:$0xff]
        %v1614 = vld [vmem:[%s168 + $0x12a0] sm:$0xff]
        %v1615 = vld [vmem:[%s168 + $0x12a8] sm:$0xff]
        %v1616 = vld [vmem:[%s168 + $0x12b0] sm:$0xff]
        %v1617 = vld [vmem:[%s168 + $0x12b8] sm:$0xff]
        %v1618 = vld [vmem:[%s168 + $0x12e0] sm:$0xff]
        %v1619 = vld [vmem:[%s168 + $0x12e8] sm:$0xff]
        %v1620 = vld [vmem:[%s168 + $0x12f0] sm:$0xff]
        %v1621 = vld [vmem:[%s168 + $0x12f8] sm:$0xff]
        %v1622 = vld [vmem:[%s168 + $0x1300] sm:$0xff]
        %v1623 = vld [vmem:[%s168 + $0x1308] sm:$0xff]
        %v1624 = vld [vmem:[%s168 + $0x1330] sm:$0xff]
        %v1625 = vld [vmem:[%s168 + $0x1338] sm:$0xff]
        %v1626 = vld [vmem:[%s168 + $0x1340] sm:$0xff]
        %v1627 = vld [vmem:[%s168 + $0x1348] sm:$0xff]
        %v1628 = vld [vmem:[%s168 + $0x1350] sm:$0xff]
        %v1629 = vld [vmem:[%s168 + $0x1358] sm:$0xff]
        %v1630 = vld [vmem:[%s168 + $0x1380] sm:$0xff]
        %v1631 = vld [vmem:[%s168 + $0x1388] sm:$0xff]
        %v1632 = vld [vmem:[%s168 + $0x1390] sm:$0xff]
        %v1633 = vld [vmem:[%s168 + $0x1398] sm:$0xff]
        %v1634 = vld [vmem:[%s168 + $0x13a0] sm:$0xff]
        %v1635 = vld [vmem:[%s168 + $0x13a8] sm:$0xff]
        %v1636 = vld [vmem:[%s168 + $0x13d0] sm:$0xff]
        %v1637 = vld [vmem:[%s168 + $0x13d8] sm:$0xff]
        %v1638 = vld [vmem:[%s168 + $0x13e0] sm:$0xff]
        %v1639 = vld [vmem:[%s168 + $0x13e8] sm:$0xff]
        %v1640 = vld [vmem:[%s168 + $0x13f0] sm:$0xff]
        %v1641 = vld [vmem:[%s168 + $0x13f8] sm:$0xff]
        %v1642 = vld [vmem:[%s168 + $0x1420] sm:$0xff]
        %v1643 = vld [vmem:[%s168 + $0x1428] sm:$0xff]
        %v1644 = vld [vmem:[%s168 + $0x1430] sm:$0xff]
        %v1645 = vld [vmem:[%s168 + $0x1438] sm:$0xff]
        %v1646 = vld [vmem:[%s168 + $0x1440] sm:$0xff]
        %v1647 = vld [vmem:[%s168 + $0x1448] sm:$0xff]
        %v1648 = vld [vmem:[%s168 + $0x1470] sm:$0xff]
        %v1649 = vld [vmem:[%s168 + $0x1478] sm:$0xff]
        %v1650 = vld [vmem:[%s168 + $0x1480] sm:$0xff]
        %v1651 = vld [vmem:[%s168 + $0x1488] sm:$0xff]
        %v1652 = vld [vmem:[%s168 + $0x1490] sm:$0xff]
        %v1653 = vld [vmem:[%s168 + $0x1498] sm:$0xff]
        %v1654 = vld [vmem:[%s168 + $0x14c0] sm:$0xff]
        %v1655 = vld [vmem:[%s168 + $0x14c8] sm:$0xff]
        %v1656 = vld [vmem:[%s168 + $0x14d0] sm:$0xff]
        %v1657 = vld [vmem:[%s168 + $0x14d8] sm:$0xff]
        %v1658 = vld [vmem:[%s168 + $0x14e0] sm:$0xff]
        %v1659 = vld [vmem:[%s168 + $0x14e8] sm:$0xff]
        %v1660 = vld [vmem:[%s168 + $0x1510] sm:$0xff]
        %v1661 = vld [vmem:[%s168 + $0x1518] sm:$0xff]
        %v1662 = vld [vmem:[%s168 + $0x1520] sm:$0xff]
        %v1663 = vld [vmem:[%s168 + $0x1528] sm:$0xff]
        %v1664 = vld [vmem:[%s168 + $0x1530] sm:$0xff]
        %v1665 = vld [vmem:[%s168 + $0x1538] sm:$0xff]
        %v1666 = vld [vmem:[%s168 + $0x1560] sm:$0xff]
        %v1667 = vld [vmem:[%s168 + $0x1568] sm:$0xff]
        %v1668 = vld [vmem:[%s168 + $0x1570] sm:$0xff]
        %v1669 = vld [vmem:[%s168 + $0x1578] sm:$0xff]
        %v1670 = vld [vmem:[%s168 + $0x1580] sm:$0xff]
        %v1671 = vld [vmem:[%s168 + $0x1588] sm:$0xff]
        %v1672 = vld [vmem:[%s168 + $0x15b0] sm:$0xff]
        %v1673 = vld [vmem:[%s168 + $0x15b8] sm:$0xff]
        %v1674 = vld [vmem:[%s168 + $0x15c0] sm:$0xff]
        %v1675 = vld [vmem:[%s168 + $0x15c8] sm:$0xff]
        %v1676 = vld [vmem:[%s168 + $0x15d0] sm:$0xff]
        %v1677 = vld [vmem:[%s168 + $0x15d8] sm:$0xff]
        %v1678 = vld [vmem:[%s168 + $0x1600] sm:$0xff]
        %v1679 = vld [vmem:[%s168 + $0x1608] sm:$0xff]
        %v1680 = vld [vmem:[%s168 + $0x1610] sm:$0xff]
        %v1681 = vld [vmem:[%s168 + $0x1618] sm:$0xff]
        %v1682 = vld [vmem:[%s168 + $0x1620] sm:$0xff]
        %v1683 = vld [vmem:[%s168 + $0x1628] sm:$0xff]
        %v1684 = vld [vmem:[%s168 + $0x1650] sm:$0xff]
        %v1685 = vld [vmem:[%s168 + $0x1658] sm:$0xff]
        %v1686 = vld [vmem:[%s168 + $0x1660] sm:$0xff]
        %v1687 = vld [vmem:[%s168 + $0x1668] sm:$0xff]
        %v1688 = vld [vmem:[%s168 + $0x1670] sm:$0xff]
        %v1689 = vld [vmem:[%s168 + $0x1678] sm:$0xff]
        %v1690 = vld [vmem:[%s168 + $0x16a0] sm:$0xff]
        %v1691 = vld [vmem:[%s168 + $0x16a8] sm:$0xff]
        %v1692 = vld [vmem:[%s168 + $0x16b0] sm:$0xff]
        %v1693 = vld [vmem:[%s168 + $0x16b8] sm:$0xff]
        %v1694 = vld [vmem:[%s168 + $0x16c0] sm:$0xff]
        %v1695 = vld [vmem:[%s168 + $0x16c8] sm:$0xff]
        %v1696 = vld [vmem:[%s168 + $0x16f0] sm:$0xff]
        %v1697 = vld [vmem:[%s168 + $0x16f8] sm:$0xff]
        %v1698 = vld [vmem:[%s168 + $0x1700] sm:$0xff]
        %v1699 = vld [vmem:[%s168 + $0x1708] sm:$0xff]
        %v1700 = vld [vmem:[%s168 + $0x1710] sm:$0xff]
        %v1701 = vld [vmem:[%s168 + $0x1718] sm:$0xff]
        %v1702 = vld [vmem:[%s168 + $0x1740] sm:$0xff]
        %v1703 = vld [vmem:[%s168 + $0x1748] sm:$0xff]
        %v1704 = vld [vmem:[%s168 + $0x1750] sm:$0xff]
        %v1705 = vld [vmem:[%s168 + $0x1758] sm:$0xff]
        %v1706 = vld [vmem:[%s168 + $0x1760] sm:$0xff]
        %v1707 = vld [vmem:[%s168 + $0x1768] sm:$0xff]
        %v1708 = vld [vmem:[%s168 + $0x1790] sm:$0xff]
        %v1709 = vld [vmem:[%s168 + $0x1798] sm:$0xff]
        %v1710 = vld [vmem:[%s168 + $0x17a0] sm:$0xff]
        %v1711 = vld [vmem:[%s168 + $0x17a8] sm:$0xff]
        %v1712 = vld [vmem:[%s168 + $0x17b0] sm:$0xff]
        %v1713 = vld [vmem:[%s168 + $0x17b8] sm:$0xff]
        %v1714 = vld [vmem:[%s168 + $0x17e0] sm:$0xff]
        %v1715 = vld [vmem:[%s168 + $0x17e8] sm:$0xff]
        %v1716 = vld [vmem:[%s168 + $0x17f0] sm:$0xff]
        %v1717 = vld [vmem:[%s168 + $0x17f8] sm:$0xff]
        %v1718 = vld [vmem:[%s168 + $0x1800] sm:$0xff]
        %v1719 = vld [vmem:[%s168 + $0x1808] sm:$0xff]
        %v1720 = vld [vmem:[%s168 + $0x1830] sm:$0xff]
        %v1721 = vld [vmem:[%s168 + $0x1838] sm:$0xff]
        %v1722 = vld [vmem:[%s168 + $0x1840] sm:$0xff]
        %v1723 = vld [vmem:[%s168 + $0x1848] sm:$0xff]
        %v1724 = vld [vmem:[%s168 + $0x1850] sm:$0xff]
        %v1725 = vld [vmem:[%s168 + $0x1858] sm:$0xff]
        %v1726 = vld [vmem:[%s168 + $0x1880] sm:$0xff]
        %v1727 = vld [vmem:[%s168 + $0x1888] sm:$0xff]
        %v1728 = vld [vmem:[%s168 + $0x1890] sm:$0xff]
        %v1729 = vld [vmem:[%s168 + $0x1898] sm:$0xff]
        %v1730 = vld [vmem:[%s168 + $0x18a0] sm:$0xff]
        %v1731 = vld [vmem:[%s168 + $0x18a8] sm:$0xff]
        %v1732 = vld [vmem:[%s168 + $0x18d0] sm:$0xff]
        %v1733 = vld [vmem:[%s168 + $0x18d8] sm:$0xff]
        %v1734 = vld [vmem:[%s168 + $0x18e0] sm:$0xff]
        %v1735 = vld [vmem:[%s168 + $0x18e8] sm:$0xff]
        %v1736 = vld [vmem:[%s168 + $0x18f0] sm:$0xff]
        %v1737 = vld [vmem:[%s168 + $0x18f8] sm:$0xff]
        %v1738 = vld [vmem:[%s168 + $0x1920] sm:$0xff]
        %v1739 = vld [vmem:[%s168 + $0x1928] sm:$0xff]
        %v1740 = vld [vmem:[%s168 + $0x1930] sm:$0xff]
        %v1741 = vld [vmem:[%s168 + $0x1938] sm:$0xff]
        %v1742 = vld [vmem:[%s168 + $0x1940] sm:$0xff]
        %v1743 = vld [vmem:[%s168 + $0x1948] sm:$0xff]
        %v1744 = vld [vmem:[%s168 + $0x1970] sm:$0xff]
        %v1745 = vld [vmem:[%s168 + $0x1978] sm:$0xff]
        %v1746 = vld [vmem:[%s168 + $0x1980] sm:$0xff]
        %v1747 = vld [vmem:[%s168 + $0x1988] sm:$0xff]
        %v1748 = vld [vmem:[%s168 + $0x1990] sm:$0xff]
        %v1749 = vld [vmem:[%s168 + $0x1998] sm:$0xff]
        %v1750 = vld [vmem:[%s168 + $0x19c0] sm:$0xff]
        %v1751 = vld [vmem:[%s168 + $0x19c8] sm:$0xff]
        %v1752 = vld [vmem:[%s168 + $0x19d0] sm:$0xff]
        %v1753 = vld [vmem:[%s168 + $0x19d8] sm:$0xff]
        %v1754 = vld [vmem:[%s168 + $0x19e0] sm:$0xff]
        %v1755 = vld [vmem:[%s168 + $0x19e8] sm:$0xff]
        %v1756 = vld [vmem:[%s168 + $0x1a10] sm:$0xff]
        %v1757 = vld [vmem:[%s168 + $0x1a18] sm:$0xff]
        %v1758 = vld [vmem:[%s168 + $0x1a20] sm:$0xff]
        %v1759 = vld [vmem:[%s168 + $0x1a28] sm:$0xff]
        %v1760 = vld [vmem:[%s168 + $0x1a30] sm:$0xff]
        %v1761 = vld [vmem:[%s168 + $0x1a38] sm:$0xff]
        %v1762 = vld [vmem:[%s168 + $0x1a60] sm:$0xff]
        %v1763 = vld [vmem:[%s168 + $0x1a68] sm:$0xff]
        %v1764 = vld [vmem:[%s168 + $0x1a70] sm:$0xff]
        %v1765 = vld [vmem:[%s168 + $0x1a78] sm:$0xff]
        %v1766 = vld [vmem:[%s168 + $0x1a80] sm:$0xff]
        %v1767 = vld [vmem:[%s168 + $0x1a88] sm:$0xff]
        %v1768 = vld [vmem:[%s168 + $0x1ab0] sm:$0xff]
        %v1769 = vld [vmem:[%s168 + $0x1ab8] sm:$0xff]
        %v1770 = vld [vmem:[%s168 + $0x1ac0] sm:$0xff]
        %v1771 = vld [vmem:[%s168 + $0x1ac8] sm:$0xff]
        %v1772 = vld [vmem:[%s168 + $0x1ad0] sm:$0xff]
        %v1773 = vld [vmem:[%s168 + $0x1ad8] sm:$0xff]
        %v1774 = vld [vmem:[%s168 + $0x1b00] sm:$0xff]
        %v1775 = vld [vmem:[%s168 + $0x1b08] sm:$0xff]
        %v1776 = vld [vmem:[%s168 + $0x1b10] sm:$0xff]
        %v1777 = vld [vmem:[%s168 + $0x1b18] sm:$0xff]
        %v1778 = vld [vmem:[%s168 + $0x1b20] sm:$0xff]
        %v1779 = vld [vmem:[%s168 + $0x1b28] sm:$0xff]
        %v1780 = vld [vmem:[%s168 + $0x1b50] sm:$0xff]
        %v1781 = vld [vmem:[%s168 + $0x1b58] sm:$0xff]
        %v1782 = vld [vmem:[%s168 + $0x1b60] sm:$0xff]
        %v1783 = vld [vmem:[%s168 + $0x1b68] sm:$0xff]
        %v1784 = vld [vmem:[%s168 + $0x1b70] sm:$0xff]
        %v1785 = vld [vmem:[%s168 + $0x1b78] sm:$0xff]
        %v1786 = vld [vmem:[%s168 + $0x1ba0] sm:$0xff]
        %v1787 = vld [vmem:[%s168 + $0x1ba8] sm:$0xff]
        %v1788 = vld [vmem:[%s168 + $0x1bb0] sm:$0xff]
        %v1789 = vld [vmem:[%s168 + $0x1bb8] sm:$0xff]
        %v1790 = vld [vmem:[%s168 + $0x1bc0] sm:$0xff]
        %v1791 = vld [vmem:[%s168 + $0x1bc8] sm:$0xff]
        %v1792 = vld [vmem:[%s168 + $0x1bf0] sm:$0xff]
        %v1793 = vld [vmem:[%s168 + $0x1bf8] sm:$0xff]
        %v1794 = vld [vmem:[%s168 + $0x1c00] sm:$0xff]
        %v1795 = vld [vmem:[%s168 + $0x1c08] sm:$0xff]
        %v1796 = vld [vmem:[%s168 + $0x1c10] sm:$0xff]
        %v1797 = vld [vmem:[%s168 + $0x1c18] sm:$0xff]
        %v1798 = vld [vmem:[%s168 + $0x1c40] sm:$0xff]
        %v1799 = vld [vmem:[%s168 + $0x1c48] sm:$0xff]
        %v1800 = vld [vmem:[%s168 + $0x1c50] sm:$0xff]
        %v1801 = vld [vmem:[%s168 + $0x1c58] sm:$0xff]
        %v1802 = vld [vmem:[%s168 + $0x1c60] sm:$0xff]
        %v1803 = vld [vmem:[%s168 + $0x1c68] sm:$0xff]
        %v1804 = vld [vmem:[%s168 + $0x1c90] sm:$0xff]
        %v1805 = vld [vmem:[%s168 + $0x1c98] sm:$0xff]
        %v1806 = vld [vmem:[%s168 + $0x1ca0] sm:$0xff]
        %v1807 = vld [vmem:[%s168 + $0x1ca8] sm:$0xff]
        %v1808 = vld [vmem:[%s168 + $0x1cb0] sm:$0xff]
        %v1809 = vld [vmem:[%s168 + $0x1cb8] sm:$0xff]
        %v1810 = vld [vmem:[%s168 + $0x1ce0] sm:$0xff]
        %v1811 = vld [vmem:[%s168 + $0x1ce8] sm:$0xff]
        %v1812 = vld [vmem:[%s168 + $0x1cf0] sm:$0xff]
        %v1813 = vld [vmem:[%s168 + $0x1cf8] sm:$0xff]
        %v1814 = vld [vmem:[%s168 + $0x1d00] sm:$0xff]
        %v1815 = vld [vmem:[%s168 + $0x1d08] sm:$0xff]
        %v1816 = vld [vmem:[%s168 + $0x1d30] sm:$0xff]
        %v1817 = vld [vmem:[%s168 + $0x1d38] sm:$0xff]
        %v1818 = vld [vmem:[%s168 + $0x1d40] sm:$0xff]
        %v1819 = vld [vmem:[%s168 + $0x1d48] sm:$0xff]
        %v1820 = vld [vmem:[%s168 + $0x1d50] sm:$0xff]
        %v1821 = vld [vmem:[%s168 + $0x1d58] sm:$0xff]
        %v1822 = vld [vmem:[%s168 + $0x1d80] sm:$0xff]
        %v1823 = vld [vmem:[%s168 + $0x1d88] sm:$0xff]
        %v1824 = vld [vmem:[%s168 + $0x1d90] sm:$0xff]
        %v1825 = vld [vmem:[%s168 + $0x1d98] sm:$0xff]
        %v1826 = vld [vmem:[%s168 + $0x1da0] sm:$0xff]
        %v1827 = vld [vmem:[%s168 + $0x1da8] sm:$0xff]
        %v1828 = vld [vmem:[%s168 + $0x1dd0] sm:$0xff]
        %v1829 = vld [vmem:[%s168 + $0x1dd8] sm:$0xff]
        %v1830 = vld [vmem:[%s168 + $0x1de0] sm:$0xff]
        %v1831 = vld [vmem:[%s168 + $0x1de8] sm:$0xff]
        %v1832 = vld [vmem:[%s168 + $0x1df0] sm:$0xff]
        %v1833 = vld [vmem:[%s168 + $0x1df8] sm:$0xff]
        %v1834 = vld [vmem:[%s168 + $0x1e20] sm:$0xff]
        %v1835 = vld [vmem:[%s168 + $0x1e28] sm:$0xff]
        %v1836 = vld [vmem:[%s168 + $0x1e30] sm:$0xff]
        %v1837 = vld [vmem:[%s168 + $0x1e38] sm:$0xff]
        %v1838 = vld [vmem:[%s168 + $0x1e40] sm:$0xff]
        %v1839 = vld [vmem:[%s168 + $0x1e48] sm:$0xff]
        %v1840 = vld [vmem:[%s168 + $0x1e70] sm:$0xff]
        %v1841 = vld [vmem:[%s168 + $0x1e78] sm:$0xff]
        %v1842 = vld [vmem:[%s168 + $0x1e80] sm:$0xff]
        %v1843 = vld [vmem:[%s168 + $0x1e88] sm:$0xff]
        %v1844 = vld [vmem:[%s168 + $0x1e90] sm:$0xff]
        %v1845 = vld [vmem:[%s168 + $0x1e98] sm:$0xff]
        %v1846 = vld [vmem:[%s168 + $0x1ec0] sm:$0xff]
        %v1847 = vld [vmem:[%s168 + $0x1ec8] sm:$0xff]
        %v1848 = vld [vmem:[%s168 + $0x1ed0] sm:$0xff]
        %v1849 = vld [vmem:[%s168 + $0x1ed8] sm:$0xff]
        %v1850 = vld [vmem:[%s168 + $0x1ee0] sm:$0xff]
        %v1851 = vld [vmem:[%s168 + $0x1ee8] sm:$0xff]
        %v1852 = vld [vmem:[%s168 + $0x1f10] sm:$0xff]
        %v1853 = vld [vmem:[%s168 + $0x1f18] sm:$0xff]
        %v1854 = vld [vmem:[%s168 + $0x1f20] sm:$0xff]
        %v1855 = vld [vmem:[%s168 + $0x1f28] sm:$0xff]
        %v1856 = vld [vmem:[%s168 + $0x1f30] sm:$0xff]
        %v1857 = vld [vmem:[%s168 + $0x1f38] sm:$0xff]
        %v1858 = vld [vmem:[%s168 + $0x1f60] sm:$0xff]
        %v1859 = vld [vmem:[%s168 + $0x1f68] sm:$0xff]
        %v1860 = vld [vmem:[%s168 + $0x1f70] sm:$0xff]
        %v1861 = vld [vmem:[%s168 + $0x1f78] sm:$0xff]
        %v1862 = vld [vmem:[%s168 + $0x1f80] sm:$0xff]
        %v1863 = vld [vmem:[%s168 + $0x1f88] sm:$0xff]
        %v1864 = vld [vmem:[%s168 + $0x1fb0] sm:$0xff]
        %v1865 = vld [vmem:[%s168 + $0x1fb8] sm:$0xff]
        %v1866 = vld [vmem:[%s168 + $0x1fc0] sm:$0xff]
        %v1867 = vld [vmem:[%s168 + $0x1fc8] sm:$0xff]
        %v1868 = vld [vmem:[%s168 + $0x1fd0] sm:$0xff]
        %v1869 = vld [vmem:[%s168 + $0x1fd8] sm:$0xff]
        %v1870 = vld [vmem:[%s168 + $0x2000] sm:$0xff]
        %v1871 = vld [vmem:[%s168 + $0x2008] sm:$0xff]
        %v1872 = vld [vmem:[%s168 + $0x2010] sm:$0xff]
        %v1873 = vld [vmem:[%s168 + $0x2018] sm:$0xff]
        %v1874 = vld [vmem:[%s168 + $0x2020] sm:$0xff]
        %v1875 = vld [vmem:[%s168 + $0x2028] sm:$0xff]
        %v1876 = vld [vmem:[%s168 + $0x2050] sm:$0xff]
        %v1877 = vld [vmem:[%s168 + $0x2058] sm:$0xff]
        %v1878 = vld [vmem:[%s168 + $0x2060] sm:$0xff]
        %v1879 = vld [vmem:[%s168 + $0x2068] sm:$0xff]
        %v1880 = vld [vmem:[%s168 + $0x2070] sm:$0xff]
        %v1881 = vld [vmem:[%s168 + $0x2078] sm:$0xff]
        %v1882 = vld [vmem:[%s168 + $0x20a0] sm:$0xff]
        %v1883 = vld [vmem:[%s168 + $0x20a8] sm:$0xff]
        %v1884 = vld [vmem:[%s168 + $0x20b0] sm:$0xff]
        %v1885 = vld [vmem:[%s168 + $0x20b8] sm:$0xff]
        %v1886 = vld [vmem:[%s168 + $0x20c0] sm:$0xff]
        %v1887 = vld [vmem:[%s168 + $0x20c8] sm:$0xff]
        %v1888 = vld [vmem:[%s168 + $0x20f0] sm:$0xff]
        %v1889 = vld [vmem:[%s168 + $0x20f8] sm:$0xff]
        %v1890 = vld [vmem:[%s168 + $0x2100] sm:$0xff]
        %v1891 = vld [vmem:[%s168 + $0x2108] sm:$0xff]
        %v1892 = vld [vmem:[%s168 + $0x2110] sm:$0xff]
        %v1893 = vld [vmem:[%s168 + $0x2118] sm:$0xff]
        %v1894 = vld [vmem:[%s168 + $0x2140] sm:$0xff]
        %v1895 = vld [vmem:[%s168 + $0x2148] sm:$0xff]
        %v1896 = vld [vmem:[%s168 + $0x2150] sm:$0xff]
        %v1897 = vld [vmem:[%s168 + $0x2158] sm:$0xff]
        %v1898 = vld [vmem:[%s168 + $0x2160] sm:$0xff]
        %v1899 = vld [vmem:[%s168 + $0x2168] sm:$0xff]
        %2542 = vrot.lane.b32.xlu0 %v1258, 32
        %v2543 = vpop.permute.xlu0 %2542
        %2544 = vrot.lane.b32.xlu0 %v1259, 32
        %v2545 = vpop.permute.xlu0 %2544
        %2546 = vrot.lane.b32.xlu0 %v1260, 32
        %v2547 = vpop.permute.xlu0 %2546
        %2548 = vrot.lane.b32.xlu0 %v1261, 32
        %v2549 = vpop.permute.xlu0 %2548
        %2550 = vrot.lane.b32.xlu0 %v1262, 32
        %v2551 = vpop.permute.xlu0 %2550
        %2552 = vrot.lane.b32.xlu0 %v1263, 32
        %v2553 = vpop.permute.xlu0 %2552
        %2554 = vrot.lane.b32.xlu0 %v1264, 32
        %v2555 = vpop.permute.xlu0 %2554
        %2556 = vrot.lane.b32.xlu0 %v1265, 32
        %v2557 = vpop.permute.xlu0 %2556
        %2558 = vrot.lane.b32.xlu0 %v1266, 32
        %v2559 = vpop.permute.xlu0 %2558
        %2560 = vrot.lane.b32.xlu0 %v1267, 32
        %v2561 = vpop.permute.xlu0 %2560
        %2562 = vrot.lane.b32.xlu0 %v1268, 32
        %v2563 = vpop.permute.xlu0 %2562
        %2564 = vrot.lane.b32.xlu0 %v1269, 32
        %v2565 = vpop.permute.xlu0 %2564
        %2566 = vrot.lane.b32.xlu0 %v1270, 32
        %v2567 = vpop.permute.xlu0 %2566
        %2568 = vrot.lane.b32.xlu0 %v1271, 32
        %v2569 = vpop.permute.xlu0 %2568
        %2570 = vrot.lane.b32.xlu0 %v1272, 32
        %v2571 = vpop.permute.xlu0 %2570
        %2572 = vrot.lane.b32.xlu0 %v1273, 32
        %v2573 = vpop.permute.xlu0 %2572
        %2574 = vrot.lane.b32.xlu0 %v1274, 32
        %v2575 = vpop.permute.xlu0 %2574
        %2576 = vrot.lane.b32.xlu0 %v1275, 32
        %v2577 = vpop.permute.xlu0 %2576
        %2578 = vrot.lane.b32.xlu0 %v1276, 32
        %v2579 = vpop.permute.xlu0 %2578
        %2580 = vrot.lane.b32.xlu0 %v1277, 32
        %v2581 = vpop.permute.xlu0 %2580
        %2582 = vrot.lane.b32.xlu0 %v1278, 32
        %v2583 = vpop.permute.xlu0 %2582
        %2584 = vrot.lane.b32.xlu0 %v1279, 32
        %v2585 = vpop.permute.xlu0 %2584
        %2586 = vrot.lane.b32.xlu0 %v1280, 32
        %v2587 = vpop.permute.xlu0 %2586
        %2588 = vrot.lane.b32.xlu0 %v1281, 32
        %v2589 = vpop.permute.xlu0 %2588
        %2590 = vrot.lane.b32.xlu0 %v1282, 32
        %v2591 = vpop.permute.xlu0 %2590
        %2592 = vrot.lane.b32.xlu0 %v1283, 32
        %v2593 = vpop.permute.xlu0 %2592
        %2594 = vrot.lane.b32.xlu0 %v1284, 32
        %v2595 = vpop.permute.xlu0 %2594
        %2596 = vrot.lane.b32.xlu0 %v1285, 32
        %v2597 = vpop.permute.xlu0 %2596
        %2598 = vrot.lane.b32.xlu0 %v1286, 32
        %v2599 = vpop.permute.xlu0 %2598
        %2600 = vrot.lane.b32.xlu0 %v1287, 32
        %v2601 = vpop.permute.xlu0 %2600
        %2602 = vrot.lane.b32.xlu0 %v1288, 32
        %v2603 = vpop.permute.xlu0 %2602
        %2604 = vrot.lane.b32.xlu0 %v1289, 32
        %v2605 = vpop.permute.xlu0 %2604
        %2606 = vrot.lane.b32.xlu0 %v1290, 32
        %v2607 = vpop.permute.xlu0 %2606
        %2608 = vrot.lane.b32.xlu0 %v1291, 32
        %v2609 = vpop.permute.xlu0 %2608
        %2610 = vrot.lane.b32.xlu0 %v1292, 32
        %v2611 = vpop.permute.xlu0 %2610
        %2612 = vrot.lane.b32.xlu0 %v1293, 32
        %v2613 = vpop.permute.xlu0 %2612
        %2614 = vrot.lane.b32.xlu0 %v1294, 32
        %v2615 = vpop.permute.xlu0 %2614
        %2616 = vrot.lane.b32.xlu0 %v1295, 32
        %v2617 = vpop.permute.xlu0 %2616
        %2618 = vrot.lane.b32.xlu0 %v1296, 32
        %v2619 = vpop.permute.xlu0 %2618
        %2620 = vrot.lane.b32.xlu0 %v1297, 32
        %v2621 = vpop.permute.xlu0 %2620
        %2622 = vrot.lane.b32.xlu0 %v1298, 32
        %v2623 = vpop.permute.xlu0 %2622
        %2624 = vrot.lane.b32.xlu0 %v1299, 32
        %v2625 = vpop.permute.xlu0 %2624
        %2626 = vrot.lane.b32.xlu0 %v1300, 32
        %v2627 = vpop.permute.xlu0 %2626
        %2628 = vrot.lane.b32.xlu0 %v1301, 32
        %v2629 = vpop.permute.xlu0 %2628
        %2630 = vrot.lane.b32.xlu0 %v1302, 32
        %v2631 = vpop.permute.xlu0 %2630
        %2632 = vrot.lane.b32.xlu0 %v1303, 32
        %v2633 = vpop.permute.xlu0 %2632
        %2634 = vrot.lane.b32.xlu0 %v1304, 32
        %v2635 = vpop.permute.xlu0 %2634
        %2636 = vrot.lane.b32.xlu0 %v1305, 32
        %v2637 = vpop.permute.xlu0 %2636
        %2638 = vrot.lane.b32.xlu0 %v1306, 32
        %v2639 = vpop.permute.xlu0 %2638
        %2640 = vrot.lane.b32.xlu0 %v1307, 32
        %v2641 = vpop.permute.xlu0 %2640
        %2642 = vrot.lane.b32.xlu0 %v1308, 32
        %v2643 = vpop.permute.xlu0 %2642
        %2644 = vrot.lane.b32.xlu0 %v1309, 32
        %v2645 = vpop.permute.xlu0 %2644
        %2646 = vrot.lane.b32.xlu0 %v1310, 32
        %v2647 = vpop.permute.xlu0 %2646
        %2648 = vrot.lane.b32.xlu0 %v1311, 32
        %v2649 = vpop.permute.xlu0 %2648
        %2650 = vrot.lane.b32.xlu0 %v1312, 32
        %v2651 = vpop.permute.xlu0 %2650
        %2652 = vrot.lane.b32.xlu0 %v1313, 32
        %v2653 = vpop.permute.xlu0 %2652
        %2654 = vrot.lane.b32.xlu0 %v1314, 32
        %v2655 = vpop.permute.xlu0 %2654
        %2656 = vrot.lane.b32.xlu0 %v1315, 32
        %v2657 = vpop.permute.xlu0 %2656
        %2658 = vrot.lane.b32.xlu0 %v1316, 32
        %v2659 = vpop.permute.xlu0 %2658
        %2660 = vrot.lane.b32.xlu0 %v1317, 32
        %v2661 = vpop.permute.xlu0 %2660
        %2662 = vrot.lane.b32.xlu0 %v1318, 32
        %v2663 = vpop.permute.xlu0 %2662
        %2664 = vrot.lane.b32.xlu0 %v1319, 32
        %v2665 = vpop.permute.xlu0 %2664
        %2666 = vrot.lane.b32.xlu0 %v1320, 32
        %v2667 = vpop.permute.xlu0 %2666
        %2668 = vrot.lane.b32.xlu0 %v1321, 32
        %v2669 = vpop.permute.xlu0 %2668
        %2670 = vrot.lane.b32.xlu0 %v1322, 32
        %v2671 = vpop.permute.xlu0 %2670
        %2672 = vrot.lane.b32.xlu0 %v1323, 32
        %v2673 = vpop.permute.xlu0 %2672
        %2674 = vrot.lane.b32.xlu0 %v1324, 32
        %v2675 = vpop.permute.xlu0 %2674
        %2676 = vrot.lane.b32.xlu0 %v1325, 32
        %v2677 = vpop.permute.xlu0 %2676
        %2678 = vrot.lane.b32.xlu0 %v1326, 32
        %v2679 = vpop.permute.xlu0 %2678
        %2680 = vrot.lane.b32.xlu0 %v1327, 32
        %v2681 = vpop.permute.xlu0 %2680
        %2682 = vrot.lane.b32.xlu0 %v1328, 32
        %v2683 = vpop.permute.xlu0 %2682
        %2684 = vrot.lane.b32.xlu0 %v1329, 32
        %v2685 = vpop.permute.xlu0 %2684
        %2686 = vrot.lane.b32.xlu0 %v1330, 32
        %v2687 = vpop.permute.xlu0 %2686
        %2688 = vrot.lane.b32.xlu0 %v1331, 32
        %v2689 = vpop.permute.xlu0 %2688
        %2690 = vrot.lane.b32.xlu0 %v1332, 32
        %v2691 = vpop.permute.xlu0 %2690
        %2692 = vrot.lane.b32.xlu0 %v1333, 32
        %v2693 = vpop.permute.xlu0 %2692
        %2694 = vrot.lane.b32.xlu0 %v1334, 32
        %v2695 = vpop.permute.xlu0 %2694
        %2696 = vrot.lane.b32.xlu0 %v1335, 32
        %v2697 = vpop.permute.xlu0 %2696
        %2698 = vrot.lane.b32.xlu0 %v1336, 32
        %v2699 = vpop.permute.xlu0 %2698
        %2700 = vrot.lane.b32.xlu0 %v1337, 32
        %v2701 = vpop.permute.xlu0 %2700
        %2702 = vrot.lane.b32.xlu0 %v1338, 32
        %v2703 = vpop.permute.xlu0 %2702
        %2704 = vrot.lane.b32.xlu0 %v1339, 32
        %v2705 = vpop.permute.xlu0 %2704
        %2706 = vrot.lane.b32.xlu0 %v1340, 32
        %v2707 = vpop.permute.xlu0 %2706
        %2708 = vrot.lane.b32.xlu0 %v1341, 32
        %v2709 = vpop.permute.xlu0 %2708
        %2710 = vrot.lane.b32.xlu0 %v1342, 32
        %v2711 = vpop.permute.xlu0 %2710
        %2712 = vrot.lane.b32.xlu0 %v1343, 32
        %v2713 = vpop.permute.xlu0 %2712
        %2714 = vrot.lane.b32.xlu0 %v1344, 32
        %v2715 = vpop.permute.xlu0 %2714
        %2716 = vrot.lane.b32.xlu0 %v1345, 32
        %v2717 = vpop.permute.xlu0 %2716
        %2718 = vrot.lane.b32.xlu0 %v1346, 32
        %v2719 = vpop.permute.xlu0 %2718
        %2720 = vrot.lane.b32.xlu0 %v1347, 32
        %v2721 = vpop.permute.xlu0 %2720
        %2722 = vrot.lane.b32.xlu0 %v1348, 32
        %v2723 = vpop.permute.xlu0 %2722
        %2724 = vrot.lane.b32.xlu0 %v1349, 32
        %v2725 = vpop.permute.xlu0 %2724
        %2726 = vrot.lane.b32.xlu0 %v1350, 32
        %v2727 = vpop.permute.xlu0 %2726
        %2728 = vrot.lane.b32.xlu0 %v1351, 32
        %v2729 = vpop.permute.xlu0 %2728
        %2730 = vrot.lane.b32.xlu0 %v1352, 32
        %v2731 = vpop.permute.xlu0 %2730
        %2732 = vrot.lane.b32.xlu0 %v1353, 32
        %v2733 = vpop.permute.xlu0 %2732
        %2734 = vrot.lane.b32.xlu0 %v1354, 32
        %v2735 = vpop.permute.xlu0 %2734
        %2736 = vrot.lane.b32.xlu0 %v1355, 32
        %v2737 = vpop.permute.xlu0 %2736
        %2738 = vrot.lane.b32.xlu0 %v1356, 32
        %v2739 = vpop.permute.xlu0 %2738
        %2740 = vrot.lane.b32.xlu0 %v1357, 32
        %v2741 = vpop.permute.xlu0 %2740
        %2742 = vrot.lane.b32.xlu0 %v1358, 32
        %v2743 = vpop.permute.xlu0 %2742
        %2744 = vrot.lane.b32.xlu0 %v1359, 32
        %v2745 = vpop.permute.xlu0 %2744
        %2746 = vrot.lane.b32.xlu0 %v1360, 32
        %v2747 = vpop.permute.xlu0 %2746
        %2748 = vrot.lane.b32.xlu0 %v1361, 32
        %v2749 = vpop.permute.xlu0 %2748
        %2750 = vrot.lane.b32.xlu0 %v1362, 32
        %v2751 = vpop.permute.xlu0 %2750
        %2752 = vrot.lane.b32.xlu0 %v1363, 32
        %v2753 = vpop.permute.xlu0 %2752
        %2754 = vrot.lane.b32.xlu0 %v1364, 32
        %v2755 = vpop.permute.xlu0 %2754
        %2756 = vrot.lane.b32.xlu0 %v1365, 32
        %v2757 = vpop.permute.xlu0 %2756
        %2758 = vrot.lane.b32.xlu0 %v1366, 32
        %v2759 = vpop.permute.xlu0 %2758
        %2760 = vrot.lane.b32.xlu0 %v1367, 32
        %v2761 = vpop.permute.xlu0 %2760
        %2762 = vrot.lane.b32.xlu0 %v1368, 32
        %v2763 = vpop.permute.xlu0 %2762
        %2764 = vrot.lane.b32.xlu0 %v1369, 32
        %v2765 = vpop.permute.xlu0 %2764
        %2766 = vrot.lane.b32.xlu0 %v1370, 32
        %v2767 = vpop.permute.xlu0 %2766
        %2768 = vrot.lane.b32.xlu0 %v1371, 32
        %v2769 = vpop.permute.xlu0 %2768
        %2770 = vrot.lane.b32.xlu0 %v1372, 32
        %v2771 = vpop.permute.xlu0 %2770
        %2772 = vrot.lane.b32.xlu0 %v1373, 32
        %v2773 = vpop.permute.xlu0 %2772
        %2774 = vrot.lane.b32.xlu0 %v1374, 32
        %v2775 = vpop.permute.xlu0 %2774
        %2776 = vrot.lane.b32.xlu0 %v1375, 32
        %v2777 = vpop.permute.xlu0 %2776
        %2778 = vrot.lane.b32.xlu0 %v1376, 32
        %v2779 = vpop.permute.xlu0 %2778
        %2780 = vrot.lane.b32.xlu0 %v1377, 32
        %v2781 = vpop.permute.xlu0 %2780
        %2782 = vrot.lane.b32.xlu0 %v1378, 32
        %v2783 = vpop.permute.xlu0 %2782
        %2784 = vrot.lane.b32.xlu0 %v1379, 32
        %v2785 = vpop.permute.xlu0 %2784
        %2786 = vrot.lane.b32.xlu0 %v1380, 32
        %v2787 = vpop.permute.xlu0 %2786
        %2788 = vrot.lane.b32.xlu0 %v1381, 32
        %v2789 = vpop.permute.xlu0 %2788
        %2790 = vrot.lane.b32.xlu0 %v1382, 32
        %v2791 = vpop.permute.xlu0 %2790
        %2792 = vrot.lane.b32.xlu0 %v1383, 32
        %v2793 = vpop.permute.xlu0 %2792
        %2794 = vrot.lane.b32.xlu0 %v1384, 32
        %v2795 = vpop.permute.xlu0 %2794
        %2796 = vrot.lane.b32.xlu0 %v1385, 32
        %v2797 = vpop.permute.xlu0 %2796
        %2798 = vrot.lane.b32.xlu0 %v1386, 32
        %v2799 = vpop.permute.xlu0 %2798
        %2800 = vrot.lane.b32.xlu0 %v1387, 32
        %v2801 = vpop.permute.xlu0 %2800
        %2802 = vrot.lane.b32.xlu0 %v1388, 32
        %v2803 = vpop.permute.xlu0 %2802
        %2804 = vrot.lane.b32.xlu0 %v1389, 32
        %v2805 = vpop.permute.xlu0 %2804
        %2806 = vrot.lane.b32.xlu0 %v1390, 32
        %v2807 = vpop.permute.xlu0 %2806
        %2808 = vrot.lane.b32.xlu0 %v1391, 32
        %v2809 = vpop.permute.xlu0 %2808
        %2810 = vrot.lane.b32.xlu0 %v1392, 32
        %v2811 = vpop.permute.xlu0 %2810
        %2812 = vrot.lane.b32.xlu0 %v1393, 32
        %v2813 = vpop.permute.xlu0 %2812
        %2814 = vrot.lane.b32.xlu0 %v1394, 32
        %v2815 = vpop.permute.xlu0 %2814
        %2816 = vrot.lane.b32.xlu0 %v1395, 32
        %v2817 = vpop.permute.xlu0 %2816
        %2818 = vrot.lane.b32.xlu0 %v1396, 32
        %v2819 = vpop.permute.xlu0 %2818
        %2820 = vrot.lane.b32.xlu0 %v1397, 32
        %v2821 = vpop.permute.xlu0 %2820
        %2822 = vrot.lane.b32.xlu0 %v1398, 32
        %v2823 = vpop.permute.xlu0 %2822
        %2824 = vrot.lane.b32.xlu0 %v1399, 32
        %v2825 = vpop.permute.xlu0 %2824
        %2826 = vrot.lane.b32.xlu0 %v1400, 32
        %v2827 = vpop.permute.xlu0 %2826
        %2828 = vrot.lane.b32.xlu0 %v1401, 32
        %v2829 = vpop.permute.xlu0 %2828
        %2830 = vrot.lane.b32.xlu0 %v1402, 32
        %v2831 = vpop.permute.xlu0 %2830
        %2832 = vrot.lane.b32.xlu0 %v1403, 32
        %v2833 = vpop.permute.xlu0 %2832
        %2834 = vrot.lane.b32.xlu0 %v1404, 32
        %v2835 = vpop.permute.xlu0 %2834
        %2836 = vrot.lane.b32.xlu0 %v1405, 32
        %v2837 = vpop.permute.xlu0 %2836
        %2838 = vrot.lane.b32.xlu0 %v1406, 32
        %v2839 = vpop.permute.xlu0 %2838
        %2840 = vrot.lane.b32.xlu0 %v1407, 32
        %v2841 = vpop.permute.xlu0 %2840
        %2842 = vrot.lane.b32.xlu0 %v1408, 32
        %v2843 = vpop.permute.xlu0 %2842
        %2844 = vrot.lane.b32.xlu0 %v1409, 32
        %v2845 = vpop.permute.xlu0 %2844
        %2846 = vrot.lane.b32.xlu0 %v1410, 32
        %v2847 = vpop.permute.xlu0 %2846
        %2848 = vrot.lane.b32.xlu0 %v1411, 32
        %v2849 = vpop.permute.xlu0 %2848
        %2850 = vrot.lane.b32.xlu0 %v1412, 32
        %v2851 = vpop.permute.xlu0 %2850
        %2852 = vrot.lane.b32.xlu0 %v1413, 32
        %v2853 = vpop.permute.xlu0 %2852
        %2854 = vrot.lane.b32.xlu0 %v1414, 32
        %v2855 = vpop.permute.xlu0 %2854
        %2856 = vrot.lane.b32.xlu0 %v1415, 32
        %v2857 = vpop.permute.xlu0 %2856
        %2858 = vrot.lane.b32.xlu0 %v1416, 32
        %v2859 = vpop.permute.xlu0 %2858
        %2860 = vrot.lane.b32.xlu0 %v1417, 32
        %v2861 = vpop.permute.xlu0 %2860
        %2862 = vrot.lane.b32.xlu0 %v1418, 32
        %v2863 = vpop.permute.xlu0 %2862
        %2864 = vrot.lane.b32.xlu0 %v1419, 32
        %v2865 = vpop.permute.xlu0 %2864
        %2866 = vrot.lane.b32.xlu0 %v1420, 32
        %v2867 = vpop.permute.xlu0 %2866
        %2868 = vrot.lane.b32.xlu0 %v1421, 32
        %v2869 = vpop.permute.xlu0 %2868
        %2870 = vrot.lane.b32.xlu0 %v1422, 32
        %v2871 = vpop.permute.xlu0 %2870
        %2872 = vrot.lane.b32.xlu0 %v1423, 32
        %v2873 = vpop.permute.xlu0 %2872
        %2874 = vrot.lane.b32.xlu0 %v1424, 32
        %v2875 = vpop.permute.xlu0 %2874
        %2876 = vrot.lane.b32.xlu0 %v1425, 32
        %v2877 = vpop.permute.xlu0 %2876
        %2878 = vrot.lane.b32.xlu0 %v1426, 32
        %v2879 = vpop.permute.xlu0 %2878
        %2880 = vrot.lane.b32.xlu0 %v1427, 32
        %v2881 = vpop.permute.xlu0 %2880
        %2882 = vrot.lane.b32.xlu0 %v1428, 32
        %v2883 = vpop.permute.xlu0 %2882
        %2884 = vrot.lane.b32.xlu0 %v1429, 32
        %v2885 = vpop.permute.xlu0 %2884
        %2886 = vrot.lane.b32.xlu0 %v1430, 32
        %v2887 = vpop.permute.xlu0 %2886
        %2888 = vrot.lane.b32.xlu0 %v1431, 32
        %v2889 = vpop.permute.xlu0 %2888
        %2890 = vrot.lane.b32.xlu0 %v1432, 32
        %v2891 = vpop.permute.xlu0 %2890
        %2892 = vrot.lane.b32.xlu0 %v1433, 32
        %v2893 = vpop.permute.xlu0 %2892
        %2894 = vrot.lane.b32.xlu0 %v1434, 32
        %v2895 = vpop.permute.xlu0 %2894
        %2896 = vrot.lane.b32.xlu0 %v1435, 32
        %v2897 = vpop.permute.xlu0 %2896
        %2898 = vrot.lane.b32.xlu0 %v1436, 32
        %v2899 = vpop.permute.xlu0 %2898
        %2900 = vrot.lane.b32.xlu0 %v1437, 32
        %v2901 = vpop.permute.xlu0 %2900
        %2902 = vrot.lane.b32.xlu0 %v1438, 32
        %v2903 = vpop.permute.xlu0 %2902
        %2904 = vrot.lane.b32.xlu0 %v1439, 32
        %v2905 = vpop.permute.xlu0 %2904
        %2906 = vrot.lane.b32.xlu0 %v1440, 32
        %v2907 = vpop.permute.xlu0 %2906
        %2908 = vrot.lane.b32.xlu0 %v1441, 32
        %v2909 = vpop.permute.xlu0 %2908
        %2910 = vrot.lane.b32.xlu0 %v1442, 32
        %v2911 = vpop.permute.xlu0 %2910
        %2912 = vrot.lane.b32.xlu0 %v1443, 32
        %v2913 = vpop.permute.xlu0 %2912
        %2914 = vrot.lane.b32.xlu0 %v1444, 32
        %v2915 = vpop.permute.xlu0 %2914
        %2916 = vrot.lane.b32.xlu0 %v1445, 32
        %v2917 = vpop.permute.xlu0 %2916
        %2918 = vrot.lane.b32.xlu0 %v1446, 32
        %v2919 = vpop.permute.xlu0 %2918
        %2920 = vrot.lane.b32.xlu0 %v1447, 32
        %v2921 = vpop.permute.xlu0 %2920
        %2922 = vrot.lane.b32.xlu0 %v1448, 32
        %v2923 = vpop.permute.xlu0 %2922
        %2924 = vrot.lane.b32.xlu0 %v1449, 32
        %v2925 = vpop.permute.xlu0 %2924
        %2926 = vrot.lane.b32.xlu0 %v1450, 32
        %v2927 = vpop.permute.xlu0 %2926
        %2928 = vrot.lane.b32.xlu0 %v1451, 32
        %v2929 = vpop.permute.xlu0 %2928
        %2930 = vrot.lane.b32.xlu0 %v1452, 32
        %v2931 = vpop.permute.xlu0 %2930
        %2932 = vrot.lane.b32.xlu0 %v1453, 32
        %v2933 = vpop.permute.xlu0 %2932
        %2934 = vrot.lane.b32.xlu0 %v1454, 32
        %v2935 = vpop.permute.xlu0 %2934
        %2936 = vrot.lane.b32.xlu0 %v1455, 32
        %v2937 = vpop.permute.xlu0 %2936
        %2938 = vrot.lane.b32.xlu0 %v1456, 32
        %v2939 = vpop.permute.xlu0 %2938
        %2940 = vrot.lane.b32.xlu0 %v1457, 32
        %v2941 = vpop.permute.xlu0 %2940
        %2942 = vrot.lane.b32.xlu0 %v1458, 32
        %v2943 = vpop.permute.xlu0 %2942
        %2944 = vrot.lane.b32.xlu0 %v1459, 32
        %v2945 = vpop.permute.xlu0 %2944
        %2946 = vrot.lane.b32.xlu0 %v1460, 32
        %v2947 = vpop.permute.xlu0 %2946
        %2948 = vrot.lane.b32.xlu0 %v1461, 32
        %v2949 = vpop.permute.xlu0 %2948
        %2950 = vrot.lane.b32.xlu0 %v1462, 32
        %v2951 = vpop.permute.xlu0 %2950
        %2952 = vrot.lane.b32.xlu0 %v1463, 32
        %v2953 = vpop.permute.xlu0 %2952
        %2954 = vrot.lane.b32.xlu0 %v1464, 32
        %v2955 = vpop.permute.xlu0 %2954
        %2956 = vrot.lane.b32.xlu0 %v1465, 32
        %v2957 = vpop.permute.xlu0 %2956
        %2958 = vrot.lane.b32.xlu0 %v1466, 32
        %v2959 = vpop.permute.xlu0 %2958
        %2960 = vrot.lane.b32.xlu0 %v1467, 32
        %v2961 = vpop.permute.xlu0 %2960
        %2962 = vrot.lane.b32.xlu0 %v1468, 32
        %v2963 = vpop.permute.xlu0 %2962
        %2964 = vrot.lane.b32.xlu0 %v1469, 32
        %v2965 = vpop.permute.xlu0 %2964
        %2966 = vrot.lane.b32.xlu0 %v1470, 32
        %v2967 = vpop.permute.xlu0 %2966
        %2968 = vrot.lane.b32.xlu0 %v1471, 32
        %v2969 = vpop.permute.xlu0 %2968
        %2970 = vrot.lane.b32.xlu0 %v1472, 32
        %v2971 = vpop.permute.xlu0 %2970
        %2972 = vrot.lane.b32.xlu0 %v1473, 32
        %v2973 = vpop.permute.xlu0 %2972
        %2974 = vrot.lane.b32.xlu0 %v1474, 32
        %v2975 = vpop.permute.xlu0 %2974
        %2976 = vrot.lane.b32.xlu0 %v1475, 32
        %v2977 = vpop.permute.xlu0 %2976
        %2978 = vrot.lane.b32.xlu0 %v1476, 32
        %v2979 = vpop.permute.xlu0 %2978
        %2980 = vrot.lane.b32.xlu0 %v1477, 32
        %v2981 = vpop.permute.xlu0 %2980
        %2982 = vrot.lane.b32.xlu0 %v1478, 32
        %v2983 = vpop.permute.xlu0 %2982
        %2984 = vrot.lane.b32.xlu0 %v1479, 32
        %v2985 = vpop.permute.xlu0 %2984
        %2986 = vrot.lane.b32.xlu0 %v1480, 32
        %v2987 = vpop.permute.xlu0 %2986
        %2988 = vrot.lane.b32.xlu0 %v1481, 32
        %v2989 = vpop.permute.xlu0 %2988
        %2990 = vrot.lane.b32.xlu0 %v1482, 32
        %v2991 = vpop.permute.xlu0 %2990
        %2992 = vrot.lane.b32.xlu0 %v1483, 32
        %v2993 = vpop.permute.xlu0 %2992
        %2994 = vrot.lane.b32.xlu0 %v1484, 32
        %v2995 = vpop.permute.xlu0 %2994
        %2996 = vrot.lane.b32.xlu0 %v1485, 32
        %v2997 = vpop.permute.xlu0 %2996
        %2998 = vrot.lane.b32.xlu0 %v1486, 32
        %v2999 = vpop.permute.xlu0 %2998
        %3000 = vrot.lane.b32.xlu0 %v1487, 32
        %v3001 = vpop.permute.xlu0 %3000
        %3002 = vrot.lane.b32.xlu0 %v1488, 32
        %v3003 = vpop.permute.xlu0 %3002
        %3004 = vrot.lane.b32.xlu0 %v1489, 32
        %v3005 = vpop.permute.xlu0 %3004
        %3006 = vrot.lane.b32.xlu0 %v1490, 32
        %v3007 = vpop.permute.xlu0 %3006
        %3008 = vrot.lane.b32.xlu0 %v1491, 32
        %v3009 = vpop.permute.xlu0 %3008
        %3010 = vrot.lane.b32.xlu0 %v1492, 32
        %v3011 = vpop.permute.xlu0 %3010
        %3012 = vrot.lane.b32.xlu0 %v1493, 32
        %v3013 = vpop.permute.xlu0 %3012
        %3014 = vrot.lane.b32.xlu0 %v1494, 32
        %v3015 = vpop.permute.xlu0 %3014
        %3016 = vrot.lane.b32.xlu0 %v1495, 32
        %v3017 = vpop.permute.xlu0 %3016
        %3018 = vrot.lane.b32.xlu0 %v1496, 32
        %v3019 = vpop.permute.xlu0 %3018
        %3020 = vrot.lane.b32.xlu0 %v1497, 32
        %v3021 = vpop.permute.xlu0 %3020
        %3022 = vrot.lane.b32.xlu0 %v1498, 32
        %v3023 = vpop.permute.xlu0 %3022
        %3024 = vrot.lane.b32.xlu0 %v1499, 32
        %v3025 = vpop.permute.xlu0 %3024
        %3026 = vrot.lane.b32.xlu0 %v1500, 32
        %v3027 = vpop.permute.xlu0 %3026
        %3028 = vrot.lane.b32.xlu0 %v1501, 32
        %v3029 = vpop.permute.xlu0 %3028
        %3030 = vrot.lane.b32.xlu0 %v1502, 32
        %v3031 = vpop.permute.xlu0 %3030
        %3032 = vrot.lane.b32.xlu0 %v1503, 32
        %v3033 = vpop.permute.xlu0 %3032
        %3034 = vrot.lane.b32.xlu0 %v1504, 32
        %v3035 = vpop.permute.xlu0 %3034
        %3036 = vrot.lane.b32.xlu0 %v1505, 32
        %v3037 = vpop.permute.xlu0 %3036
        %3038 = vrot.lane.b32.xlu0 %v1506, 32
        %v3039 = vpop.permute.xlu0 %3038
        %3040 = vrot.lane.b32.xlu0 %v1507, 32
        %v3041 = vpop.permute.xlu0 %3040
        %3042 = vrot.lane.b32.xlu0 %v1508, 32
        %v3043 = vpop.permute.xlu0 %3042
        %3044 = vrot.lane.b32.xlu0 %v1509, 32
        %v3045 = vpop.permute.xlu0 %3044
        %3046 = vrot.lane.b32.xlu0 %v1510, 32
        %v3047 = vpop.permute.xlu0 %3046
        %3048 = vrot.lane.b32.xlu0 %v1511, 32
        %v3049 = vpop.permute.xlu0 %3048
        %3050 = vrot.lane.b32.xlu0 %v1512, 32
        %v3051 = vpop.permute.xlu0 %3050
        %3052 = vrot.lane.b32.xlu0 %v1513, 32
        %v3053 = vpop.permute.xlu0 %3052
        %3054 = vrot.lane.b32.xlu0 %v1514, 32
        %v3055 = vpop.permute.xlu0 %3054
        %3056 = vrot.lane.b32.xlu0 %v1515, 32
        %v3057 = vpop.permute.xlu0 %3056
        %3058 = vrot.lane.b32.xlu0 %v1516, 32
        %v3059 = vpop.permute.xlu0 %3058
        %3060 = vrot.lane.b32.xlu0 %v1517, 32
        %v3061 = vpop.permute.xlu0 %3060
        %3062 = vrot.lane.b32.xlu0 %v1518, 32
        %v3063 = vpop.permute.xlu0 %3062
        %3064 = vrot.lane.b32.xlu0 %v1519, 32
        %v3065 = vpop.permute.xlu0 %3064
        %3066 = vrot.lane.b32.xlu0 %v1520, 32
        %v3067 = vpop.permute.xlu0 %3066
        %3068 = vrot.lane.b32.xlu0 %v1521, 32
        %v3069 = vpop.permute.xlu0 %3068
        %3070 = vrot.lane.b32.xlu0 %v1522, 32
        %v3071 = vpop.permute.xlu0 %3070
        %3072 = vrot.lane.b32.xlu0 %v1523, 32
        %v3073 = vpop.permute.xlu0 %3072
        %3074 = vrot.lane.b32.xlu0 %v1524, 32
        %v3075 = vpop.permute.xlu0 %3074
        %3076 = vrot.lane.b32.xlu0 %v1525, 32
        %v3077 = vpop.permute.xlu0 %3076
        %3078 = vrot.lane.b32.xlu0 %v1526, 32
        %v3079 = vpop.permute.xlu0 %3078
        %3080 = vrot.lane.b32.xlu0 %v1527, 32
        %v3081 = vpop.permute.xlu0 %3080
        %3082 = vrot.lane.b32.xlu0 %v1528, 32
        %v3083 = vpop.permute.xlu0 %3082
        %3084 = vrot.lane.b32.xlu0 %v1529, 32
        %v3085 = vpop.permute.xlu0 %3084
        %3086 = vrot.lane.b32.xlu0 %v1530, 32
        %v3087 = vpop.permute.xlu0 %3086
        %3088 = vrot.lane.b32.xlu0 %v1531, 32
        %v3089 = vpop.permute.xlu0 %3088
        %3090 = vrot.lane.b32.xlu0 %v1532, 32
        %v3091 = vpop.permute.xlu0 %3090
        %3092 = vrot.lane.b32.xlu0 %v1533, 32
        %v3093 = vpop.permute.xlu0 %3092
        %3094 = vrot.lane.b32.xlu0 %v1534, 32
        %v3095 = vpop.permute.xlu0 %3094
        %3096 = vrot.lane.b32.xlu0 %v1535, 32
        %v3097 = vpop.permute.xlu0 %3096
        %3098 = vrot.lane.b32.xlu0 %v1536, 32
        %v3099 = vpop.permute.xlu0 %3098
        %3100 = vrot.lane.b32.xlu0 %v1537, 32
        %v3101 = vpop.permute.xlu0 %3100
        %3102 = vrot.lane.b32.xlu0 %v1538, 32
        %v3103 = vpop.permute.xlu0 %3102
        %3104 = vrot.lane.b32.xlu0 %v1539, 32
        %v3105 = vpop.permute.xlu0 %3104
        %3106 = vrot.lane.b32.xlu0 %v1540, 32
        %v3107 = vpop.permute.xlu0 %3106
        %3108 = vrot.lane.b32.xlu0 %v1541, 32
        %v3109 = vpop.permute.xlu0 %3108
        %3110 = vrot.lane.b32.xlu0 %v1542, 32
        %v3111 = vpop.permute.xlu0 %3110
        %3112 = vrot.lane.b32.xlu0 %v1543, 32
        %v3113 = vpop.permute.xlu0 %3112
        %3114 = vrot.lane.b32.xlu0 %v1544, 32
        %v3115 = vpop.permute.xlu0 %3114
        %3116 = vrot.lane.b32.xlu0 %v1545, 32
        %v3117 = vpop.permute.xlu0 %3116
        %3118 = vrot.lane.b32.xlu0 %v1546, 32
        %v3119 = vpop.permute.xlu0 %3118
        %3120 = vrot.lane.b32.xlu0 %v1547, 32
        %v3121 = vpop.permute.xlu0 %3120
        %3122 = vrot.lane.b32.xlu0 %v1548, 32
        %v3123 = vpop.permute.xlu0 %3122
        %3124 = vrot.lane.b32.xlu0 %v1549, 32
        %v3125 = vpop.permute.xlu0 %3124
        %3126 = vrot.lane.b32.xlu0 %v1550, 32
        %v3127 = vpop.permute.xlu0 %3126
        %3128 = vrot.lane.b32.xlu0 %v1551, 32
        %v3129 = vpop.permute.xlu0 %3128
        %3130 = vrot.lane.b32.xlu0 %v1552, 32
        %v3131 = vpop.permute.xlu0 %3130
        %3132 = vrot.lane.b32.xlu0 %v1553, 32
        %v3133 = vpop.permute.xlu0 %3132
        %3134 = vrot.lane.b32.xlu0 %v1554, 32
        %v3135 = vpop.permute.xlu0 %3134
        %3136 = vrot.lane.b32.xlu0 %v1555, 32
        %v3137 = vpop.permute.xlu0 %3136
        %3138 = vrot.lane.b32.xlu0 %v1556, 32
        %v3139 = vpop.permute.xlu0 %3138
        %3140 = vrot.lane.b32.xlu0 %v1557, 32
        %v3141 = vpop.permute.xlu0 %3140
        %3142 = vrot.lane.b32.xlu0 %v1558, 32
        %v3143 = vpop.permute.xlu0 %3142
        %3144 = vrot.lane.b32.xlu0 %v1559, 32
        %v3145 = vpop.permute.xlu0 %3144
        %3146 = vrot.lane.b32.xlu0 %v1560, 32
        %v3147 = vpop.permute.xlu0 %3146
        %3148 = vrot.lane.b32.xlu0 %v1561, 32
        %v3149 = vpop.permute.xlu0 %3148
        %3150 = vrot.lane.b32.xlu0 %v1562, 32
        %v3151 = vpop.permute.xlu0 %3150
        %3152 = vrot.lane.b32.xlu0 %v1563, 32
        %v3153 = vpop.permute.xlu0 %3152
        %3154 = vrot.lane.b32.xlu0 %v1564, 32
        %v3155 = vpop.permute.xlu0 %3154
        %3156 = vrot.lane.b32.xlu0 %v1565, 32
        %v3157 = vpop.permute.xlu0 %3156
        %3158 = vrot.lane.b32.xlu0 %v1566, 32
        %v3159 = vpop.permute.xlu0 %3158
        %3160 = vrot.lane.b32.xlu0 %v1567, 32
        %v3161 = vpop.permute.xlu0 %3160
        %3162 = vrot.lane.b32.xlu0 %v1568, 32
        %v3163 = vpop.permute.xlu0 %3162
        %3164 = vrot.lane.b32.xlu0 %v1569, 32
        %v3165 = vpop.permute.xlu0 %3164
        %3166 = vrot.lane.b32.xlu0 %v1570, 32
        %v3167 = vpop.permute.xlu0 %3166
        %3168 = vrot.lane.b32.xlu0 %v1571, 32
        %v3169 = vpop.permute.xlu0 %3168
        %3170 = vrot.lane.b32.xlu0 %v1572, 32
        %v3171 = vpop.permute.xlu0 %3170
        %3172 = vrot.lane.b32.xlu0 %v1573, 32
        %v3173 = vpop.permute.xlu0 %3172
        %3174 = vrot.lane.b32.xlu0 %v1574, 32
        %v3175 = vpop.permute.xlu0 %3174
        %3176 = vrot.lane.b32.xlu0 %v1575, 32
        %v3177 = vpop.permute.xlu0 %3176
        %3178 = vrot.lane.b32.xlu0 %v1576, 32
        %v3179 = vpop.permute.xlu0 %3178
        %3180 = vrot.lane.b32.xlu0 %v1577, 32
        %v3181 = vpop.permute.xlu0 %3180
        %3182 = vrot.lane.b32.xlu0 %v1578, 32
        %v3183 = vpop.permute.xlu0 %3182
        %3184 = vrot.lane.b32.xlu0 %v1579, 32
        %v3185 = vpop.permute.xlu0 %3184
        %3186 = vrot.lane.b32.xlu0 %v1580, 32
        %v3187 = vpop.permute.xlu0 %3186
        %3188 = vrot.lane.b32.xlu0 %v1581, 32
        %v3189 = vpop.permute.xlu0 %3188
        %3190 = vrot.lane.b32.xlu0 %v1582, 32
        %v3191 = vpop.permute.xlu0 %3190
        %3192 = vrot.lane.b32.xlu0 %v1583, 32
        %v3193 = vpop.permute.xlu0 %3192
        %3194 = vrot.lane.b32.xlu0 %v1584, 32
        %v3195 = vpop.permute.xlu0 %3194
        %3196 = vrot.lane.b32.xlu0 %v1585, 32
        %v3197 = vpop.permute.xlu0 %3196
        %3198 = vrot.lane.b32.xlu0 %v1586, 32
        %v3199 = vpop.permute.xlu0 %3198
        %3200 = vrot.lane.b32.xlu0 %v1587, 32
        %v3201 = vpop.permute.xlu0 %3200
        %3202 = vrot.lane.b32.xlu0 %v1588, 32
        %v3203 = vpop.permute.xlu0 %3202
        %3204 = vrot.lane.b32.xlu0 %v1589, 32
        %v3205 = vpop.permute.xlu0 %3204
        %3206 = vrot.lane.b32.xlu0 %v1590, 32
        %v3207 = vpop.permute.xlu0 %3206
        %3208 = vrot.lane.b32.xlu0 %v1591, 32
        %v3209 = vpop.permute.xlu0 %3208
        %3210 = vrot.lane.b32.xlu0 %v1592, 32
        %v3211 = vpop.permute.xlu0 %3210
        %3212 = vrot.lane.b32.xlu0 %v1593, 32
        %v3213 = vpop.permute.xlu0 %3212
        %3214 = vrot.lane.b32.xlu0 %v1594, 32
        %v3215 = vpop.permute.xlu0 %3214
        %3216 = vrot.lane.b32.xlu0 %v1595, 32
        %v3217 = vpop.permute.xlu0 %3216
        %3218 = vrot.lane.b32.xlu0 %v1596, 32
        %v3219 = vpop.permute.xlu0 %3218
        %3220 = vrot.lane.b32.xlu0 %v1597, 32
        %v3221 = vpop.permute.xlu0 %3220
        %3222 = vrot.lane.b32.xlu0 %v1598, 32
        %v3223 = vpop.permute.xlu0 %3222
        %3224 = vrot.lane.b32.xlu0 %v1599, 32
        %v3225 = vpop.permute.xlu0 %3224
        %3226 = vrot.lane.b32.xlu0 %v1600, 32
        %v3227 = vpop.permute.xlu0 %3226
        %3228 = vrot.lane.b32.xlu0 %v1601, 32
        %v3229 = vpop.permute.xlu0 %3228
        %3230 = vrot.lane.b32.xlu0 %v1602, 32
        %v3231 = vpop.permute.xlu0 %3230
        %3232 = vrot.lane.b32.xlu0 %v1603, 32
        %v3233 = vpop.permute.xlu0 %3232
        %3234 = vrot.lane.b32.xlu0 %v1604, 32
        %v3235 = vpop.permute.xlu0 %3234
        %3236 = vrot.lane.b32.xlu0 %v1605, 32
        %v3237 = vpop.permute.xlu0 %3236
        %3238 = vrot.lane.b32.xlu0 %v1606, 32
        %v3239 = vpop.permute.xlu0 %3238
        %3240 = vrot.lane.b32.xlu0 %v1607, 32
        %v3241 = vpop.permute.xlu0 %3240
        %3242 = vrot.lane.b32.xlu0 %v1608, 32
        %v3243 = vpop.permute.xlu0 %3242
        %3244 = vrot.lane.b32.xlu0 %v1609, 32
        %v3245 = vpop.permute.xlu0 %3244
        %3246 = vrot.lane.b32.xlu0 %v1610, 32
        %v3247 = vpop.permute.xlu0 %3246
        %3248 = vrot.lane.b32.xlu0 %v1611, 32
        %v3249 = vpop.permute.xlu0 %3248
        %3250 = vrot.lane.b32.xlu0 %v1612, 32
        %v3251 = vpop.permute.xlu0 %3250
        %3252 = vrot.lane.b32.xlu0 %v1613, 32
        %v3253 = vpop.permute.xlu0 %3252
        %3254 = vrot.lane.b32.xlu0 %v1614, 32
        %v3255 = vpop.permute.xlu0 %3254
        %3256 = vrot.lane.b32.xlu0 %v1615, 32
        %v3257 = vpop.permute.xlu0 %3256
        %3258 = vrot.lane.b32.xlu0 %v1616, 32
        %v3259 = vpop.permute.xlu0 %3258
        %3260 = vrot.lane.b32.xlu0 %v1617, 32
        %v3261 = vpop.permute.xlu0 %3260
        %3262 = vrot.lane.b32.xlu0 %v1618, 32
        %v3263 = vpop.permute.xlu0 %3262
        %3264 = vrot.lane.b32.xlu0 %v1619, 32
        %v3265 = vpop.permute.xlu0 %3264
        %3266 = vrot.lane.b32.xlu0 %v1620, 32
        %v3267 = vpop.permute.xlu0 %3266
        %3268 = vrot.lane.b32.xlu0 %v1621, 32
        %v3269 = vpop.permute.xlu0 %3268
        %3270 = vrot.lane.b32.xlu0 %v1622, 32
        %v3271 = vpop.permute.xlu0 %3270
        %3272 = vrot.lane.b32.xlu0 %v1623, 32
        %v3273 = vpop.permute.xlu0 %3272
        %3274 = vrot.lane.b32.xlu0 %v1624, 32
        %v3275 = vpop.permute.xlu0 %3274
        %3276 = vrot.lane.b32.xlu0 %v1625, 32
        %v3277 = vpop.permute.xlu0 %3276
        %3278 = vrot.lane.b32.xlu0 %v1626, 32
        %v3279 = vpop.permute.xlu0 %3278
        %3280 = vrot.lane.b32.xlu0 %v1627, 32
        %v3281 = vpop.permute.xlu0 %3280
        %3282 = vrot.lane.b32.xlu0 %v1628, 32
        %v3283 = vpop.permute.xlu0 %3282
        %3284 = vrot.lane.b32.xlu0 %v1629, 32
        %v3285 = vpop.permute.xlu0 %3284
        %3286 = vrot.lane.b32.xlu0 %v1630, 32
        %v3287 = vpop.permute.xlu0 %3286
        %3288 = vrot.lane.b32.xlu0 %v1631, 32
        %v3289 = vpop.permute.xlu0 %3288
        %3290 = vrot.lane.b32.xlu0 %v1632, 32
        %v3291 = vpop.permute.xlu0 %3290
        %3292 = vrot.lane.b32.xlu0 %v1633, 32
        %v3293 = vpop.permute.xlu0 %3292
        %3294 = vrot.lane.b32.xlu0 %v1634, 32
        %v3295 = vpop.permute.xlu0 %3294
        %3296 = vrot.lane.b32.xlu0 %v1635, 32
        %v3297 = vpop.permute.xlu0 %3296
        %3298 = vrot.lane.b32.xlu0 %v1636, 32
        %v3299 = vpop.permute.xlu0 %3298
        %3300 = vrot.lane.b32.xlu0 %v1637, 32
        %v3301 = vpop.permute.xlu0 %3300
        %3302 = vrot.lane.b32.xlu0 %v1638, 32
        %v3303 = vpop.permute.xlu0 %3302
        %3304 = vrot.lane.b32.xlu0 %v1639, 32
        %v3305 = vpop.permute.xlu0 %3304
        %3306 = vrot.lane.b32.xlu0 %v1640, 32
        %v3307 = vpop.permute.xlu0 %3306
        %3308 = vrot.lane.b32.xlu0 %v1641, 32
        %v3309 = vpop.permute.xlu0 %3308
        %3310 = vrot.lane.b32.xlu0 %v1642, 32
        %v3311 = vpop.permute.xlu0 %3310
        %3312 = vrot.lane.b32.xlu0 %v1643, 32
        %v3313 = vpop.permute.xlu0 %3312
        %3314 = vrot.lane.b32.xlu0 %v1644, 32
        %v3315 = vpop.permute.xlu0 %3314
        %3316 = vrot.lane.b32.xlu0 %v1645, 32
        %v3317 = vpop.permute.xlu0 %3316
        %3318 = vrot.lane.b32.xlu0 %v1646, 32
        %v3319 = vpop.permute.xlu0 %3318
        %3320 = vrot.lane.b32.xlu0 %v1647, 32
        %v3321 = vpop.permute.xlu0 %3320
        %3322 = vrot.lane.b32.xlu0 %v1648, 32
        %v3323 = vpop.permute.xlu0 %3322
        %3324 = vrot.lane.b32.xlu0 %v1649, 32
        %v3325 = vpop.permute.xlu0 %3324
        %3326 = vrot.lane.b32.xlu0 %v1650, 32
        %v3327 = vpop.permute.xlu0 %3326
        %3328 = vrot.lane.b32.xlu0 %v1651, 32
        %v3329 = vpop.permute.xlu0 %3328
        %3330 = vrot.lane.b32.xlu0 %v1652, 32
        %v3331 = vpop.permute.xlu0 %3330
        %3332 = vrot.lane.b32.xlu0 %v1653, 32
        %v3333 = vpop.permute.xlu0 %3332
        %3334 = vrot.lane.b32.xlu0 %v1654, 32
        %v3335 = vpop.permute.xlu0 %3334
        %3336 = vrot.lane.b32.xlu0 %v1655, 32
        %v3337 = vpop.permute.xlu0 %3336
        %3338 = vrot.lane.b32.xlu0 %v1656, 32
        %v3339 = vpop.permute.xlu0 %3338
        %3340 = vrot.lane.b32.xlu0 %v1657, 32
        %v3341 = vpop.permute.xlu0 %3340
        %3342 = vrot.lane.b32.xlu0 %v1658, 32
        %v3343 = vpop.permute.xlu0 %3342
        %3344 = vrot.lane.b32.xlu0 %v1659, 32
        %v3345 = vpop.permute.xlu0 %3344
        %3346 = vrot.lane.b32.xlu0 %v1660, 32
        %v3347 = vpop.permute.xlu0 %3346
        %3348 = vrot.lane.b32.xlu0 %v1661, 32
        %v3349 = vpop.permute.xlu0 %3348
        %3350 = vrot.lane.b32.xlu0 %v1662, 32
        %v3351 = vpop.permute.xlu0 %3350
        %3352 = vrot.lane.b32.xlu0 %v1663, 32
        %v3353 = vpop.permute.xlu0 %3352
        %3354 = vrot.lane.b32.xlu0 %v1664, 32
        %v3355 = vpop.permute.xlu0 %3354
        %3356 = vrot.lane.b32.xlu0 %v1665, 32
        %v3357 = vpop.permute.xlu0 %3356
        %3358 = vrot.lane.b32.xlu0 %v1666, 32
        %v3359 = vpop.permute.xlu0 %3358
        %3360 = vrot.lane.b32.xlu0 %v1667, 32
        %v3361 = vpop.permute.xlu0 %3360
        %3362 = vrot.lane.b32.xlu0 %v1668, 32
        %v3363 = vpop.permute.xlu0 %3362
        %3364 = vrot.lane.b32.xlu0 %v1669, 32
        %v3365 = vpop.permute.xlu0 %3364
        %3366 = vrot.lane.b32.xlu0 %v1670, 32
        %v3367 = vpop.permute.xlu0 %3366
        %3368 = vrot.lane.b32.xlu0 %v1671, 32
        %v3369 = vpop.permute.xlu0 %3368
        %3370 = vrot.lane.b32.xlu0 %v1672, 32
        %v3371 = vpop.permute.xlu0 %3370
        %3372 = vrot.lane.b32.xlu0 %v1673, 32
        %v3373 = vpop.permute.xlu0 %3372
        %3374 = vrot.lane.b32.xlu0 %v1674, 32
        %v3375 = vpop.permute.xlu0 %3374
        %3376 = vrot.lane.b32.xlu0 %v1675, 32
        %v3377 = vpop.permute.xlu0 %3376
        %3378 = vrot.lane.b32.xlu0 %v1676, 32
        %v3379 = vpop.permute.xlu0 %3378
        %3380 = vrot.lane.b32.xlu0 %v1677, 32
        %v3381 = vpop.permute.xlu0 %3380
        %3382 = vrot.lane.b32.xlu0 %v1678, 32
        %v3383 = vpop.permute.xlu0 %3382
        %3384 = vrot.lane.b32.xlu0 %v1679, 32
        %v3385 = vpop.permute.xlu0 %3384
        %3386 = vrot.lane.b32.xlu0 %v1680, 32
        %v3387 = vpop.permute.xlu0 %3386
        %3388 = vrot.lane.b32.xlu0 %v1681, 32
        %v3389 = vpop.permute.xlu0 %3388
        %3390 = vrot.lane.b32.xlu0 %v1682, 32
        %v3391 = vpop.permute.xlu0 %3390
        %3392 = vrot.lane.b32.xlu0 %v1683, 32
        %v3393 = vpop.permute.xlu0 %3392
        %3394 = vrot.lane.b32.xlu0 %v1684, 32
        %v3395 = vpop.permute.xlu0 %3394
        %3396 = vrot.lane.b32.xlu0 %v1685, 32
        %v3397 = vpop.permute.xlu0 %3396
        %3398 = vrot.lane.b32.xlu0 %v1686, 32
        %v3399 = vpop.permute.xlu0 %3398
        %3400 = vrot.lane.b32.xlu0 %v1687, 32
        %v3401 = vpop.permute.xlu0 %3400
        %3402 = vrot.lane.b32.xlu0 %v1688, 32
        %v3403 = vpop.permute.xlu0 %3402
        %3404 = vrot.lane.b32.xlu0 %v1689, 32
        %v3405 = vpop.permute.xlu0 %3404
        %3406 = vrot.lane.b32.xlu0 %v1690, 32
        %v3407 = vpop.permute.xlu0 %3406
        %3408 = vrot.lane.b32.xlu0 %v1691, 32
        %v3409 = vpop.permute.xlu0 %3408
        %3410 = vrot.lane.b32.xlu0 %v1692, 32
        %v3411 = vpop.permute.xlu0 %3410
        %3412 = vrot.lane.b32.xlu0 %v1693, 32
        %v3413 = vpop.permute.xlu0 %3412
        %3414 = vrot.lane.b32.xlu0 %v1694, 32
        %v3415 = vpop.permute.xlu0 %3414
        %3416 = vrot.lane.b32.xlu0 %v1695, 32
        %v3417 = vpop.permute.xlu0 %3416
        %3418 = vrot.lane.b32.xlu0 %v1696, 32
        %v3419 = vpop.permute.xlu0 %3418
        %3420 = vrot.lane.b32.xlu0 %v1697, 32
        %v3421 = vpop.permute.xlu0 %3420
        %3422 = vrot.lane.b32.xlu0 %v1698, 32
        %v3423 = vpop.permute.xlu0 %3422
        %3424 = vrot.lane.b32.xlu0 %v1699, 32
        %v3425 = vpop.permute.xlu0 %3424
        %3426 = vrot.lane.b32.xlu0 %v1700, 32
        %v3427 = vpop.permute.xlu0 %3426
        %3428 = vrot.lane.b32.xlu0 %v1701, 32
        %v3429 = vpop.permute.xlu0 %3428
        %3430 = vrot.lane.b32.xlu0 %v1702, 32
        %v3431 = vpop.permute.xlu0 %3430
        %3432 = vrot.lane.b32.xlu0 %v1703, 32
        %v3433 = vpop.permute.xlu0 %3432
        %3434 = vrot.lane.b32.xlu0 %v1704, 32
        %v3435 = vpop.permute.xlu0 %3434
        %3436 = vrot.lane.b32.xlu0 %v1705, 32
        %v3437 = vpop.permute.xlu0 %3436
        %3438 = vrot.lane.b32.xlu0 %v1706, 32
        %v3439 = vpop.permute.xlu0 %3438
        %3440 = vrot.lane.b32.xlu0 %v1707, 32
        %v3441 = vpop.permute.xlu0 %3440
        %3442 = vrot.lane.b32.xlu0 %v1708, 32
        %v3443 = vpop.permute.xlu0 %3442
        %3444 = vrot.lane.b32.xlu0 %v1709, 32
        %v3445 = vpop.permute.xlu0 %3444
        %3446 = vrot.lane.b32.xlu0 %v1710, 32
        %v3447 = vpop.permute.xlu0 %3446
        %3448 = vrot.lane.b32.xlu0 %v1711, 32
        %v3449 = vpop.permute.xlu0 %3448
        %3450 = vrot.lane.b32.xlu0 %v1712, 32
        %v3451 = vpop.permute.xlu0 %3450
        %3452 = vrot.lane.b32.xlu0 %v1713, 32
        %v3453 = vpop.permute.xlu0 %3452
        %3454 = vrot.lane.b32.xlu0 %v1714, 32
        %v3455 = vpop.permute.xlu0 %3454
        %3456 = vrot.lane.b32.xlu0 %v1715, 32
        %v3457 = vpop.permute.xlu0 %3456
        %3458 = vrot.lane.b32.xlu0 %v1716, 32
        %v3459 = vpop.permute.xlu0 %3458
        %3460 = vrot.lane.b32.xlu0 %v1717, 32
        %v3461 = vpop.permute.xlu0 %3460
        %3462 = vrot.lane.b32.xlu0 %v1718, 32
        %v3463 = vpop.permute.xlu0 %3462
        %3464 = vrot.lane.b32.xlu0 %v1719, 32
        %v3465 = vpop.permute.xlu0 %3464
        %3466 = vrot.lane.b32.xlu0 %v1720, 32
        %v3467 = vpop.permute.xlu0 %3466
        %3468 = vrot.lane.b32.xlu0 %v1721, 32
        %v3469 = vpop.permute.xlu0 %3468
        %3470 = vrot.lane.b32.xlu0 %v1722, 32
        %v3471 = vpop.permute.xlu0 %3470
        %3472 = vrot.lane.b32.xlu0 %v1723, 32
        %v3473 = vpop.permute.xlu0 %3472
        %3474 = vrot.lane.b32.xlu0 %v1724, 32
        %v3475 = vpop.permute.xlu0 %3474
        %3476 = vrot.lane.b32.xlu0 %v1725, 32
        %v3477 = vpop.permute.xlu0 %3476
        %3478 = vrot.lane.b32.xlu0 %v1726, 32
        %v3479 = vpop.permute.xlu0 %3478
        %3480 = vrot.lane.b32.xlu0 %v1727, 32
        %v3481 = vpop.permute.xlu0 %3480
        %3482 = vrot.lane.b32.xlu0 %v1728, 32
        %v3483 = vpop.permute.xlu0 %3482
        %3484 = vrot.lane.b32.xlu0 %v1729, 32
        %v3485 = vpop.permute.xlu0 %3484
        %3486 = vrot.lane.b32.xlu0 %v1730, 32
        %v3487 = vpop.permute.xlu0 %3486
        %3488 = vrot.lane.b32.xlu0 %v1731, 32
        %v3489 = vpop.permute.xlu0 %3488
        %3490 = vrot.lane.b32.xlu0 %v1732, 32
        %v3491 = vpop.permute.xlu0 %3490
        %3492 = vrot.lane.b32.xlu0 %v1733, 32
        %v3493 = vpop.permute.xlu0 %3492
        %3494 = vrot.lane.b32.xlu0 %v1734, 32
        %v3495 = vpop.permute.xlu0 %3494
        %3496 = vrot.lane.b32.xlu0 %v1735, 32
        %v3497 = vpop.permute.xlu0 %3496
        %3498 = vrot.lane.b32.xlu0 %v1736, 32
        %v3499 = vpop.permute.xlu0 %3498
        %3500 = vrot.lane.b32.xlu0 %v1737, 32
        %v3501 = vpop.permute.xlu0 %3500
        %3502 = vrot.lane.b32.xlu0 %v1738, 32
        %v3503 = vpop.permute.xlu0 %3502
        %3504 = vrot.lane.b32.xlu0 %v1739, 32
        %v3505 = vpop.permute.xlu0 %3504
        %3506 = vrot.lane.b32.xlu0 %v1740, 32
        %v3507 = vpop.permute.xlu0 %3506
        %3508 = vrot.lane.b32.xlu0 %v1741, 32
        %v3509 = vpop.permute.xlu0 %3508
        %3510 = vrot.lane.b32.xlu0 %v1742, 32
        %v3511 = vpop.permute.xlu0 %3510
        %3512 = vrot.lane.b32.xlu0 %v1743, 32
        %v3513 = vpop.permute.xlu0 %3512
        %3514 = vrot.lane.b32.xlu0 %v1744, 32
        %v3515 = vpop.permute.xlu0 %3514
        %3516 = vrot.lane.b32.xlu0 %v1745, 32
        %v3517 = vpop.permute.xlu0 %3516
        %3518 = vrot.lane.b32.xlu0 %v1746, 32
        %v3519 = vpop.permute.xlu0 %3518
        %3520 = vrot.lane.b32.xlu0 %v1747, 32
        %v3521 = vpop.permute.xlu0 %3520
        %3522 = vrot.lane.b32.xlu0 %v1748, 32
        %v3523 = vpop.permute.xlu0 %3522
        %3524 = vrot.lane.b32.xlu0 %v1749, 32
        %v3525 = vpop.permute.xlu0 %3524
        %3526 = vrot.lane.b32.xlu0 %v1750, 32
        %v3527 = vpop.permute.xlu0 %3526
        %3528 = vrot.lane.b32.xlu0 %v1751, 32
        %v3529 = vpop.permute.xlu0 %3528
        %3530 = vrot.lane.b32.xlu0 %v1752, 32
        %v3531 = vpop.permute.xlu0 %3530
        %3532 = vrot.lane.b32.xlu0 %v1753, 32
        %v3533 = vpop.permute.xlu0 %3532
        %3534 = vrot.lane.b32.xlu0 %v1754, 32
        %v3535 = vpop.permute.xlu0 %3534
        %3536 = vrot.lane.b32.xlu0 %v1755, 32
        %v3537 = vpop.permute.xlu0 %3536
        %3538 = vrot.lane.b32.xlu0 %v1756, 32
        %v3539 = vpop.permute.xlu0 %3538
        %3540 = vrot.lane.b32.xlu0 %v1757, 32
        %v3541 = vpop.permute.xlu0 %3540
        %3542 = vrot.lane.b32.xlu0 %v1758, 32
        %v3543 = vpop.permute.xlu0 %3542
        %3544 = vrot.lane.b32.xlu0 %v1759, 32
        %v3545 = vpop.permute.xlu0 %3544
        %3546 = vrot.lane.b32.xlu0 %v1760, 32
        %v3547 = vpop.permute.xlu0 %3546
        %3548 = vrot.lane.b32.xlu0 %v1761, 32
        %v3549 = vpop.permute.xlu0 %3548
        %3550 = vrot.lane.b32.xlu0 %v1762, 32
        %v3551 = vpop.permute.xlu0 %3550
        %3552 = vrot.lane.b32.xlu0 %v1763, 32
        %v3553 = vpop.permute.xlu0 %3552
        %3554 = vrot.lane.b32.xlu0 %v1764, 32
        %v3555 = vpop.permute.xlu0 %3554
        %3556 = vrot.lane.b32.xlu0 %v1765, 32
        %v3557 = vpop.permute.xlu0 %3556
        %3558 = vrot.lane.b32.xlu0 %v1766, 32
        %v3559 = vpop.permute.xlu0 %3558
        %3560 = vrot.lane.b32.xlu0 %v1767, 32
        %v3561 = vpop.permute.xlu0 %3560
        %3562 = vrot.lane.b32.xlu0 %v1768, 32
        %v3563 = vpop.permute.xlu0 %3562
        %3564 = vrot.lane.b32.xlu0 %v1769, 32
        %v3565 = vpop.permute.xlu0 %3564
        %3566 = vrot.lane.b32.xlu0 %v1770, 32
        %v3567 = vpop.permute.xlu0 %3566
        %3568 = vrot.lane.b32.xlu0 %v1771, 32
        %v3569 = vpop.permute.xlu0 %3568
        %3570 = vrot.lane.b32.xlu0 %v1772, 32
        %v3571 = vpop.permute.xlu0 %3570
        %3572 = vrot.lane.b32.xlu0 %v1773, 32
        %v3573 = vpop.permute.xlu0 %3572
        %3574 = vrot.lane.b32.xlu0 %v1774, 32
        %v3575 = vpop.permute.xlu0 %3574
        %3576 = vrot.lane.b32.xlu0 %v1775, 32
        %v3577 = vpop.permute.xlu0 %3576
        %3578 = vrot.lane.b32.xlu0 %v1776, 32
        %v3579 = vpop.permute.xlu0 %3578
        %3580 = vrot.lane.b32.xlu0 %v1777, 32
        %v3581 = vpop.permute.xlu0 %3580
        %3582 = vrot.lane.b32.xlu0 %v1778, 32
        %v3583 = vpop.permute.xlu0 %3582
        %3584 = vrot.lane.b32.xlu0 %v1779, 32
        %v3585 = vpop.permute.xlu0 %3584
        %3586 = vrot.lane.b32.xlu0 %v1780, 32
        %v3587 = vpop.permute.xlu0 %3586
        %3588 = vrot.lane.b32.xlu0 %v1781, 32
        %v3589 = vpop.permute.xlu0 %3588
        %3590 = vrot.lane.b32.xlu0 %v1782, 32
        %v3591 = vpop.permute.xlu0 %3590
        %3592 = vrot.lane.b32.xlu0 %v1783, 32
        %v3593 = vpop.permute.xlu0 %3592
        %3594 = vrot.lane.b32.xlu0 %v1784, 32
        %v3595 = vpop.permute.xlu0 %3594
        %3596 = vrot.lane.b32.xlu0 %v1785, 32
        %v3597 = vpop.permute.xlu0 %3596
        %3598 = vrot.lane.b32.xlu0 %v1786, 32
        %v3599 = vpop.permute.xlu0 %3598
        %3600 = vrot.lane.b32.xlu0 %v1787, 32
        %v3601 = vpop.permute.xlu0 %3600
        %3602 = vrot.lane.b32.xlu0 %v1788, 32
        %v3603 = vpop.permute.xlu0 %3602
        %3604 = vrot.lane.b32.xlu0 %v1789, 32
        %v3605 = vpop.permute.xlu0 %3604
        %3606 = vrot.lane.b32.xlu0 %v1790, 32
        %v3607 = vpop.permute.xlu0 %3606
        %3608 = vrot.lane.b32.xlu0 %v1791, 32
        %v3609 = vpop.permute.xlu0 %3608
        %3610 = vrot.lane.b32.xlu0 %v1792, 32
        %v3611 = vpop.permute.xlu0 %3610
        %3612 = vrot.lane.b32.xlu0 %v1793, 32
        %v3613 = vpop.permute.xlu0 %3612
        %3614 = vrot.lane.b32.xlu0 %v1794, 32
        %v3615 = vpop.permute.xlu0 %3614
        %3616 = vrot.lane.b32.xlu0 %v1795, 32
        %v3617 = vpop.permute.xlu0 %3616
        %3618 = vrot.lane.b32.xlu0 %v1796, 32
        %v3619 = vpop.permute.xlu0 %3618
        %3620 = vrot.lane.b32.xlu0 %v1797, 32
        %v3621 = vpop.permute.xlu0 %3620
        %3622 = vrot.lane.b32.xlu0 %v1798, 32
        %v3623 = vpop.permute.xlu0 %3622
        %3624 = vrot.lane.b32.xlu0 %v1799, 32
        %v3625 = vpop.permute.xlu0 %3624
        %3626 = vrot.lane.b32.xlu0 %v1800, 32
        %v3627 = vpop.permute.xlu0 %3626
        %3628 = vrot.lane.b32.xlu0 %v1801, 32
        %v3629 = vpop.permute.xlu0 %3628
        %3630 = vrot.lane.b32.xlu0 %v1802, 32
        %v3631 = vpop.permute.xlu0 %3630
        %3632 = vrot.lane.b32.xlu0 %v1803, 32
        %v3633 = vpop.permute.xlu0 %3632
        %3634 = vrot.lane.b32.xlu0 %v1804, 32
        %v3635 = vpop.permute.xlu0 %3634
        %3636 = vrot.lane.b32.xlu0 %v1805, 32
        %v3637 = vpop.permute.xlu0 %3636
        %3638 = vrot.lane.b32.xlu0 %v1806, 32
        %v3639 = vpop.permute.xlu0 %3638
        %3640 = vrot.lane.b32.xlu0 %v1807, 32
        %v3641 = vpop.permute.xlu0 %3640
        %3642 = vrot.lane.b32.xlu0 %v1808, 32
        %v3643 = vpop.permute.xlu0 %3642
        %3644 = vrot.lane.b32.xlu0 %v1809, 32
        %v3645 = vpop.permute.xlu0 %3644
        %3646 = vrot.lane.b32.xlu0 %v1810, 32
        %v3647 = vpop.permute.xlu0 %3646
        %3648 = vrot.lane.b32.xlu0 %v1811, 32
        %v3649 = vpop.permute.xlu0 %3648
        %3650 = vrot.lane.b32.xlu0 %v1812, 32
        %v3651 = vpop.permute.xlu0 %3650
        %3652 = vrot.lane.b32.xlu0 %v1813, 32
        %v3653 = vpop.permute.xlu0 %3652
        %3654 = vrot.lane.b32.xlu0 %v1814, 32
        %v3655 = vpop.permute.xlu0 %3654
        %3656 = vrot.lane.b32.xlu0 %v1815, 32
        %v3657 = vpop.permute.xlu0 %3656
        %3658 = vrot.lane.b32.xlu0 %v1816, 32
        %v3659 = vpop.permute.xlu0 %3658
        %3660 = vrot.lane.b32.xlu0 %v1817, 32
        %v3661 = vpop.permute.xlu0 %3660
        %3662 = vrot.lane.b32.xlu0 %v1818, 32
        %v3663 = vpop.permute.xlu0 %3662
        %3664 = vrot.lane.b32.xlu0 %v1819, 32
        %v3665 = vpop.permute.xlu0 %3664
        %3666 = vrot.lane.b32.xlu0 %v1820, 32
        %v3667 = vpop.permute.xlu0 %3666
        %3668 = vrot.lane.b32.xlu0 %v1821, 32
        %v3669 = vpop.permute.xlu0 %3668
        %3670 = vrot.lane.b32.xlu0 %v1822, 32
        %v3671 = vpop.permute.xlu0 %3670
        %3672 = vrot.lane.b32.xlu0 %v1823, 32
        %v3673 = vpop.permute.xlu0 %3672
        %3674 = vrot.lane.b32.xlu0 %v1824, 32
        %v3675 = vpop.permute.xlu0 %3674
        %3676 = vrot.lane.b32.xlu0 %v1825, 32
        %v3677 = vpop.permute.xlu0 %3676
        %3678 = vrot.lane.b32.xlu0 %v1826, 32
        %v3679 = vpop.permute.xlu0 %3678
        %3680 = vrot.lane.b32.xlu0 %v1827, 32
        %v3681 = vpop.permute.xlu0 %3680
        %3682 = vrot.lane.b32.xlu0 %v1828, 32
        %v3683 = vpop.permute.xlu0 %3682
        %3684 = vrot.lane.b32.xlu0 %v1829, 32
        %v3685 = vpop.permute.xlu0 %3684
        %3686 = vrot.lane.b32.xlu0 %v1830, 32
        %v3687 = vpop.permute.xlu0 %3686
        %3688 = vrot.lane.b32.xlu0 %v1831, 32
        %v3689 = vpop.permute.xlu0 %3688
        %3690 = vrot.lane.b32.xlu0 %v1832, 32
        %v3691 = vpop.permute.xlu0 %3690
        %3692 = vrot.lane.b32.xlu0 %v1833, 32
        %v3693 = vpop.permute.xlu0 %3692
        %3694 = vrot.lane.b32.xlu0 %v1834, 32
        %v3695 = vpop.permute.xlu0 %3694
        %3696 = vrot.lane.b32.xlu0 %v1835, 32
        %v3697 = vpop.permute.xlu0 %3696
        %3698 = vrot.lane.b32.xlu0 %v1836, 32
        %v3699 = vpop.permute.xlu0 %3698
        %3700 = vrot.lane.b32.xlu0 %v1837, 32
        %v3701 = vpop.permute.xlu0 %3700
        %3702 = vrot.lane.b32.xlu0 %v1838, 32
        %v3703 = vpop.permute.xlu0 %3702
        %3704 = vrot.lane.b32.xlu0 %v1839, 32
        %v3705 = vpop.permute.xlu0 %3704
        %3706 = vrot.lane.b32.xlu0 %v1840, 32
        %v3707 = vpop.permute.xlu0 %3706
        %3708 = vrot.lane.b32.xlu0 %v1841, 32
        %v3709 = vpop.permute.xlu0 %3708
        %3710 = vrot.lane.b32.xlu0 %v1842, 32
        %v3711 = vpop.permute.xlu0 %3710
        %3712 = vrot.lane.b32.xlu0 %v1843, 32
        %v3713 = vpop.permute.xlu0 %3712
        %3714 = vrot.lane.b32.xlu0 %v1844, 32
        %v3715 = vpop.permute.xlu0 %3714
        %3716 = vrot.lane.b32.xlu0 %v1845, 32
        %v3717 = vpop.permute.xlu0 %3716
        %3718 = vrot.lane.b32.xlu0 %v1846, 32
        %v3719 = vpop.permute.xlu0 %3718
        %3720 = vrot.lane.b32.xlu0 %v1847, 32
        %v3721 = vpop.permute.xlu0 %3720
        %3722 = vrot.lane.b32.xlu0 %v1848, 32
        %v3723 = vpop.permute.xlu0 %3722
        %3724 = vrot.lane.b32.xlu0 %v1849, 32
        %v3725 = vpop.permute.xlu0 %3724
        %3726 = vrot.lane.b32.xlu0 %v1850, 32
        %v3727 = vpop.permute.xlu0 %3726
        %3728 = vrot.lane.b32.xlu0 %v1851, 32
        %v3729 = vpop.permute.xlu0 %3728
        %3730 = vrot.lane.b32.xlu0 %v1852, 32
        %v3731 = vpop.permute.xlu0 %3730
        %3732 = vrot.lane.b32.xlu0 %v1853, 32
        %v3733 = vpop.permute.xlu0 %3732
        %3734 = vrot.lane.b32.xlu0 %v1854, 32
        %v3735 = vpop.permute.xlu0 %3734
        %3736 = vrot.lane.b32.xlu0 %v1855, 32
        %v3737 = vpop.permute.xlu0 %3736
        %3738 = vrot.lane.b32.xlu0 %v1856, 32
        %v3739 = vpop.permute.xlu0 %3738
        %3740 = vrot.lane.b32.xlu0 %v1857, 32
        %v3741 = vpop.permute.xlu0 %3740
        %3742 = vrot.lane.b32.xlu0 %v1858, 32
        %v3743 = vpop.permute.xlu0 %3742
        %3744 = vrot.lane.b32.xlu0 %v1859, 32
        %v3745 = vpop.permute.xlu0 %3744
        %3746 = vrot.lane.b32.xlu0 %v1860, 32
        %v3747 = vpop.permute.xlu0 %3746
        %3748 = vrot.lane.b32.xlu0 %v1861, 32
        %v3749 = vpop.permute.xlu0 %3748
        %3750 = vrot.lane.b32.xlu0 %v1862, 32
        %v3751 = vpop.permute.xlu0 %3750
        %3752 = vrot.lane.b32.xlu0 %v1863, 32
        %v3753 = vpop.permute.xlu0 %3752
        %3754 = vrot.lane.b32.xlu0 %v1864, 32
        %v3755 = vpop.permute.xlu0 %3754
        %3756 = vrot.lane.b32.xlu0 %v1865, 32
        %v3757 = vpop.permute.xlu0 %3756
        %3758 = vrot.lane.b32.xlu0 %v1866, 32
        %v3759 = vpop.permute.xlu0 %3758
        %3760 = vrot.lane.b32.xlu0 %v1867, 32
        %v3761 = vpop.permute.xlu0 %3760
        %3762 = vrot.lane.b32.xlu0 %v1868, 32
        %v3763 = vpop.permute.xlu0 %3762
        %3764 = vrot.lane.b32.xlu0 %v1869, 32
        %v3765 = vpop.permute.xlu0 %3764
        %3766 = vrot.lane.b32.xlu0 %v1870, 32
        %v3767 = vpop.permute.xlu0 %3766
        %3768 = vrot.lane.b32.xlu0 %v1871, 32
        %v3769 = vpop.permute.xlu0 %3768
        %3770 = vrot.lane.b32.xlu0 %v1872, 32
        %v3771 = vpop.permute.xlu0 %3770
        %3772 = vrot.lane.b32.xlu0 %v1873, 32
        %v3773 = vpop.permute.xlu0 %3772
        %3774 = vrot.lane.b32.xlu0 %v1874, 32
        %v3775 = vpop.permute.xlu0 %3774
        %3776 = vrot.lane.b32.xlu0 %v1875, 32
        %v3777 = vpop.permute.xlu0 %3776
        %3778 = vrot.lane.b32.xlu0 %v1876, 32
        %v3779 = vpop.permute.xlu0 %3778
        %3780 = vrot.lane.b32.xlu0 %v1877, 32
        %v3781 = vpop.permute.xlu0 %3780
        %3782 = vrot.lane.b32.xlu0 %v1878, 32
        %v3783 = vpop.permute.xlu0 %3782
        %3784 = vrot.lane.b32.xlu0 %v1879, 32
        %v3785 = vpop.permute.xlu0 %3784
        %3786 = vrot.lane.b32.xlu0 %v1880, 32
        %v3787 = vpop.permute.xlu0 %3786
        %3788 = vrot.lane.b32.xlu0 %v1881, 32
        %v3789 = vpop.permute.xlu0 %3788
        %3790 = vrot.lane.b32.xlu0 %v1882, 32
        %v3791 = vpop.permute.xlu0 %3790
        %3792 = vrot.lane.b32.xlu0 %v1883, 32
        %v3793 = vpop.permute.xlu0 %3792
        %3794 = vrot.lane.b32.xlu0 %v1884, 32
        %v3795 = vpop.permute.xlu0 %3794
        %3796 = vrot.lane.b32.xlu0 %v1885, 32
        %v3797 = vpop.permute.xlu0 %3796
        %3798 = vrot.lane.b32.xlu0 %v1886, 32
        %v3799 = vpop.permute.xlu0 %3798
        %3800 = vrot.lane.b32.xlu0 %v1887, 32
        %v3801 = vpop.permute.xlu0 %3800
        %3802 = vrot.lane.b32.xlu0 %v1888, 32
        %v3803 = vpop.permute.xlu0 %3802
        %3804 = vrot.lane.b32.xlu0 %v1889, 32
        %v3805 = vpop.permute.xlu0 %3804
        %3806 = vrot.lane.b32.xlu0 %v1890, 32
        %v3807 = vpop.permute.xlu0 %3806
        %3808 = vrot.lane.b32.xlu0 %v1891, 32
        %v3809 = vpop.permute.xlu0 %3808
        %3810 = vrot.lane.b32.xlu0 %v1892, 32
        %v3811 = vpop.permute.xlu0 %3810
        %3812 = vrot.lane.b32.xlu0 %v1893, 32
        %v3813 = vpop.permute.xlu0 %3812
        %3814 = vrot.lane.b32.xlu0 %v1894, 32
        %v3815 = vpop.permute.xlu0 %3814
        %3816 = vrot.lane.b32.xlu0 %v1895, 32
        %v3817 = vpop.permute.xlu0 %3816
        %3818 = vrot.lane.b32.xlu0 %v1896, 32
        %v3819 = vpop.permute.xlu0 %3818
        %3820 = vrot.lane.b32.xlu0 %v1897, 32
        %v3821 = vpop.permute.xlu0 %3820
        %3822 = vrot.lane.b32.xlu0 %v1898, 32
        %v3823 = vpop.permute.xlu0 %3822
        %3824 = vrot.lane.b32.xlu0 %v1899, 32
        %v3825 = vpop.permute.xlu0 %3824
        %vm3826 = vcmask 261120
        %v3827 = vsel %vm3826, %v2543, %v2545
        %v3828 = vsel %vm3826, %v2545, %v2547
        %v3829 = vsel %vm3826, %v2547, %v2549
        %v3830 = vsel %vm3826, %v2549, %v2551
        %v3831 = vsel %vm3826, %v2551, %v2553
        %v3832 = vsel %vm3826, %v2555, %v2557
        %v3833 = vsel %vm3826, %v2557, %v2559
        %v3834 = vsel %vm3826, %v2559, %v2561
        %v3835 = vsel %vm3826, %v2561, %v2563
        %v3836 = vsel %vm3826, %v2563, %v2565
        %v3837 = vsel %vm3826, %v2567, %v2569
        %v3838 = vsel %vm3826, %v2569, %v2571
        %v3839 = vsel %vm3826, %v2571, %v2573
        %v3840 = vsel %vm3826, %v2573, %v2575
        %v3841 = vsel %vm3826, %v2575, %v2577
        %v3842 = vsel %vm3826, %v2579, %v2581
        %v3843 = vsel %vm3826, %v2581, %v2583
        %v3844 = vsel %vm3826, %v2583, %v2585
        %v3845 = vsel %vm3826, %v2585, %v2587
        %v3846 = vsel %vm3826, %v2587, %v2589
        %v3847 = vsel %vm3826, %v2591, %v2593
        %v3848 = vsel %vm3826, %v2593, %v2595
        %v3849 = vsel %vm3826, %v2595, %v2597
        %v3850 = vsel %vm3826, %v2597, %v2599
        %v3851 = vsel %vm3826, %v2599, %v2601
        %v3852 = vsel %vm3826, %v2603, %v2605
        %v3853 = vsel %vm3826, %v2605, %v2607
        %v3854 = vsel %vm3826, %v2607, %v2609
        %v3855 = vsel %vm3826, %v2609, %v2611
        %v3856 = vsel %vm3826, %v2611, %v2613
        %v3857 = vsel %vm3826, %v2615, %v2617
        %v3858 = vsel %vm3826, %v2617, %v2619
        %v3859 = vsel %vm3826, %v2619, %v2621
        %v3860 = vsel %vm3826, %v2621, %v2623
        %v3861 = vsel %vm3826, %v2623, %v2625
        %v3862 = vsel %vm3826, %v2627, %v2629
        %v3863 = vsel %vm3826, %v2629, %v2631
        %v3864 = vsel %vm3826, %v2631, %v2633
        %v3865 = vsel %vm3826, %v2633, %v2635
        %v3866 = vsel %vm3826, %v2635, %v2637
        %v3867 = vsel %vm3826, %v2639, %v2641
        %v3868 = vsel %vm3826, %v2641, %v2643
        %v3869 = vsel %vm3826, %v2643, %v2645
        %v3870 = vsel %vm3826, %v2645, %v2647
        %v3871 = vsel %vm3826, %v2647, %v2649
        %v3872 = vsel %vm3826, %v2651, %v2653
        %v3873 = vsel %vm3826, %v2653, %v2655
        %v3874 = vsel %vm3826, %v2655, %v2657
        %v3875 = vsel %vm3826, %v2657, %v2659
        %v3876 = vsel %vm3826, %v2659, %v2661
        %v3877 = vsel %vm3826, %v2663, %v2665
        %v3878 = vsel %vm3826, %v2665, %v2667
        %v3879 = vsel %vm3826, %v2667, %v2669
        %v3880 = vsel %vm3826, %v2669, %v2671
        %v3881 = vsel %vm3826, %v2671, %v2673
        %v3882 = vsel %vm3826, %v2675, %v2677
        %v3883 = vsel %vm3826, %v2677, %v2679
        %v3884 = vsel %vm3826, %v2679, %v2681
        %v3885 = vsel %vm3826, %v2681, %v2683
        %v3886 = vsel %vm3826, %v2683, %v2685
        %v3887 = vsel %vm3826, %v2687, %v2689
        %v3888 = vsel %vm3826, %v2689, %v2691
        %v3889 = vsel %vm3826, %v2691, %v2693
        %v3890 = vsel %vm3826, %v2693, %v2695
        %v3891 = vsel %vm3826, %v2695, %v2697
        %v3892 = vsel %vm3826, %v2699, %v2701
        %v3893 = vsel %vm3826, %v2701, %v2703
        %v3894 = vsel %vm3826, %v2703, %v2705
        %v3895 = vsel %vm3826, %v2705, %v2707
        %v3896 = vsel %vm3826, %v2707, %v2709
        %v3897 = vsel %vm3826, %v2711, %v2713
        %v3898 = vsel %vm3826, %v2713, %v2715
        %v3899 = vsel %vm3826, %v2715, %v2717
        %v3900 = vsel %vm3826, %v2717, %v2719
        %v3901 = vsel %vm3826, %v2719, %v2721
        %v3902 = vsel %vm3826, %v2723, %v2725
        %v3903 = vsel %vm3826, %v2725, %v2727
        %v3904 = vsel %vm3826, %v2727, %v2729
        %v3905 = vsel %vm3826, %v2729, %v2731
        %v3906 = vsel %vm3826, %v2731, %v2733
        %v3907 = vsel %vm3826, %v2735, %v2737
        %v3908 = vsel %vm3826, %v2737, %v2739
        %v3909 = vsel %vm3826, %v2739, %v2741
        %v3910 = vsel %vm3826, %v2741, %v2743
        %v3911 = vsel %vm3826, %v2743, %v2745
        %v3912 = vsel %vm3826, %v2747, %v2749
        %v3913 = vsel %vm3826, %v2749, %v2751
        %v3914 = vsel %vm3826, %v2751, %v2753
        %v3915 = vsel %vm3826, %v2753, %v2755
        %v3916 = vsel %vm3826, %v2755, %v2757
        %v3917 = vsel %vm3826, %v2759, %v2761
        %v3918 = vsel %vm3826, %v2761, %v2763
        %v3919 = vsel %vm3826, %v2763, %v2765
        %v3920 = vsel %vm3826, %v2765, %v2767
        %v3921 = vsel %vm3826, %v2767, %v2769
        %v3922 = vsel %vm3826, %v2771, %v2773
        %v3923 = vsel %vm3826, %v2773, %v2775
        %v3924 = vsel %vm3826, %v2775, %v2777
        %v3925 = vsel %vm3826, %v2777, %v2779
        %v3926 = vsel %vm3826, %v2779, %v2781
        %v3927 = vsel %vm3826, %v2783, %v2785
        %v3928 = vsel %vm3826, %v2785, %v2787
        %v3929 = vsel %vm3826, %v2787, %v2789
        %v3930 = vsel %vm3826, %v2789, %v2791
        %v3931 = vsel %vm3826, %v2791, %v2793
        %v3932 = vsel %vm3826, %v2795, %v2797
        %v3933 = vsel %vm3826, %v2797, %v2799
        %v3934 = vsel %vm3826, %v2799, %v2801
        %v3935 = vsel %vm3826, %v2801, %v2803
        %v3936 = vsel %vm3826, %v2803, %v2805
        %v3937 = vsel %vm3826, %v2807, %v2809
        %v3938 = vsel %vm3826, %v2809, %v2811
        %v3939 = vsel %vm3826, %v2811, %v2813
        %v3940 = vsel %vm3826, %v2813, %v2815
        %v3941 = vsel %vm3826, %v2815, %v2817
        %v3942 = vsel %vm3826, %v2819, %v2821
        %v3943 = vsel %vm3826, %v2821, %v2823
        %v3944 = vsel %vm3826, %v2823, %v2825
        %v3945 = vsel %vm3826, %v2825, %v2827
        %v3946 = vsel %vm3826, %v2827, %v2829
        %v3947 = vsel %vm3826, %v2831, %v2833
        %v3948 = vsel %vm3826, %v2833, %v2835
        %v3949 = vsel %vm3826, %v2835, %v2837
        %v3950 = vsel %vm3826, %v2837, %v2839
        %v3951 = vsel %vm3826, %v2839, %v2841
        %v3952 = vsel %vm3826, %v2843, %v2845
        %v3953 = vsel %vm3826, %v2845, %v2847
        %v3954 = vsel %vm3826, %v2847, %v2849
        %v3955 = vsel %vm3826, %v2849, %v2851
        %v3956 = vsel %vm3826, %v2851, %v2853
        %v3957 = vsel %vm3826, %v2855, %v2857
        %v3958 = vsel %vm3826, %v2857, %v2859
        %v3959 = vsel %vm3826, %v2859, %v2861
        %v3960 = vsel %vm3826, %v2861, %v2863
        %v3961 = vsel %vm3826, %v2863, %v2865
        %v3962 = vsel %vm3826, %v2867, %v2869
        %v3963 = vsel %vm3826, %v2869, %v2871
        %v3964 = vsel %vm3826, %v2871, %v2873
        %v3965 = vsel %vm3826, %v2873, %v2875
        %v3966 = vsel %vm3826, %v2875, %v2877
        %v3967 = vsel %vm3826, %v2879, %v2881
        %v3968 = vsel %vm3826, %v2881, %v2883
        %v3969 = vsel %vm3826, %v2883, %v2885
        %v3970 = vsel %vm3826, %v2885, %v2887
        %v3971 = vsel %vm3826, %v2887, %v2889
        %v3972 = vsel %vm3826, %v2891, %v2893
        %v3973 = vsel %vm3826, %v2893, %v2895
        %v3974 = vsel %vm3826, %v2895, %v2897
        %v3975 = vsel %vm3826, %v2897, %v2899
        %v3976 = vsel %vm3826, %v2899, %v2901
        %v3977 = vsel %vm3826, %v2903, %v2905
        %v3978 = vsel %vm3826, %v2905, %v2907
        %v3979 = vsel %vm3826, %v2907, %v2909
        %v3980 = vsel %vm3826, %v2909, %v2911
        %v3981 = vsel %vm3826, %v2911, %v2913
        %v3982 = vsel %vm3826, %v2915, %v2917
        %v3983 = vsel %vm3826, %v2917, %v2919
        %v3984 = vsel %vm3826, %v2919, %v2921
        %v3985 = vsel %vm3826, %v2921, %v2923
        %v3986 = vsel %vm3826, %v2923, %v2925
        %v3987 = vsel %vm3826, %v2927, %v2929
        %v3988 = vsel %vm3826, %v2929, %v2931
        %v3989 = vsel %vm3826, %v2931, %v2933
        %v3990 = vsel %vm3826, %v2933, %v2935
        %v3991 = vsel %vm3826, %v2935, %v2937
        %v3992 = vsel %vm3826, %v2939, %v2941
        %v3993 = vsel %vm3826, %v2941, %v2943
        %v3994 = vsel %vm3826, %v2943, %v2945
        %v3995 = vsel %vm3826, %v2945, %v2947
        %v3996 = vsel %vm3826, %v2947, %v2949
        %v3997 = vsel %vm3826, %v2951, %v2953
        %v3998 = vsel %vm3826, %v2953, %v2955
        %v3999 = vsel %vm3826, %v2955, %v2957
        %v4000 = vsel %vm3826, %v2957, %v2959
        %v4001 = vsel %vm3826, %v2959, %v2961
        %v4002 = vsel %vm3826, %v2963, %v2965
        %v4003 = vsel %vm3826, %v2965, %v2967
        %v4004 = vsel %vm3826, %v2967, %v2969
        %v4005 = vsel %vm3826, %v2969, %v2971
        %v4006 = vsel %vm3826, %v2971, %v2973
        %v4007 = vsel %vm3826, %v2975, %v2977
        %v4008 = vsel %vm3826, %v2977, %v2979
        %v4009 = vsel %vm3826, %v2979, %v2981
        %v4010 = vsel %vm3826, %v2981, %v2983
        %v4011 = vsel %vm3826, %v2983, %v2985
        %v4012 = vsel %vm3826, %v2987, %v2989
        %v4013 = vsel %vm3826, %v2989, %v2991
        %v4014 = vsel %vm3826, %v2991, %v2993
        %v4015 = vsel %vm3826, %v2993, %v2995
        %v4016 = vsel %vm3826, %v2995, %v2997
        %v4017 = vsel %vm3826, %v2999, %v3001
        %v4018 = vsel %vm3826, %v3001, %v3003
        %v4019 = vsel %vm3826, %v3003, %v3005
        %v4020 = vsel %vm3826, %v3005, %v3007
        %v4021 = vsel %vm3826, %v3007, %v3009
        %v4022 = vsel %vm3826, %v3011, %v3013
        %v4023 = vsel %vm3826, %v3013, %v3015
        %v4024 = vsel %vm3826, %v3015, %v3017
        %v4025 = vsel %vm3826, %v3017, %v3019
        %v4026 = vsel %vm3826, %v3019, %v3021
        %v4027 = vsel %vm3826, %v3023, %v3025
        %v4028 = vsel %vm3826, %v3025, %v3027
        %v4029 = vsel %vm3826, %v3027, %v3029
        %v4030 = vsel %vm3826, %v3029, %v3031
        %v4031 = vsel %vm3826, %v3031, %v3033
        %v4032 = vsel %vm3826, %v3035, %v3037
        %v4033 = vsel %vm3826, %v3037, %v3039
        %v4034 = vsel %vm3826, %v3039, %v3041
        %v4035 = vsel %vm3826, %v3041, %v3043
        %v4036 = vsel %vm3826, %v3043, %v3045
        %v4037 = vsel %vm3826, %v3047, %v3049
        %v4038 = vsel %vm3826, %v3049, %v3051
        %v4039 = vsel %vm3826, %v3051, %v3053
        %v4040 = vsel %vm3826, %v3053, %v3055
        %v4041 = vsel %vm3826, %v3055, %v3057
        %v4042 = vsel %vm3826, %v3059, %v3061
        %v4043 = vsel %vm3826, %v3061, %v3063
        %v4044 = vsel %vm3826, %v3063, %v3065
        %v4045 = vsel %vm3826, %v3065, %v3067
        %v4046 = vsel %vm3826, %v3067, %v3069
        %v4047 = vsel %vm3826, %v3071, %v3073
        %v4048 = vsel %vm3826, %v3073, %v3075
        %v4049 = vsel %vm3826, %v3075, %v3077
        %v4050 = vsel %vm3826, %v3077, %v3079
        %v4051 = vsel %vm3826, %v3079, %v3081
        %v4052 = vsel %vm3826, %v3083, %v3085
        %v4053 = vsel %vm3826, %v3085, %v3087
        %v4054 = vsel %vm3826, %v3087, %v3089
        %v4055 = vsel %vm3826, %v3089, %v3091
        %v4056 = vsel %vm3826, %v3091, %v3093
        %v4057 = vsel %vm3826, %v3095, %v3097
        %v4058 = vsel %vm3826, %v3097, %v3099
        %v4059 = vsel %vm3826, %v3099, %v3101
        %v4060 = vsel %vm3826, %v3101, %v3103
        %v4061 = vsel %vm3826, %v3103, %v3105
        %v4062 = vsel %vm3826, %v3107, %v3109
        %v4063 = vsel %vm3826, %v3109, %v3111
        %v4064 = vsel %vm3826, %v3111, %v3113
        %v4065 = vsel %vm3826, %v3113, %v3115
        %v4066 = vsel %vm3826, %v3115, %v3117
        %v4067 = vsel %vm3826, %v3119, %v3121
        %v4068 = vsel %vm3826, %v3121, %v3123
        %v4069 = vsel %vm3826, %v3123, %v3125
        %v4070 = vsel %vm3826, %v3125, %v3127
        %v4071 = vsel %vm3826, %v3127, %v3129
        %v4072 = vsel %vm3826, %v3131, %v3133
        %v4073 = vsel %vm3826, %v3133, %v3135
        %v4074 = vsel %vm3826, %v3135, %v3137
        %v4075 = vsel %vm3826, %v3137, %v3139
        %v4076 = vsel %vm3826, %v3139, %v3141
        %v4077 = vsel %vm3826, %v3143, %v3145
        %v4078 = vsel %vm3826, %v3145, %v3147
        %v4079 = vsel %vm3826, %v3147, %v3149
        %v4080 = vsel %vm3826, %v3149, %v3151
        %v4081 = vsel %vm3826, %v3151, %v3153
        %v4082 = vsel %vm3826, %v3155, %v3157
        %v4083 = vsel %vm3826, %v3157, %v3159
        %v4084 = vsel %vm3826, %v3159, %v3161
        %v4085 = vsel %vm3826, %v3161, %v3163
        %v4086 = vsel %vm3826, %v3163, %v3165
        %v4087 = vsel %vm3826, %v3167, %v3169
        %v4088 = vsel %vm3826, %v3169, %v3171
        %v4089 = vsel %vm3826, %v3171, %v3173
        %v4090 = vsel %vm3826, %v3173, %v3175
        %v4091 = vsel %vm3826, %v3175, %v3177
        %v4092 = vsel %vm3826, %v3179, %v3181
        %v4093 = vsel %vm3826, %v3181, %v3183
        %v4094 = vsel %vm3826, %v3183, %v3185
        %v4095 = vsel %vm3826, %v3185, %v3187
        %v4096 = vsel %vm3826, %v3187, %v3189
        %v4097 = vsel %vm3826, %v3191, %v3193
        %v4098 = vsel %vm3826, %v3193, %v3195
        %v4099 = vsel %vm3826, %v3195, %v3197
        %v4100 = vsel %vm3826, %v3197, %v3199
        %v4101 = vsel %vm3826, %v3199, %v3201
        %v4102 = vsel %vm3826, %v3203, %v3205
        %v4103 = vsel %vm3826, %v3205, %v3207
        %v4104 = vsel %vm3826, %v3207, %v3209
        %v4105 = vsel %vm3826, %v3209, %v3211
        %v4106 = vsel %vm3826, %v3211, %v3213
        %v4107 = vsel %vm3826, %v3215, %v3217
        %v4108 = vsel %vm3826, %v3217, %v3219
        %v4109 = vsel %vm3826, %v3219, %v3221
        %v4110 = vsel %vm3826, %v3221, %v3223
        %v4111 = vsel %vm3826, %v3223, %v3225
        %v4112 = vsel %vm3826, %v3227, %v3229
        %v4113 = vsel %vm3826, %v3229, %v3231
        %v4114 = vsel %vm3826, %v3231, %v3233
        %v4115 = vsel %vm3826, %v3233, %v3235
        %v4116 = vsel %vm3826, %v3235, %v3237
        %v4117 = vsel %vm3826, %v3239, %v3241
        %v4118 = vsel %vm3826, %v3241, %v3243
        %v4119 = vsel %vm3826, %v3243, %v3245
        %v4120 = vsel %vm3826, %v3245, %v3247
        %v4121 = vsel %vm3826, %v3247, %v3249
        %v4122 = vsel %vm3826, %v3251, %v3253
        %v4123 = vsel %vm3826, %v3253, %v3255
        %v4124 = vsel %vm3826, %v3255, %v3257
        %v4125 = vsel %vm3826, %v3257, %v3259
        %v4126 = vsel %vm3826, %v3259, %v3261
        %v4127 = vsel %vm3826, %v3263, %v3265
        %v4128 = vsel %vm3826, %v3265, %v3267
        %v4129 = vsel %vm3826, %v3267, %v3269
        %v4130 = vsel %vm3826, %v3269, %v3271
        %v4131 = vsel %vm3826, %v3271, %v3273
        %v4132 = vsel %vm3826, %v3275, %v3277
        %v4133 = vsel %vm3826, %v3277, %v3279
        %v4134 = vsel %vm3826, %v3279, %v3281
        %v4135 = vsel %vm3826, %v3281, %v3283
        %v4136 = vsel %vm3826, %v3283, %v3285
        %v4137 = vsel %vm3826, %v3287, %v3289
        %v4138 = vsel %vm3826, %v3289, %v3291
        %v4139 = vsel %vm3826, %v3291, %v3293
        %v4140 = vsel %vm3826, %v3293, %v3295
        %v4141 = vsel %vm3826, %v3295, %v3297
        %v4142 = vsel %vm3826, %v3299, %v3301
        %v4143 = vsel %vm3826, %v3301, %v3303
        %v4144 = vsel %vm3826, %v3303, %v3305
        %v4145 = vsel %vm3826, %v3305, %v3307
        %v4146 = vsel %vm3826, %v3307, %v3309
        %v4147 = vsel %vm3826, %v3311, %v3313
        %v4148 = vsel %vm3826, %v3313, %v3315
        %v4149 = vsel %vm3826, %v3315, %v3317
        %v4150 = vsel %vm3826, %v3317, %v3319
        %v4151 = vsel %vm3826, %v3319, %v3321
        %v4152 = vsel %vm3826, %v3323, %v3325
        %v4153 = vsel %vm3826, %v3325, %v3327
        %v4154 = vsel %vm3826, %v3327, %v3329
        %v4155 = vsel %vm3826, %v3329, %v3331
        %v4156 = vsel %vm3826, %v3331, %v3333
        %v4157 = vsel %vm3826, %v3335, %v3337
        %v4158 = vsel %vm3826, %v3337, %v3339
        %v4159 = vsel %vm3826, %v3339, %v3341
        %v4160 = vsel %vm3826, %v3341, %v3343
        %v4161 = vsel %vm3826, %v3343, %v3345
        %v4162 = vsel %vm3826, %v3347, %v3349
        %v4163 = vsel %vm3826, %v3349, %v3351
        %v4164 = vsel %vm3826, %v3351, %v3353
        %v4165 = vsel %vm3826, %v3353, %v3355
        %v4166 = vsel %vm3826, %v3355, %v3357
        %v4167 = vsel %vm3826, %v3359, %v3361
        %v4168 = vsel %vm3826, %v3361, %v3363
        %v4169 = vsel %vm3826, %v3363, %v3365
        %v4170 = vsel %vm3826, %v3365, %v3367
        %v4171 = vsel %vm3826, %v3367, %v3369
        %v4172 = vsel %vm3826, %v3371, %v3373
        %v4173 = vsel %vm3826, %v3373, %v3375
        %v4174 = vsel %vm3826, %v3375, %v3377
        %v4175 = vsel %vm3826, %v3377, %v3379
        %v4176 = vsel %vm3826, %v3379, %v3381
        %v4177 = vsel %vm3826, %v3383, %v3385
        %v4178 = vsel %vm3826, %v3385, %v3387
        %v4179 = vsel %vm3826, %v3387, %v3389
        %v4180 = vsel %vm3826, %v3389, %v3391
        %v4181 = vsel %vm3826, %v3391, %v3393
        %v4182 = vsel %vm3826, %v3395, %v3397
        %v4183 = vsel %vm3826, %v3397, %v3399
        %v4184 = vsel %vm3826, %v3399, %v3401
        %v4185 = vsel %vm3826, %v3401, %v3403
        %v4186 = vsel %vm3826, %v3403, %v3405
        %v4187 = vsel %vm3826, %v3407, %v3409
        %v4188 = vsel %vm3826, %v3409, %v3411
        %v4189 = vsel %vm3826, %v3411, %v3413
        %v4190 = vsel %vm3826, %v3413, %v3415
        %v4191 = vsel %vm3826, %v3415, %v3417
        %v4192 = vsel %vm3826, %v3419, %v3421
        %v4193 = vsel %vm3826, %v3421, %v3423
        %v4194 = vsel %vm3826, %v3423, %v3425
        %v4195 = vsel %vm3826, %v3425, %v3427
        %v4196 = vsel %vm3826, %v3427, %v3429
        %v4197 = vsel %vm3826, %v3431, %v3433
        %v4198 = vsel %vm3826, %v3433, %v3435
        %v4199 = vsel %vm3826, %v3435, %v3437
        %v4200 = vsel %vm3826, %v3437, %v3439
        %v4201 = vsel %vm3826, %v3439, %v3441
        %v4202 = vsel %vm3826, %v3443, %v3445
        %v4203 = vsel %vm3826, %v3445, %v3447
        %v4204 = vsel %vm3826, %v3447, %v3449
        %v4205 = vsel %vm3826, %v3449, %v3451
        %v4206 = vsel %vm3826, %v3451, %v3453
        %v4207 = vsel %vm3826, %v3455, %v3457
        %v4208 = vsel %vm3826, %v3457, %v3459
        %v4209 = vsel %vm3826, %v3459, %v3461
        %v4210 = vsel %vm3826, %v3461, %v3463
        %v4211 = vsel %vm3826, %v3463, %v3465
        %v4212 = vsel %vm3826, %v3467, %v3469
        %v4213 = vsel %vm3826, %v3469, %v3471
        %v4214 = vsel %vm3826, %v3471, %v3473
        %v4215 = vsel %vm3826, %v3473, %v3475
        %v4216 = vsel %vm3826, %v3475, %v3477
        %v4217 = vsel %vm3826, %v3479, %v3481
        %v4218 = vsel %vm3826, %v3481, %v3483
        %v4219 = vsel %vm3826, %v3483, %v3485
        %v4220 = vsel %vm3826, %v3485, %v3487
        %v4221 = vsel %vm3826, %v3487, %v3489
        %v4222 = vsel %vm3826, %v3491, %v3493
        %v4223 = vsel %vm3826, %v3493, %v3495
        %v4224 = vsel %vm3826, %v3495, %v3497
        %v4225 = vsel %vm3826, %v3497, %v3499
        %v4226 = vsel %vm3826, %v3499, %v3501
        %v4227 = vsel %vm3826, %v3503, %v3505
        %v4228 = vsel %vm3826, %v3505, %v3507
        %v4229 = vsel %vm3826, %v3507, %v3509
        %v4230 = vsel %vm3826, %v3509, %v3511
        %v4231 = vsel %vm3826, %v3511, %v3513
        %v4232 = vsel %vm3826, %v3515, %v3517
        %v4233 = vsel %vm3826, %v3517, %v3519
        %v4234 = vsel %vm3826, %v3519, %v3521
        %v4235 = vsel %vm3826, %v3521, %v3523
        %v4236 = vsel %vm3826, %v3523, %v3525
        %v4237 = vsel %vm3826, %v3527, %v3529
        %v4238 = vsel %vm3826, %v3529, %v3531
        %v4239 = vsel %vm3826, %v3531, %v3533
        %v4240 = vsel %vm3826, %v3533, %v3535
        %v4241 = vsel %vm3826, %v3535, %v3537
        %v4242 = vsel %vm3826, %v3539, %v3541
        %v4243 = vsel %vm3826, %v3541, %v3543
        %v4244 = vsel %vm3826, %v3543, %v3545
        %v4245 = vsel %vm3826, %v3545, %v3547
        %v4246 = vsel %vm3826, %v3547, %v3549
        %v4247 = vsel %vm3826, %v3551, %v3553
        %v4248 = vsel %vm3826, %v3553, %v3555
        %v4249 = vsel %vm3826, %v3555, %v3557
        %v4250 = vsel %vm3826, %v3557, %v3559
        %v4251 = vsel %vm3826, %v3559, %v3561
        %v4252 = vsel %vm3826, %v3563, %v3565
        %v4253 = vsel %vm3826, %v3565, %v3567
        %v4254 = vsel %vm3826, %v3567, %v3569
        %v4255 = vsel %vm3826, %v3569, %v3571
        %v4256 = vsel %vm3826, %v3571, %v3573
        %v4257 = vsel %vm3826, %v3575, %v3577
        %v4258 = vsel %vm3826, %v3577, %v3579
        %v4259 = vsel %vm3826, %v3579, %v3581
        %v4260 = vsel %vm3826, %v3581, %v3583
        %v4261 = vsel %vm3826, %v3583, %v3585
        %v4262 = vsel %vm3826, %v3587, %v3589
        %v4263 = vsel %vm3826, %v3589, %v3591
        %v4264 = vsel %vm3826, %v3591, %v3593
        %v4265 = vsel %vm3826, %v3593, %v3595
        %v4266 = vsel %vm3826, %v3595, %v3597
        %v4267 = vsel %vm3826, %v3599, %v3601
        %v4268 = vsel %vm3826, %v3601, %v3603
        %v4269 = vsel %vm3826, %v3603, %v3605
        %v4270 = vsel %vm3826, %v3605, %v3607
        %v4271 = vsel %vm3826, %v3607, %v3609
        %v4272 = vsel %vm3826, %v3611, %v3613
        %v4273 = vsel %vm3826, %v3613, %v3615
        %v4274 = vsel %vm3826, %v3615, %v3617
        %v4275 = vsel %vm3826, %v3617, %v3619
        %v4276 = vsel %vm3826, %v3619, %v3621
        %v4277 = vsel %vm3826, %v3623, %v3625
        %v4278 = vsel %vm3826, %v3625, %v3627
        %v4279 = vsel %vm3826, %v3627, %v3629
        %v4280 = vsel %vm3826, %v3629, %v3631
        %v4281 = vsel %vm3826, %v3631, %v3633
        %v4282 = vsel %vm3826, %v3635, %v3637
        %v4283 = vsel %vm3826, %v3637, %v3639
        %v4284 = vsel %vm3826, %v3639, %v3641
        %v4285 = vsel %vm3826, %v3641, %v3643
        %v4286 = vsel %vm3826, %v3643, %v3645
        %v4287 = vsel %vm3826, %v3647, %v3649
        %v4288 = vsel %vm3826, %v3649, %v3651
        %v4289 = vsel %vm3826, %v3651, %v3653
        %v4290 = vsel %vm3826, %v3653, %v3655
        %v4291 = vsel %vm3826, %v3655, %v3657
        %v4292 = vsel %vm3826, %v3659, %v3661
        %v4293 = vsel %vm3826, %v3661, %v3663
        %v4294 = vsel %vm3826, %v3663, %v3665
        %v4295 = vsel %vm3826, %v3665, %v3667
        %v4296 = vsel %vm3826, %v3667, %v3669
        %v4297 = vsel %vm3826, %v3671, %v3673
        %v4298 = vsel %vm3826, %v3673, %v3675
        %v4299 = vsel %vm3826, %v3675, %v3677
        %v4300 = vsel %vm3826, %v3677, %v3679
        %v4301 = vsel %vm3826, %v3679, %v3681
        %v4302 = vsel %vm3826, %v3683, %v3685
        %v4303 = vsel %vm3826, %v3685, %v3687
        %v4304 = vsel %vm3826, %v3687, %v3689
        %v4305 = vsel %vm3826, %v3689, %v3691
        %v4306 = vsel %vm3826, %v3691, %v3693
        %v4307 = vsel %vm3826, %v3695, %v3697
        %v4308 = vsel %vm3826, %v3697, %v3699
        %v4309 = vsel %vm3826, %v3699, %v3701
        %v4310 = vsel %vm3826, %v3701, %v3703
        %v4311 = vsel %vm3826, %v3703, %v3705
        %v4312 = vsel %vm3826, %v3707, %v3709
        %v4313 = vsel %vm3826, %v3709, %v3711
        %v4314 = vsel %vm3826, %v3711, %v3713
        %v4315 = vsel %vm3826, %v3713, %v3715
        %v4316 = vsel %vm3826, %v3715, %v3717
        %v4317 = vsel %vm3826, %v3719, %v3721
        %v4318 = vsel %vm3826, %v3721, %v3723
        %v4319 = vsel %vm3826, %v3723, %v3725
        %v4320 = vsel %vm3826, %v3725, %v3727
        %v4321 = vsel %vm3826, %v3727, %v3729
        %v4322 = vsel %vm3826, %v3731, %v3733
        %v4323 = vsel %vm3826, %v3733, %v3735
        %v4324 = vsel %vm3826, %v3735, %v3737
        %v4325 = vsel %vm3826, %v3737, %v3739
        %v4326 = vsel %vm3826, %v3739, %v3741
        %v4327 = vsel %vm3826, %v3743, %v3745
        %v4328 = vsel %vm3826, %v3745, %v3747
        %v4329 = vsel %vm3826, %v3747, %v3749
        %v4330 = vsel %vm3826, %v3749, %v3751
        %v4331 = vsel %vm3826, %v3751, %v3753
        %v4332 = vsel %vm3826, %v3755, %v3757
        %v4333 = vsel %vm3826, %v3757, %v3759
        %v4334 = vsel %vm3826, %v3759, %v3761
        %v4335 = vsel %vm3826, %v3761, %v3763
        %v4336 = vsel %vm3826, %v3763, %v3765
        %v4337 = vsel %vm3826, %v3767, %v3769
        %v4338 = vsel %vm3826, %v3769, %v3771
        %v4339 = vsel %vm3826, %v3771, %v3773
        %v4340 = vsel %vm3826, %v3773, %v3775
        %v4341 = vsel %vm3826, %v3775, %v3777
        %v4342 = vsel %vm3826, %v3779, %v3781
        %v4343 = vsel %vm3826, %v3781, %v3783
        %v4344 = vsel %vm3826, %v3783, %v3785
        %v4345 = vsel %vm3826, %v3785, %v3787
        %v4346 = vsel %vm3826, %v3787, %v3789
        %v4347 = vsel %vm3826, %v3791, %v3793
        %v4348 = vsel %vm3826, %v3793, %v3795
        %v4349 = vsel %vm3826, %v3795, %v3797
        %v4350 = vsel %vm3826, %v3797, %v3799
        %v4351 = vsel %vm3826, %v3799, %v3801
        %v4352 = vsel %vm3826, %v3803, %v3805
        %v4353 = vsel %vm3826, %v3805, %v3807
        %v4354 = vsel %vm3826, %v3807, %v3809
        %v4355 = vsel %vm3826, %v3809, %v3811
        %v4356 = vsel %vm3826, %v3811, %v3813
        %v4357 = vsel %vm3826, %v3815, %v3817
        %v4358 = vsel %vm3826, %v3817, %v3819
        %v4359 = vsel %vm3826, %v3819, %v3821
        %v4360 = vsel %vm3826, %v3821, %v3823
        %v4361 = vsel %vm3826, %v3823, %v3825
        %4897 = vst [vmem:[%s157] sm:$0xff] %v3827
        %4898 = vst [vmem:[%s157 + $0x8] sm:$0xff] %v3828
        %4899 = vst [vmem:[%s157 + $0x10] sm:$0xff] %v3829
        %4900 = vst [vmem:[%s157 + $0x18] sm:$0xff] %v3830
        %4901 = vst.msk [vmem:[%s157 + $0x20] sm:$0xff] %vm726, %v3831
        %4902 = vst [vmem:[%s157 + $0x28] sm:$0xff] %v3832
        %4903 = vst [vmem:[%s157 + $0x30] sm:$0xff] %v3833
        %4904 = vst [vmem:[%s157 + $0x38] sm:$0xff] %v3834
        %4905 = vst [vmem:[%s157 + $0x40] sm:$0xff] %v3835
        %4906 = vst.msk [vmem:[%s157 + $0x48] sm:$0xff] %vm726, %v3836
        %4907 = vst [vmem:[%s157 + $0x50] sm:$0xff] %v3837
        %4908 = vst [vmem:[%s157 + $0x58] sm:$0xff] %v3838
        %4909 = vst [vmem:[%s157 + $0x60] sm:$0xff] %v3839
        %4910 = vst [vmem:[%s157 + $0x68] sm:$0xff] %v3840
        %4911 = vst.msk [vmem:[%s157 + $0x70] sm:$0xff] %vm726, %v3841
        %4912 = vst [vmem:[%s157 + $0x78] sm:$0xff] %v3842
        %4913 = vst [vmem:[%s157 + $0x80] sm:$0xff] %v3843
        %4914 = vst [vmem:[%s157 + $0x88] sm:$0xff] %v3844
        %4915 = vst [vmem:[%s157 + $0x90] sm:$0xff] %v3845
        %4916 = vst.msk [vmem:[%s157 + $0x98] sm:$0xff] %vm726, %v3846
        %4917 = vst [vmem:[%s157 + $0xa0] sm:$0xff] %v3847
        %4918 = vst [vmem:[%s157 + $0xa8] sm:$0xff] %v3848
        %4919 = vst [vmem:[%s157 + $0xb0] sm:$0xff] %v3849
        %4920 = vst [vmem:[%s157 + $0xb8] sm:$0xff] %v3850
        %4921 = vst.msk [vmem:[%s157 + $0xc0] sm:$0xff] %vm726, %v3851
        %4922 = vst [vmem:[%s157 + $0xc8] sm:$0xff] %v3852
        %4923 = vst [vmem:[%s157 + $0xd0] sm:$0xff] %v3853
        %4924 = vst [vmem:[%s157 + $0xd8] sm:$0xff] %v3854
        %4925 = vst [vmem:[%s157 + $0xe0] sm:$0xff] %v3855
        %4926 = vst.msk [vmem:[%s157 + $0xe8] sm:$0xff] %vm726, %v3856
        %4927 = vst [vmem:[%s157 + $0xf0] sm:$0xff] %v3857
        %4928 = vst [vmem:[%s157 + $0xf8] sm:$0xff] %v3858
        %4929 = vst [vmem:[%s157 + $0x100] sm:$0xff] %v3859
        %4930 = vst [vmem:[%s157 + $0x108] sm:$0xff] %v3860
        %4931 = vst.msk [vmem:[%s157 + $0x110] sm:$0xff] %vm726, %v3861
        %4932 = vst [vmem:[%s157 + $0x118] sm:$0xff] %v3862
        %4933 = vst [vmem:[%s157 + $0x120] sm:$0xff] %v3863
        %4934 = vst [vmem:[%s157 + $0x128] sm:$0xff] %v3864
        %4935 = vst [vmem:[%s157 + $0x130] sm:$0xff] %v3865
        %4936 = vst.msk [vmem:[%s157 + $0x138] sm:$0xff] %vm726, %v3866
        %4937 = vst [vmem:[%s157 + $0x140] sm:$0xff] %v3867
        %4938 = vst [vmem:[%s157 + $0x148] sm:$0xff] %v3868
        %4939 = vst [vmem:[%s157 + $0x150] sm:$0xff] %v3869
        %4940 = vst [vmem:[%s157 + $0x158] sm:$0xff] %v3870
        %4941 = vst.msk [vmem:[%s157 + $0x160] sm:$0xff] %vm726, %v3871
        %4942 = vst [vmem:[%s157 + $0x168] sm:$0xff] %v3872
        %4943 = vst [vmem:[%s157 + $0x170] sm:$0xff] %v3873
        %4944 = vst [vmem:[%s157 + $0x178] sm:$0xff] %v3874
        %4945 = vst [vmem:[%s157 + $0x180] sm:$0xff] %v3875
        %4946 = vst.msk [vmem:[%s157 + $0x188] sm:$0xff] %vm726, %v3876
        %4947 = vst [vmem:[%s157 + $0x190] sm:$0xff] %v3877
        %4948 = vst [vmem:[%s157 + $0x198] sm:$0xff] %v3878
        %4949 = vst [vmem:[%s157 + $0x1a0] sm:$0xff] %v3879
        %4950 = vst [vmem:[%s157 + $0x1a8] sm:$0xff] %v3880
        %4951 = vst.msk [vmem:[%s157 + $0x1b0] sm:$0xff] %vm726, %v3881
        %4952 = vst [vmem:[%s157 + $0x1b8] sm:$0xff] %v3882
        %4953 = vst [vmem:[%s157 + $0x1c0] sm:$0xff] %v3883
        %4954 = vst [vmem:[%s157 + $0x1c8] sm:$0xff] %v3884
        %4955 = vst [vmem:[%s157 + $0x1d0] sm:$0xff] %v3885
        %4956 = vst.msk [vmem:[%s157 + $0x1d8] sm:$0xff] %vm726, %v3886
        %4957 = vst [vmem:[%s157 + $0x1e0] sm:$0xff] %v3887
        %4958 = vst [vmem:[%s157 + $0x1e8] sm:$0xff] %v3888
        %4959 = vst [vmem:[%s157 + $0x1f0] sm:$0xff] %v3889
        %4960 = vst [vmem:[%s157 + $0x1f8] sm:$0xff] %v3890
        %4961 = vst.msk [vmem:[%s157 + $0x200] sm:$0xff] %vm726, %v3891
        %4962 = vst [vmem:[%s157 + $0x208] sm:$0xff] %v3892
        %4963 = vst [vmem:[%s157 + $0x210] sm:$0xff] %v3893
        %4964 = vst [vmem:[%s157 + $0x218] sm:$0xff] %v3894
        %4965 = vst [vmem:[%s157 + $0x220] sm:$0xff] %v3895
        %4966 = vst.msk [vmem:[%s157 + $0x228] sm:$0xff] %vm726, %v3896
        %4967 = vst [vmem:[%s157 + $0x230] sm:$0xff] %v3897
        %4968 = vst [vmem:[%s157 + $0x238] sm:$0xff] %v3898
        %4969 = vst [vmem:[%s157 + $0x240] sm:$0xff] %v3899
        %4970 = vst [vmem:[%s157 + $0x248] sm:$0xff] %v3900
        %4971 = vst.msk [vmem:[%s157 + $0x250] sm:$0xff] %vm726, %v3901
        %4972 = vst [vmem:[%s157 + $0x258] sm:$0xff] %v3902
        %4973 = vst [vmem:[%s157 + $0x260] sm:$0xff] %v3903
        %4974 = vst [vmem:[%s157 + $0x268] sm:$0xff] %v3904
        %4975 = vst [vmem:[%s157 + $0x270] sm:$0xff] %v3905
        %4976 = vst.msk [vmem:[%s157 + $0x278] sm:$0xff] %vm726, %v3906
        %4977 = vst [vmem:[%s157 + $0x280] sm:$0xff] %v3907
        %4978 = vst [vmem:[%s157 + $0x288] sm:$0xff] %v3908
        %4979 = vst [vmem:[%s157 + $0x290] sm:$0xff] %v3909
        %4980 = vst [vmem:[%s157 + $0x298] sm:$0xff] %v3910
        %4981 = vst.msk [vmem:[%s157 + $0x2a0] sm:$0xff] %vm726, %v3911
        %4982 = vst [vmem:[%s157 + $0x2a8] sm:$0xff] %v3912
        %4983 = vst [vmem:[%s157 + $0x2b0] sm:$0xff] %v3913
        %4984 = vst [vmem:[%s157 + $0x2b8] sm:$0xff] %v3914
        %4985 = vst [vmem:[%s157 + $0x2c0] sm:$0xff] %v3915
        %4986 = vst.msk [vmem:[%s157 + $0x2c8] sm:$0xff] %vm726, %v3916
        %4987 = vst [vmem:[%s157 + $0x2d0] sm:$0xff] %v3917
        %4988 = vst [vmem:[%s157 + $0x2d8] sm:$0xff] %v3918
        %4989 = vst [vmem:[%s157 + $0x2e0] sm:$0xff] %v3919
        %4990 = vst [vmem:[%s157 + $0x2e8] sm:$0xff] %v3920
        %4991 = vst.msk [vmem:[%s157 + $0x2f0] sm:$0xff] %vm726, %v3921
        %4992 = vst [vmem:[%s157 + $0x2f8] sm:$0xff] %v3922
        %4993 = vst [vmem:[%s157 + $0x300] sm:$0xff] %v3923
        %4994 = vst [vmem:[%s157 + $0x308] sm:$0xff] %v3924
        %4995 = vst [vmem:[%s157 + $0x310] sm:$0xff] %v3925
        %4996 = vst.msk [vmem:[%s157 + $0x318] sm:$0xff] %vm726, %v3926
        %4997 = vst [vmem:[%s157 + $0x320] sm:$0xff] %v3927
        %4998 = vst [vmem:[%s157 + $0x328] sm:$0xff] %v3928
        %4999 = vst [vmem:[%s157 + $0x330] sm:$0xff] %v3929
        %5000 = vst [vmem:[%s157 + $0x338] sm:$0xff] %v3930
        %5001 = vst.msk [vmem:[%s157 + $0x340] sm:$0xff] %vm726, %v3931
        %5002 = vst [vmem:[%s157 + $0x348] sm:$0xff] %v3932
        %5003 = vst [vmem:[%s157 + $0x350] sm:$0xff] %v3933
        %5004 = vst [vmem:[%s157 + $0x358] sm:$0xff] %v3934
        %5005 = vst [vmem:[%s157 + $0x360] sm:$0xff] %v3935
        %5006 = vst.msk [vmem:[%s157 + $0x368] sm:$0xff] %vm726, %v3936
        %5007 = vst [vmem:[%s157 + $0x370] sm:$0xff] %v3937
        %5008 = vst [vmem:[%s157 + $0x378] sm:$0xff] %v3938
        %5009 = vst [vmem:[%s157 + $0x380] sm:$0xff] %v3939
        %5010 = vst [vmem:[%s157 + $0x388] sm:$0xff] %v3940
        %5011 = vst.msk [vmem:[%s157 + $0x390] sm:$0xff] %vm726, %v3941
        %5012 = vst [vmem:[%s157 + $0x398] sm:$0xff] %v3942
        %5013 = vst [vmem:[%s157 + $0x3a0] sm:$0xff] %v3943
        %5014 = vst [vmem:[%s157 + $0x3a8] sm:$0xff] %v3944
        %5015 = vst [vmem:[%s157 + $0x3b0] sm:$0xff] %v3945
        %5016 = vst.msk [vmem:[%s157 + $0x3b8] sm:$0xff] %vm726, %v3946
        %5017 = vst [vmem:[%s157 + $0x3c0] sm:$0xff] %v3947
        %5018 = vst [vmem:[%s157 + $0x3c8] sm:$0xff] %v3948
        %5019 = vst [vmem:[%s157 + $0x3d0] sm:$0xff] %v3949
        %5020 = vst [vmem:[%s157 + $0x3d8] sm:$0xff] %v3950
        %5021 = vst.msk [vmem:[%s157 + $0x3e0] sm:$0xff] %vm726, %v3951
        %5022 = vst [vmem:[%s157 + $0x3e8] sm:$0xff] %v3952
        %5023 = vst [vmem:[%s157 + $0x3f0] sm:$0xff] %v3953
        %5024 = vst [vmem:[%s157 + $0x3f8] sm:$0xff] %v3954
        %5025 = vst [vmem:[%s157 + $0x400] sm:$0xff] %v3955
        %5026 = vst.msk [vmem:[%s157 + $0x408] sm:$0xff] %vm726, %v3956
        %5027 = vst [vmem:[%s157 + $0x410] sm:$0xff] %v3957
        %5028 = vst [vmem:[%s157 + $0x418] sm:$0xff] %v3958
        %5029 = vst [vmem:[%s157 + $0x420] sm:$0xff] %v3959
        %5030 = vst [vmem:[%s157 + $0x428] sm:$0xff] %v3960
        %5031 = vst.msk [vmem:[%s157 + $0x430] sm:$0xff] %vm726, %v3961
        %5032 = vst [vmem:[%s157 + $0x438] sm:$0xff] %v3962
        %5033 = vst [vmem:[%s157 + $0x440] sm:$0xff] %v3963
        %5034 = vst [vmem:[%s157 + $0x448] sm:$0xff] %v3964
        %5035 = vst [vmem:[%s157 + $0x450] sm:$0xff] %v3965
        %5036 = vst.msk [vmem:[%s157 + $0x458] sm:$0xff] %vm726, %v3966
        %5037 = vst [vmem:[%s157 + $0x460] sm:$0xff] %v3967
        %5038 = vst [vmem:[%s157 + $0x468] sm:$0xff] %v3968
        %5039 = vst [vmem:[%s157 + $0x470] sm:$0xff] %v3969
        %5040 = vst [vmem:[%s157 + $0x478] sm:$0xff] %v3970
        %5041 = vst.msk [vmem:[%s157 + $0x480] sm:$0xff] %vm726, %v3971
        %5042 = vst [vmem:[%s157 + $0x488] sm:$0xff] %v3972
        %5043 = vst [vmem:[%s157 + $0x490] sm:$0xff] %v3973
        %5044 = vst [vmem:[%s157 + $0x498] sm:$0xff] %v3974
        %5045 = vst [vmem:[%s157 + $0x4a0] sm:$0xff] %v3975
        %5046 = vst.msk [vmem:[%s157 + $0x4a8] sm:$0xff] %vm726, %v3976
        %5047 = vst [vmem:[%s157 + $0x4b0] sm:$0xff] %v3977
        %5048 = vst [vmem:[%s157 + $0x4b8] sm:$0xff] %v3978
        %5049 = vst [vmem:[%s157 + $0x4c0] sm:$0xff] %v3979
        %5050 = vst [vmem:[%s157 + $0x4c8] sm:$0xff] %v3980
        %5051 = vst.msk [vmem:[%s157 + $0x4d0] sm:$0xff] %vm726, %v3981
        %5052 = vst [vmem:[%s157 + $0x4d8] sm:$0xff] %v3982
        %5053 = vst [vmem:[%s157 + $0x4e0] sm:$0xff] %v3983
        %5054 = vst [vmem:[%s157 + $0x4e8] sm:$0xff] %v3984
        %5055 = vst [vmem:[%s157 + $0x4f0] sm:$0xff] %v3985
        %5056 = vst.msk [vmem:[%s157 + $0x4f8] sm:$0xff] %vm726, %v3986
        %5057 = vst [vmem:[%s157 + $0x500] sm:$0xff] %v3987
        %5058 = vst [vmem:[%s157 + $0x508] sm:$0xff] %v3988
        %5059 = vst [vmem:[%s157 + $0x510] sm:$0xff] %v3989
        %5060 = vst [vmem:[%s157 + $0x518] sm:$0xff] %v3990
        %5061 = vst.msk [vmem:[%s157 + $0x520] sm:$0xff] %vm726, %v3991
        %5062 = vst [vmem:[%s157 + $0x528] sm:$0xff] %v3992
        %5063 = vst [vmem:[%s157 + $0x530] sm:$0xff] %v3993
        %5064 = vst [vmem:[%s157 + $0x538] sm:$0xff] %v3994
        %5065 = vst [vmem:[%s157 + $0x540] sm:$0xff] %v3995
        %5066 = vst.msk [vmem:[%s157 + $0x548] sm:$0xff] %vm726, %v3996
        %5067 = vst [vmem:[%s157 + $0x550] sm:$0xff] %v3997
        %5068 = vst [vmem:[%s157 + $0x558] sm:$0xff] %v3998
        %5069 = vst [vmem:[%s157 + $0x560] sm:$0xff] %v3999
        %5070 = vst [vmem:[%s157 + $0x568] sm:$0xff] %v4000
        %5071 = vst.msk [vmem:[%s157 + $0x570] sm:$0xff] %vm726, %v4001
        %5072 = vst [vmem:[%s157 + $0x578] sm:$0xff] %v4002
        %5073 = vst [vmem:[%s157 + $0x580] sm:$0xff] %v4003
        %5074 = vst [vmem:[%s157 + $0x588] sm:$0xff] %v4004
        %5075 = vst [vmem:[%s157 + $0x590] sm:$0xff] %v4005
        %5076 = vst.msk [vmem:[%s157 + $0x598] sm:$0xff] %vm726, %v4006
        %5077 = vst [vmem:[%s157 + $0x5a0] sm:$0xff] %v4007
        %5078 = vst [vmem:[%s157 + $0x5a8] sm:$0xff] %v4008
        %5079 = vst [vmem:[%s157 + $0x5b0] sm:$0xff] %v4009
        %5080 = vst [vmem:[%s157 + $0x5b8] sm:$0xff] %v4010
        %5081 = vst.msk [vmem:[%s157 + $0x5c0] sm:$0xff] %vm726, %v4011
        %5082 = vst [vmem:[%s157 + $0x5c8] sm:$0xff] %v4012
        %5083 = vst [vmem:[%s157 + $0x5d0] sm:$0xff] %v4013
        %5084 = vst [vmem:[%s157 + $0x5d8] sm:$0xff] %v4014
        %5085 = vst [vmem:[%s157 + $0x5e0] sm:$0xff] %v4015
        %5086 = vst.msk [vmem:[%s157 + $0x5e8] sm:$0xff] %vm726, %v4016
        %5087 = vst [vmem:[%s157 + $0x5f0] sm:$0xff] %v4017
        %5088 = vst [vmem:[%s157 + $0x5f8] sm:$0xff] %v4018
        %5089 = vst [vmem:[%s157 + $0x600] sm:$0xff] %v4019
        %5090 = vst [vmem:[%s157 + $0x608] sm:$0xff] %v4020
        %5091 = vst.msk [vmem:[%s157 + $0x610] sm:$0xff] %vm726, %v4021
        %5092 = vst [vmem:[%s157 + $0x618] sm:$0xff] %v4022
        %5093 = vst [vmem:[%s157 + $0x620] sm:$0xff] %v4023
        %5094 = vst [vmem:[%s157 + $0x628] sm:$0xff] %v4024
        %5095 = vst [vmem:[%s157 + $0x630] sm:$0xff] %v4025
        %5096 = vst.msk [vmem:[%s157 + $0x638] sm:$0xff] %vm726, %v4026
        %5097 = vst [vmem:[%s157 + $0x640] sm:$0xff] %v4027
        %5098 = vst [vmem:[%s157 + $0x648] sm:$0xff] %v4028
        %5099 = vst [vmem:[%s157 + $0x650] sm:$0xff] %v4029
        %5100 = vst [vmem:[%s157 + $0x658] sm:$0xff] %v4030
        %5101 = vst.msk [vmem:[%s157 + $0x660] sm:$0xff] %vm726, %v4031
        %5102 = vst [vmem:[%s157 + $0x668] sm:$0xff] %v4032
        %5103 = vst [vmem:[%s157 + $0x670] sm:$0xff] %v4033
        %5104 = vst [vmem:[%s157 + $0x678] sm:$0xff] %v4034
        %5105 = vst [vmem:[%s157 + $0x680] sm:$0xff] %v4035
        %5106 = vst.msk [vmem:[%s157 + $0x688] sm:$0xff] %vm726, %v4036
        %5107 = vst [vmem:[%s157 + $0x690] sm:$0xff] %v4037
        %5108 = vst [vmem:[%s157 + $0x698] sm:$0xff] %v4038
        %5109 = vst [vmem:[%s157 + $0x6a0] sm:$0xff] %v4039
        %5110 = vst [vmem:[%s157 + $0x6a8] sm:$0xff] %v4040
        %5111 = vst.msk [vmem:[%s157 + $0x6b0] sm:$0xff] %vm726, %v4041
        %5112 = vst [vmem:[%s157 + $0x6b8] sm:$0xff] %v4042
        %5113 = vst [vmem:[%s157 + $0x6c0] sm:$0xff] %v4043
        %5114 = vst [vmem:[%s157 + $0x6c8] sm:$0xff] %v4044
        %5115 = vst [vmem:[%s157 + $0x6d0] sm:$0xff] %v4045
        %5116 = vst.msk [vmem:[%s157 + $0x6d8] sm:$0xff] %vm726, %v4046
        %5117 = vst [vmem:[%s157 + $0x6e0] sm:$0xff] %v4047
        %5118 = vst [vmem:[%s157 + $0x6e8] sm:$0xff] %v4048
        %5119 = vst [vmem:[%s157 + $0x6f0] sm:$0xff] %v4049
        %5120 = vst [vmem:[%s157 + $0x6f8] sm:$0xff] %v4050
        %5121 = vst.msk [vmem:[%s157 + $0x700] sm:$0xff] %vm726, %v4051
        %5122 = vst [vmem:[%s157 + $0x708] sm:$0xff] %v4052
        %5123 = vst [vmem:[%s157 + $0x710] sm:$0xff] %v4053
        %5124 = vst [vmem:[%s157 + $0x718] sm:$0xff] %v4054
        %5125 = vst [vmem:[%s157 + $0x720] sm:$0xff] %v4055
        %5126 = vst.msk [vmem:[%s157 + $0x728] sm:$0xff] %vm726, %v4056
        %5127 = vst [vmem:[%s157 + $0x730] sm:$0xff] %v4057
        %5128 = vst [vmem:[%s157 + $0x738] sm:$0xff] %v4058
        %5129 = vst [vmem:[%s157 + $0x740] sm:$0xff] %v4059
        %5130 = vst [vmem:[%s157 + $0x748] sm:$0xff] %v4060
        %5131 = vst.msk [vmem:[%s157 + $0x750] sm:$0xff] %vm726, %v4061
        %5132 = vst [vmem:[%s157 + $0x758] sm:$0xff] %v4062
        %5133 = vst [vmem:[%s157 + $0x760] sm:$0xff] %v4063
        %5134 = vst [vmem:[%s157 + $0x768] sm:$0xff] %v4064
        %5135 = vst [vmem:[%s157 + $0x770] sm:$0xff] %v4065
        %5136 = vst.msk [vmem:[%s157 + $0x778] sm:$0xff] %vm726, %v4066
        %5137 = vst [vmem:[%s157 + $0x780] sm:$0xff] %v4067
        %5138 = vst [vmem:[%s157 + $0x788] sm:$0xff] %v4068
        %5139 = vst [vmem:[%s157 + $0x790] sm:$0xff] %v4069
        %5140 = vst [vmem:[%s157 + $0x798] sm:$0xff] %v4070
        %5141 = vst.msk [vmem:[%s157 + $0x7a0] sm:$0xff] %vm726, %v4071
        %5142 = vst [vmem:[%s157 + $0x7a8] sm:$0xff] %v4072
        %5143 = vst [vmem:[%s157 + $0x7b0] sm:$0xff] %v4073
        %5144 = vst [vmem:[%s157 + $0x7b8] sm:$0xff] %v4074
        %5145 = vst [vmem:[%s157 + $0x7c0] sm:$0xff] %v4075
        %5146 = vst.msk [vmem:[%s157 + $0x7c8] sm:$0xff] %vm726, %v4076
        %5147 = vst [vmem:[%s157 + $0x7d0] sm:$0xff] %v4077
        %5148 = vst [vmem:[%s157 + $0x7d8] sm:$0xff] %v4078
        %5149 = vst [vmem:[%s157 + $0x7e0] sm:$0xff] %v4079
        %5150 = vst [vmem:[%s157 + $0x7e8] sm:$0xff] %v4080
        %5151 = vst.msk [vmem:[%s157 + $0x7f0] sm:$0xff] %vm726, %v4081
        %5152 = vst [vmem:[%s157 + $0x7f8] sm:$0xff] %v4082
        %5153 = vst [vmem:[%s157 + $0x800] sm:$0xff] %v4083
        %5154 = vst [vmem:[%s157 + $0x808] sm:$0xff] %v4084
        %5155 = vst [vmem:[%s157 + $0x810] sm:$0xff] %v4085
        %5156 = vst.msk [vmem:[%s157 + $0x818] sm:$0xff] %vm726, %v4086
        %5157 = vst [vmem:[%s157 + $0x820] sm:$0xff] %v4087
        %5158 = vst [vmem:[%s157 + $0x828] sm:$0xff] %v4088
        %5159 = vst [vmem:[%s157 + $0x830] sm:$0xff] %v4089
        %5160 = vst [vmem:[%s157 + $0x838] sm:$0xff] %v4090
        %5161 = vst.msk [vmem:[%s157 + $0x840] sm:$0xff] %vm726, %v4091
        %5162 = vst [vmem:[%s157 + $0x848] sm:$0xff] %v4092
        %5163 = vst [vmem:[%s157 + $0x850] sm:$0xff] %v4093
        %5164 = vst [vmem:[%s157 + $0x858] sm:$0xff] %v4094
        %5165 = vst [vmem:[%s157 + $0x860] sm:$0xff] %v4095
        %5166 = vst.msk [vmem:[%s157 + $0x868] sm:$0xff] %vm726, %v4096
        %5167 = vst [vmem:[%s157 + $0x870] sm:$0xff] %v4097
        %5168 = vst [vmem:[%s157 + $0x878] sm:$0xff] %v4098
        %5169 = vst [vmem:[%s157 + $0x880] sm:$0xff] %v4099
        %5170 = vst [vmem:[%s157 + $0x888] sm:$0xff] %v4100
        %5171 = vst.msk [vmem:[%s157 + $0x890] sm:$0xff] %vm726, %v4101
        %5172 = vst [vmem:[%s157 + $0x898] sm:$0xff] %v4102
        %5173 = vst [vmem:[%s157 + $0x8a0] sm:$0xff] %v4103
        %5174 = vst [vmem:[%s157 + $0x8a8] sm:$0xff] %v4104
        %5175 = vst [vmem:[%s157 + $0x8b0] sm:$0xff] %v4105
        %5176 = vst.msk [vmem:[%s157 + $0x8b8] sm:$0xff] %vm726, %v4106
        %5177 = vst [vmem:[%s157 + $0x8c0] sm:$0xff] %v4107
        %5178 = vst [vmem:[%s157 + $0x8c8] sm:$0xff] %v4108
        %5179 = vst [vmem:[%s157 + $0x8d0] sm:$0xff] %v4109
        %5180 = vst [vmem:[%s157 + $0x8d8] sm:$0xff] %v4110
        %5181 = vst.msk [vmem:[%s157 + $0x8e0] sm:$0xff] %vm726, %v4111
        %5182 = vst [vmem:[%s157 + $0x8e8] sm:$0xff] %v4112
        %5183 = vst [vmem:[%s157 + $0x8f0] sm:$0xff] %v4113
        %5184 = vst [vmem:[%s157 + $0x8f8] sm:$0xff] %v4114
        %5185 = vst [vmem:[%s157 + $0x900] sm:$0xff] %v4115
        %5186 = vst.msk [vmem:[%s157 + $0x908] sm:$0xff] %vm726, %v4116
        %5187 = vst [vmem:[%s157 + $0x910] sm:$0xff] %v4117
        %5188 = vst [vmem:[%s157 + $0x918] sm:$0xff] %v4118
        %5189 = vst [vmem:[%s157 + $0x920] sm:$0xff] %v4119
        %5190 = vst [vmem:[%s157 + $0x928] sm:$0xff] %v4120
        %5191 = vst.msk [vmem:[%s157 + $0x930] sm:$0xff] %vm726, %v4121
        %5192 = vst [vmem:[%s157 + $0x938] sm:$0xff] %v4122
        %5193 = vst [vmem:[%s157 + $0x940] sm:$0xff] %v4123
        %5194 = vst [vmem:[%s157 + $0x948] sm:$0xff] %v4124
        %5195 = vst [vmem:[%s157 + $0x950] sm:$0xff] %v4125
        %5196 = vst.msk [vmem:[%s157 + $0x958] sm:$0xff] %vm726, %v4126
        %5197 = vst [vmem:[%s157 + $0x960] sm:$0xff] %v4127
        %5198 = vst [vmem:[%s157 + $0x968] sm:$0xff] %v4128
        %5199 = vst [vmem:[%s157 + $0x970] sm:$0xff] %v4129
        %5200 = vst [vmem:[%s157 + $0x978] sm:$0xff] %v4130
        %5201 = vst.msk [vmem:[%s157 + $0x980] sm:$0xff] %vm726, %v4131
        %5202 = vst [vmem:[%s157 + $0x988] sm:$0xff] %v4132
        %5203 = vst [vmem:[%s157 + $0x990] sm:$0xff] %v4133
        %5204 = vst [vmem:[%s157 + $0x998] sm:$0xff] %v4134
        %5205 = vst [vmem:[%s157 + $0x9a0] sm:$0xff] %v4135
        %5206 = vst.msk [vmem:[%s157 + $0x9a8] sm:$0xff] %vm726, %v4136
        %5207 = vst [vmem:[%s157 + $0x9b0] sm:$0xff] %v4137
        %5208 = vst [vmem:[%s157 + $0x9b8] sm:$0xff] %v4138
        %5209 = vst [vmem:[%s157 + $0x9c0] sm:$0xff] %v4139
        %5210 = vst [vmem:[%s157 + $0x9c8] sm:$0xff] %v4140
        %5211 = vst.msk [vmem:[%s157 + $0x9d0] sm:$0xff] %vm726, %v4141
        %5212 = vst [vmem:[%s157 + $0x9d8] sm:$0xff] %v4142
        %5213 = vst [vmem:[%s157 + $0x9e0] sm:$0xff] %v4143
        %5214 = vst [vmem:[%s157 + $0x9e8] sm:$0xff] %v4144
        %5215 = vst [vmem:[%s157 + $0x9f0] sm:$0xff] %v4145
        %5216 = vst.msk [vmem:[%s157 + $0x9f8] sm:$0xff] %vm726, %v4146
        %5217 = vst [vmem:[%s157 + $0xa00] sm:$0xff] %v4147
        %5218 = vst [vmem:[%s157 + $0xa08] sm:$0xff] %v4148
        %5219 = vst [vmem:[%s157 + $0xa10] sm:$0xff] %v4149
        %5220 = vst [vmem:[%s157 + $0xa18] sm:$0xff] %v4150
        %5221 = vst.msk [vmem:[%s157 + $0xa20] sm:$0xff] %vm726, %v4151
        %5222 = vst [vmem:[%s157 + $0xa28] sm:$0xff] %v4152
        %5223 = vst [vmem:[%s157 + $0xa30] sm:$0xff] %v4153
        %5224 = vst [vmem:[%s157 + $0xa38] sm:$0xff] %v4154
        %5225 = vst [vmem:[%s157 + $0xa40] sm:$0xff] %v4155
        %5226 = vst.msk [vmem:[%s157 + $0xa48] sm:$0xff] %vm726, %v4156
        %5227 = vst [vmem:[%s157 + $0xa50] sm:$0xff] %v4157
        %5228 = vst [vmem:[%s157 + $0xa58] sm:$0xff] %v4158
        %5229 = vst [vmem:[%s157 + $0xa60] sm:$0xff] %v4159
        %5230 = vst [vmem:[%s157 + $0xa68] sm:$0xff] %v4160
        %5231 = vst.msk [vmem:[%s157 + $0xa70] sm:$0xff] %vm726, %v4161
        %5232 = vst [vmem:[%s157 + $0xa78] sm:$0xff] %v4162
        %5233 = vst [vmem:[%s157 + $0xa80] sm:$0xff] %v4163
        %5234 = vst [vmem:[%s157 + $0xa88] sm:$0xff] %v4164
        %5235 = vst [vmem:[%s157 + $0xa90] sm:$0xff] %v4165
        %5236 = vst.msk [vmem:[%s157 + $0xa98] sm:$0xff] %vm726, %v4166
        %5237 = vst [vmem:[%s157 + $0xaa0] sm:$0xff] %v4167
        %5238 = vst [vmem:[%s157 + $0xaa8] sm:$0xff] %v4168
        %5239 = vst [vmem:[%s157 + $0xab0] sm:$0xff] %v4169
        %5240 = vst [vmem:[%s157 + $0xab8] sm:$0xff] %v4170
        %5241 = vst.msk [vmem:[%s157 + $0xac0] sm:$0xff] %vm726, %v4171
        %5242 = vst [vmem:[%s157 + $0xac8] sm:$0xff] %v4172
        %5243 = vst [vmem:[%s157 + $0xad0] sm:$0xff] %v4173
        %5244 = vst [vmem:[%s157 + $0xad8] sm:$0xff] %v4174
        %5245 = vst [vmem:[%s157 + $0xae0] sm:$0xff] %v4175
        %5246 = vst.msk [vmem:[%s157 + $0xae8] sm:$0xff] %vm726, %v4176
        %5247 = vst [vmem:[%s157 + $0xaf0] sm:$0xff] %v4177
        %5248 = vst [vmem:[%s157 + $0xaf8] sm:$0xff] %v4178
        %5249 = vst [vmem:[%s157 + $0xb00] sm:$0xff] %v4179
        %5250 = vst [vmem:[%s157 + $0xb08] sm:$0xff] %v4180
        %5251 = vst.msk [vmem:[%s157 + $0xb10] sm:$0xff] %vm726, %v4181
        %5252 = vst [vmem:[%s157 + $0xb18] sm:$0xff] %v4182
        %5253 = vst [vmem:[%s157 + $0xb20] sm:$0xff] %v4183
        %5254 = vst [vmem:[%s157 + $0xb28] sm:$0xff] %v4184
        %5255 = vst [vmem:[%s157 + $0xb30] sm:$0xff] %v4185
        %5256 = vst.msk [vmem:[%s157 + $0xb38] sm:$0xff] %vm726, %v4186
        %5257 = vst [vmem:[%s157 + $0xb40] sm:$0xff] %v4187
        %5258 = vst [vmem:[%s157 + $0xb48] sm:$0xff] %v4188
        %5259 = vst [vmem:[%s157 + $0xb50] sm:$0xff] %v4189
        %5260 = vst [vmem:[%s157 + $0xb58] sm:$0xff] %v4190
        %5261 = vst.msk [vmem:[%s157 + $0xb60] sm:$0xff] %vm726, %v4191
        %5262 = vst [vmem:[%s157 + $0xb68] sm:$0xff] %v4192
        %5263 = vst [vmem:[%s157 + $0xb70] sm:$0xff] %v4193
        %5264 = vst [vmem:[%s157 + $0xb78] sm:$0xff] %v4194
        %5265 = vst [vmem:[%s157 + $0xb80] sm:$0xff] %v4195
        %5266 = vst.msk [vmem:[%s157 + $0xb88] sm:$0xff] %vm726, %v4196
        %5267 = vst [vmem:[%s157 + $0xb90] sm:$0xff] %v4197
        %5268 = vst [vmem:[%s157 + $0xb98] sm:$0xff] %v4198
        %5269 = vst [vmem:[%s157 + $0xba0] sm:$0xff] %v4199
        %5270 = vst [vmem:[%s157 + $0xba8] sm:$0xff] %v4200
        %5271 = vst.msk [vmem:[%s157 + $0xbb0] sm:$0xff] %vm726, %v4201
        %5272 = vst [vmem:[%s157 + $0xbb8] sm:$0xff] %v4202
        %5273 = vst [vmem:[%s157 + $0xbc0] sm:$0xff] %v4203
        %5274 = vst [vmem:[%s157 + $0xbc8] sm:$0xff] %v4204
        %5275 = vst [vmem:[%s157 + $0xbd0] sm:$0xff] %v4205
        %5276 = vst.msk [vmem:[%s157 + $0xbd8] sm:$0xff] %vm726, %v4206
        %5277 = vst [vmem:[%s157 + $0xbe0] sm:$0xff] %v4207
        %5278 = vst [vmem:[%s157 + $0xbe8] sm:$0xff] %v4208
        %5279 = vst [vmem:[%s157 + $0xbf0] sm:$0xff] %v4209
        %5280 = vst [vmem:[%s157 + $0xbf8] sm:$0xff] %v4210
        %5281 = vst.msk [vmem:[%s157 + $0xc00] sm:$0xff] %vm726, %v4211
        %5282 = vst [vmem:[%s157 + $0xc08] sm:$0xff] %v4212
        %5283 = vst [vmem:[%s157 + $0xc10] sm:$0xff] %v4213
        %5284 = vst [vmem:[%s157 + $0xc18] sm:$0xff] %v4214
        %5285 = vst [vmem:[%s157 + $0xc20] sm:$0xff] %v4215
        %5286 = vst.msk [vmem:[%s157 + $0xc28] sm:$0xff] %vm726, %v4216
        %5287 = vst [vmem:[%s157 + $0xc30] sm:$0xff] %v4217
        %5288 = vst [vmem:[%s157 + $0xc38] sm:$0xff] %v4218
        %5289 = vst [vmem:[%s157 + $0xc40] sm:$0xff] %v4219
        %5290 = vst [vmem:[%s157 + $0xc48] sm:$0xff] %v4220
        %5291 = vst.msk [vmem:[%s157 + $0xc50] sm:$0xff] %vm726, %v4221
        %5292 = vst [vmem:[%s157 + $0xc58] sm:$0xff] %v4222
        %5293 = vst [vmem:[%s157 + $0xc60] sm:$0xff] %v4223
        %5294 = vst [vmem:[%s157 + $0xc68] sm:$0xff] %v4224
        %5295 = vst [vmem:[%s157 + $0xc70] sm:$0xff] %v4225
        %5296 = vst.msk [vmem:[%s157 + $0xc78] sm:$0xff] %vm726, %v4226
        %5297 = vst [vmem:[%s157 + $0xc80] sm:$0xff] %v4227
        %5298 = vst [vmem:[%s157 + $0xc88] sm:$0xff] %v4228
        %5299 = vst [vmem:[%s157 + $0xc90] sm:$0xff] %v4229
        %5300 = vst [vmem:[%s157 + $0xc98] sm:$0xff] %v4230
        %5301 = vst.msk [vmem:[%s157 + $0xca0] sm:$0xff] %vm726, %v4231
        %5302 = vst [vmem:[%s157 + $0xca8] sm:$0xff] %v4232
        %5303 = vst [vmem:[%s157 + $0xcb0] sm:$0xff] %v4233
        %5304 = vst [vmem:[%s157 + $0xcb8] sm:$0xff] %v4234
        %5305 = vst [vmem:[%s157 + $0xcc0] sm:$0xff] %v4235
        %5306 = vst.msk [vmem:[%s157 + $0xcc8] sm:$0xff] %vm726, %v4236
        %5307 = vst [vmem:[%s157 + $0xcd0] sm:$0xff] %v4237
        %5308 = vst [vmem:[%s157 + $0xcd8] sm:$0xff] %v4238
        %5309 = vst [vmem:[%s157 + $0xce0] sm:$0xff] %v4239
        %5310 = vst [vmem:[%s157 + $0xce8] sm:$0xff] %v4240
        %5311 = vst.msk [vmem:[%s157 + $0xcf0] sm:$0xff] %vm726, %v4241
        %5312 = vst [vmem:[%s157 + $0xcf8] sm:$0xff] %v4242
        %5313 = vst [vmem:[%s157 + $0xd00] sm:$0xff] %v4243
        %5314 = vst [vmem:[%s157 + $0xd08] sm:$0xff] %v4244
        %5315 = vst [vmem:[%s157 + $0xd10] sm:$0xff] %v4245
        %5316 = vst.msk [vmem:[%s157 + $0xd18] sm:$0xff] %vm726, %v4246
        %5317 = vst [vmem:[%s157 + $0xd20] sm:$0xff] %v4247
        %5318 = vst [vmem:[%s157 + $0xd28] sm:$0xff] %v4248
        %5319 = vst [vmem:[%s157 + $0xd30] sm:$0xff] %v4249
        %5320 = vst [vmem:[%s157 + $0xd38] sm:$0xff] %v4250
        %5321 = vst.msk [vmem:[%s157 + $0xd40] sm:$0xff] %vm726, %v4251
        %5322 = vst [vmem:[%s157 + $0xd48] sm:$0xff] %v4252
        %5323 = vst [vmem:[%s157 + $0xd50] sm:$0xff] %v4253
        %5324 = vst [vmem:[%s157 + $0xd58] sm:$0xff] %v4254
        %5325 = vst [vmem:[%s157 + $0xd60] sm:$0xff] %v4255
        %5326 = vst.msk [vmem:[%s157 + $0xd68] sm:$0xff] %vm726, %v4256
        %5327 = vst [vmem:[%s157 + $0xd70] sm:$0xff] %v4257
        %5328 = vst [vmem:[%s157 + $0xd78] sm:$0xff] %v4258
        %5329 = vst [vmem:[%s157 + $0xd80] sm:$0xff] %v4259
        %5330 = vst [vmem:[%s157 + $0xd88] sm:$0xff] %v4260
        %5331 = vst.msk [vmem:[%s157 + $0xd90] sm:$0xff] %vm726, %v4261
        %5332 = vst [vmem:[%s157 + $0xd98] sm:$0xff] %v4262
        %5333 = vst [vmem:[%s157 + $0xda0] sm:$0xff] %v4263
        %5334 = vst [vmem:[%s157 + $0xda8] sm:$0xff] %v4264
        %5335 = vst [vmem:[%s157 + $0xdb0] sm:$0xff] %v4265
        %5336 = vst.msk [vmem:[%s157 + $0xdb8] sm:$0xff] %vm726, %v4266
        %5337 = vst [vmem:[%s157 + $0xdc0] sm:$0xff] %v4267
        %5338 = vst [vmem:[%s157 + $0xdc8] sm:$0xff] %v4268
        %5339 = vst [vmem:[%s157 + $0xdd0] sm:$0xff] %v4269
        %5340 = vst [vmem:[%s157 + $0xdd8] sm:$0xff] %v4270
        %5341 = vst.msk [vmem:[%s157 + $0xde0] sm:$0xff] %vm726, %v4271
        %5342 = vst [vmem:[%s157 + $0xde8] sm:$0xff] %v4272
        %5343 = vst [vmem:[%s157 + $0xdf0] sm:$0xff] %v4273
        %5344 = vst [vmem:[%s157 + $0xdf8] sm:$0xff] %v4274
        %5345 = vst [vmem:[%s157 + $0xe00] sm:$0xff] %v4275
        %5346 = vst.msk [vmem:[%s157 + $0xe08] sm:$0xff] %vm726, %v4276
        %5347 = vst [vmem:[%s157 + $0xe10] sm:$0xff] %v4277
        %5348 = vst [vmem:[%s157 + $0xe18] sm:$0xff] %v4278
        %5349 = vst [vmem:[%s157 + $0xe20] sm:$0xff] %v4279
        %5350 = vst [vmem:[%s157 + $0xe28] sm:$0xff] %v4280
        %5351 = vst.msk [vmem:[%s157 + $0xe30] sm:$0xff] %vm726, %v4281
        %5352 = vst [vmem:[%s157 + $0xe38] sm:$0xff] %v4282
        %5353 = vst [vmem:[%s157 + $0xe40] sm:$0xff] %v4283
        %5354 = vst [vmem:[%s157 + $0xe48] sm:$0xff] %v4284
        %5355 = vst [vmem:[%s157 + $0xe50] sm:$0xff] %v4285
        %5356 = vst.msk [vmem:[%s157 + $0xe58] sm:$0xff] %vm726, %v4286
        %5357 = vst [vmem:[%s157 + $0xe60] sm:$0xff] %v4287
        %5358 = vst [vmem:[%s157 + $0xe68] sm:$0xff] %v4288
        %5359 = vst [vmem:[%s157 + $0xe70] sm:$0xff] %v4289
        %5360 = vst [vmem:[%s157 + $0xe78] sm:$0xff] %v4290
        %5361 = vst.msk [vmem:[%s157 + $0xe80] sm:$0xff] %vm726, %v4291
        %5362 = vst [vmem:[%s157 + $0xe88] sm:$0xff] %v4292
        %5363 = vst [vmem:[%s157 + $0xe90] sm:$0xff] %v4293
        %5364 = vst [vmem:[%s157 + $0xe98] sm:$0xff] %v4294
        %5365 = vst [vmem:[%s157 + $0xea0] sm:$0xff] %v4295
        %5366 = vst.msk [vmem:[%s157 + $0xea8] sm:$0xff] %vm726, %v4296
        %5367 = vst [vmem:[%s157 + $0xeb0] sm:$0xff] %v4297
        %5368 = vst [vmem:[%s157 + $0xeb8] sm:$0xff] %v4298
        %5369 = vst [vmem:[%s157 + $0xec0] sm:$0xff] %v4299
        %5370 = vst [vmem:[%s157 + $0xec8] sm:$0xff] %v4300
        %5371 = vst.msk [vmem:[%s157 + $0xed0] sm:$0xff] %vm726, %v4301
        %5372 = vst [vmem:[%s157 + $0xed8] sm:$0xff] %v4302
        %5373 = vst [vmem:[%s157 + $0xee0] sm:$0xff] %v4303
        %5374 = vst [vmem:[%s157 + $0xee8] sm:$0xff] %v4304
        %5375 = vst [vmem:[%s157 + $0xef0] sm:$0xff] %v4305
        %5376 = vst.msk [vmem:[%s157 + $0xef8] sm:$0xff] %vm726, %v4306
        %5377 = vst [vmem:[%s157 + $0xf00] sm:$0xff] %v4307
        %5378 = vst [vmem:[%s157 + $0xf08] sm:$0xff] %v4308
        %5379 = vst [vmem:[%s157 + $0xf10] sm:$0xff] %v4309
        %5380 = vst [vmem:[%s157 + $0xf18] sm:$0xff] %v4310
        %5381 = vst.msk [vmem:[%s157 + $0xf20] sm:$0xff] %vm726, %v4311
        %5382 = vst [vmem:[%s157 + $0xf28] sm:$0xff] %v4312
        %5383 = vst [vmem:[%s157 + $0xf30] sm:$0xff] %v4313
        %5384 = vst [vmem:[%s157 + $0xf38] sm:$0xff] %v4314
        %5385 = vst [vmem:[%s157 + $0xf40] sm:$0xff] %v4315
        %5386 = vst.msk [vmem:[%s157 + $0xf48] sm:$0xff] %vm726, %v4316
        %5387 = vst [vmem:[%s157 + $0xf50] sm:$0xff] %v4317
        %5388 = vst [vmem:[%s157 + $0xf58] sm:$0xff] %v4318
        %5389 = vst [vmem:[%s157 + $0xf60] sm:$0xff] %v4319
        %5390 = vst [vmem:[%s157 + $0xf68] sm:$0xff] %v4320
        %5391 = vst.msk [vmem:[%s157 + $0xf70] sm:$0xff] %vm726, %v4321
        %5392 = vst [vmem:[%s157 + $0xf78] sm:$0xff] %v4322
        %5393 = vst [vmem:[%s157 + $0xf80] sm:$0xff] %v4323
        %5394 = vst [vmem:[%s157 + $0xf88] sm:$0xff] %v4324
        %5395 = vst [vmem:[%s157 + $0xf90] sm:$0xff] %v4325
        %5396 = vst.msk [vmem:[%s157 + $0xf98] sm:$0xff] %vm726, %v4326
        %5397 = vst [vmem:[%s157 + $0xfa0] sm:$0xff] %v4327
        %5398 = vst [vmem:[%s157 + $0xfa8] sm:$0xff] %v4328
        %5399 = vst [vmem:[%s157 + $0xfb0] sm:$0xff] %v4329
        %5400 = vst [vmem:[%s157 + $0xfb8] sm:$0xff] %v4330
        %5401 = vst.msk [vmem:[%s157 + $0xfc0] sm:$0xff] %vm726, %v4331
        %5402 = vst [vmem:[%s157 + $0xfc8] sm:$0xff] %v4332
        %5403 = vst [vmem:[%s157 + $0xfd0] sm:$0xff] %v4333
        %5404 = vst [vmem:[%s157 + $0xfd8] sm:$0xff] %v4334
        %5405 = vst [vmem:[%s157 + $0xfe0] sm:$0xff] %v4335
        %5406 = vst.msk [vmem:[%s157 + $0xfe8] sm:$0xff] %vm726, %v4336
        %5407 = vst [vmem:[%s157 + $0xff0] sm:$0xff] %v4337
        %5408 = vst [vmem:[%s157 + $0xff8] sm:$0xff] %v4338
        %5409 = vst [vmem:[%s157 + $0x1000] sm:$0xff] %v4339
        %5410 = vst [vmem:[%s157 + $0x1008] sm:$0xff] %v4340
        %5411 = vst.msk [vmem:[%s157 + $0x1010] sm:$0xff] %vm726, %v4341
        %5412 = vst [vmem:[%s157 + $0x1018] sm:$0xff] %v4342
        %5413 = vst [vmem:[%s157 + $0x1020] sm:$0xff] %v4343
        %5414 = vst [vmem:[%s157 + $0x1028] sm:$0xff] %v4344
        %5415 = vst [vmem:[%s157 + $0x1030] sm:$0xff] %v4345
        %5416 = vst.msk [vmem:[%s157 + $0x1038] sm:$0xff] %vm726, %v4346
        %5417 = vst [vmem:[%s157 + $0x1040] sm:$0xff] %v4347
        %5418 = vst [vmem:[%s157 + $0x1048] sm:$0xff] %v4348
        %5419 = vst [vmem:[%s157 + $0x1050] sm:$0xff] %v4349
        %5420 = vst [vmem:[%s157 + $0x1058] sm:$0xff] %v4350
        %5421 = vst.msk [vmem:[%s157 + $0x1060] sm:$0xff] %vm726, %v4351
        %5422 = vst [vmem:[%s157 + $0x1068] sm:$0xff] %v4352
        %5423 = vst [vmem:[%s157 + $0x1070] sm:$0xff] %v4353
        %5424 = vst [vmem:[%s157 + $0x1078] sm:$0xff] %v4354
        %5425 = vst [vmem:[%s157 + $0x1080] sm:$0xff] %v4355
        %5426 = vst.msk [vmem:[%s157 + $0x1088] sm:$0xff] %vm726, %v4356
        %5427 = vst [vmem:[%s157 + $0x1090] sm:$0xff] %v4357
        %5428 = vst [vmem:[%s157 + $0x1098] sm:$0xff] %v4358
        %5429 = vst [vmem:[%s157 + $0x10a0] sm:$0xff] %v4359
        %5430 = vst [vmem:[%s157 + $0x10a8] sm:$0xff] %v4360
        %5431 = vst.msk [vmem:[%s157 + $0x10b0] sm:$0xff] %vm726, %v4361
        %s5432 = sand.u32 %s48, 1
        %s5433 = sand.u32 %s48, 1
        %s5434 = smul.addr %s5433, 4280
        %s5435 = scalar_lea.vmem [#allocation2], %s5434
        %s5436 = sand.u32 %s74, 1
        %s5437 = sand.u32 %s74, 1
        %s5438 = smul.addr %s5437, 4280
        %s5439 = scalar_lea.vmem [#allocation3], %s5438
        // Predicated region
        $region25: #{tpu_custom_call.1} parent=23 // pred_check
          %p5440 = pneg %p58
        $region26: #{tpu_custom_call.1} parent=23 // pred_check_branch
          %5442 = sbr.rel (%p5440) target = $region28
        $region27: #{tpu_custom_call.1} parent=23 // pred_region
          %s5443 = smul.u32 107, %s14
          %s5444 = ssub.s32 128, %s5443
          %p5445 = scmp.lt.s32.totalorder %s5444, 107
          %s5446 = scalar_select %p5445, %s5444, 107
          %s5447 = smul.u32 128, %s5446
          %s5448 = smul.u32 %s5447, 5
          %p5449 = scmp.ne.s32.totalorder 0, %s5448
          %s5450 = smul.addr %s5443, 5
          %s5451 = smul.addr %s5450, 8
          %s5452 = scalar_lea.vmem %s1, %s5451
          // Predicated region
          $region29: #{tpu_custom_call.1} parent=27 // pred_check
            %p5453 = pneg %p5449
          $region30: #{tpu_custom_call.1} parent=27 // pred_check_branch
            %5455 = sbr.rel (%p5453) target = $region32
          $region31: #{tpu_custom_call.1} parent=27 // pred_region
            // Predicated region
            $region33: #{tpu_custom_call.1} parent=31 // pred_check
              _
            $region34: #{tpu_custom_call.1} parent=31 // pred_check_branch
              %5457 = sbr.rel (0) target = $region36
            $region35: #{tpu_custom_call.1} parent=31 // pred_region
              %s5458 = sdiv.u32.pop %s5446, 13
              %s5459 = srem.u32.pop %s5446, 13
              // While loop
              $region37: #{tpu_custom_call.1} parent=35 // loop_pre_header
                _
              $region38: #{tpu_custom_call.1} parent=35 // loop_header
                %s5461 = sphi 0, %s5463
                %p5462 = scmp.ge.s32.totalorder %s5461, %s5458
                %s5466 = sphi 0, %s5601
                %s5467 = sphi %s5435, %s5604
                %s5468 = sphi %s5452, %s5605
              $region39: #{tpu_custom_call.1} parent=35 // loop_header_branch
                %5465 = sbr.rel (%p5462) target = $region43
              $region40: #{tpu_custom_call.1} parent=35 // loop_body
                %v5469 = vld [vmem:[%s5467] sm:$0xff]
                %5470 = vst [vmem:[%s5468] sm:$0xff] %v5469
                %v5471 = vld [vmem:[%s5467 + $0x28] sm:$0xff]
                %5472 = vst [vmem:[%s5468 + $0x28] sm:$0xff] %v5471
                %v5473 = vld [vmem:[%s5467 + $0x50] sm:$0xff]
                %5474 = vst [vmem:[%s5468 + $0x50] sm:$0xff] %v5473
                %v5475 = vld [vmem:[%s5467 + $0x78] sm:$0xff]
                %5476 = vst [vmem:[%s5468 + $0x78] sm:$0xff] %v5475
                %v5477 = vld [vmem:[%s5467 + $0xa0] sm:$0xff]
                %5478 = vst [vmem:[%s5468 + $0xa0] sm:$0xff] %v5477
                %v5479 = vld [vmem:[%s5467 + $0xc8] sm:$0xff]
                %5480 = vst [vmem:[%s5468 + $0xc8] sm:$0xff] %v5479
                %v5481 = vld [vmem:[%s5467 + $0xf0] sm:$0xff]
                %5482 = vst [vmem:[%s5468 + $0xf0] sm:$0xff] %v5481
                %v5483 = vld [vmem:[%s5467 + $0x118] sm:$0xff]
                %5484 = vst [vmem:[%s5468 + $0x118] sm:$0xff] %v5483
                %v5485 = vld [vmem:[%s5467 + $0x140] sm:$0xff]
                %5486 = vst [vmem:[%s5468 + $0x140] sm:$0xff] %v5485
                %v5487 = vld [vmem:[%s5467 + $0x168] sm:$0xff]
                %5488 = vst [vmem:[%s5468 + $0x168] sm:$0xff] %v5487
                %v5489 = vld [vmem:[%s5467 + $0x190] sm:$0xff]
                %5490 = vst [vmem:[%s5468 + $0x190] sm:$0xff] %v5489
                %v5491 = vld [vmem:[%s5467 + $0x1b8] sm:$0xff]
                %5492 = vst [vmem:[%s5468 + $0x1b8] sm:$0xff] %v5491
                %v5493 = vld [vmem:[%s5467 + $0x1e0] sm:$0xff]
                %5494 = vst [vmem:[%s5468 + $0x1e0] sm:$0xff] %v5493
                %v5495 = vld [vmem:[%s5467 + $0x8] sm:$0xff]
                %5496 = vst [vmem:[%s5468 + $0x8] sm:$0xff] %v5495
                %v5497 = vld [vmem:[%s5467 + $0x30] sm:$0xff]
                %5498 = vst [vmem:[%s5468 + $0x30] sm:$0xff] %v5497
                %v5499 = vld [vmem:[%s5467 + $0x58] sm:$0xff]
                %5500 = vst [vmem:[%s5468 + $0x58] sm:$0xff] %v5499
                %v5501 = vld [vmem:[%s5467 + $0x80] sm:$0xff]
                %5502 = vst [vmem:[%s5468 + $0x80] sm:$0xff] %v5501
                %v5503 = vld [vmem:[%s5467 + $0xa8] sm:$0xff]
                %5504 = vst [vmem:[%s5468 + $0xa8] sm:$0xff] %v5503
                %v5505 = vld [vmem:[%s5467 + $0xd0] sm:$0xff]
                %5506 = vst [vmem:[%s5468 + $0xd0] sm:$0xff] %v5505
                %v5507 = vld [vmem:[%s5467 + $0xf8] sm:$0xff]
                %5508 = vst [vmem:[%s5468 + $0xf8] sm:$0xff] %v5507
                %v5509 = vld [vmem:[%s5467 + $0x120] sm:$0xff]
                %5510 = vst [vmem:[%s5468 + $0x120] sm:$0xff] %v5509
                %v5511 = vld [vmem:[%s5467 + $0x148] sm:$0xff]
                %5512 = vst [vmem:[%s5468 + $0x148] sm:$0xff] %v5511
                %v5513 = vld [vmem:[%s5467 + $0x170] sm:$0xff]
                %5514 = vst [vmem:[%s5468 + $0x170] sm:$0xff] %v5513
                %v5515 = vld [vmem:[%s5467 + $0x198] sm:$0xff]
                %5516 = vst [vmem:[%s5468 + $0x198] sm:$0xff] %v5515
                %v5517 = vld [vmem:[%s5467 + $0x1c0] sm:$0xff]
                %5518 = vst [vmem:[%s5468 + $0x1c0] sm:$0xff] %v5517
                %v5519 = vld [vmem:[%s5467 + $0x1e8] sm:$0xff]
                %5520 = vst [vmem:[%s5468 + $0x1e8] sm:$0xff] %v5519
                %v5521 = vld [vmem:[%s5467 + $0x10] sm:$0xff]
                %5522 = vst [vmem:[%s5468 + $0x10] sm:$0xff] %v5521
                %v5523 = vld [vmem:[%s5467 + $0x38] sm:$0xff]
                %5524 = vst [vmem:[%s5468 + $0x38] sm:$0xff] %v5523
                %v5525 = vld [vmem:[%s5467 + $0x60] sm:$0xff]
                %5526 = vst [vmem:[%s5468 + $0x60] sm:$0xff] %v5525
                %v5527 = vld [vmem:[%s5467 + $0x88] sm:$0xff]
                %5528 = vst [vmem:[%s5468 + $0x88] sm:$0xff] %v5527
                %v5529 = vld [vmem:[%s5467 + $0xb0] sm:$0xff]
                %5530 = vst [vmem:[%s5468 + $0xb0] sm:$0xff] %v5529
                %v5531 = vld [vmem:[%s5467 + $0xd8] sm:$0xff]
                %5532 = vst [vmem:[%s5468 + $0xd8] sm:$0xff] %v5531
                %v5533 = vld [vmem:[%s5467 + $0x100] sm:$0xff]
                %5534 = vst [vmem:[%s5468 + $0x100] sm:$0xff] %v5533
                %v5535 = vld [vmem:[%s5467 + $0x128] sm:$0xff]
                %5536 = vst [vmem:[%s5468 + $0x128] sm:$0xff] %v5535
                %v5537 = vld [vmem:[%s5467 + $0x150] sm:$0xff]
                %5538 = vst [vmem:[%s5468 + $0x150] sm:$0xff] %v5537
                %v5539 = vld [vmem:[%s5467 + $0x178] sm:$0xff]
                %5540 = vst [vmem:[%s5468 + $0x178] sm:$0xff] %v5539
                %v5541 = vld [vmem:[%s5467 + $0x1a0] sm:$0xff]
                %5542 = vst [vmem:[%s5468 + $0x1a0] sm:$0xff] %v5541
                %v5543 = vld [vmem:[%s5467 + $0x1c8] sm:$0xff]
                %5544 = vst [vmem:[%s5468 + $0x1c8] sm:$0xff] %v5543
                %v5545 = vld [vmem:[%s5467 + $0x1f0] sm:$0xff]
                %5546 = vst [vmem:[%s5468 + $0x1f0] sm:$0xff] %v5545
                %v5547 = vld [vmem:[%s5467 + $0x18] sm:$0xff]
                %5548 = vst [vmem:[%s5468 + $0x18] sm:$0xff] %v5547
                %v5549 = vld [vmem:[%s5467 + $0x40] sm:$0xff]
                %5550 = vst [vmem:[%s5468 + $0x40] sm:$0xff] %v5549
                %v5551 = vld [vmem:[%s5467 + $0x68] sm:$0xff]
                %5552 = vst [vmem:[%s5468 + $0x68] sm:$0xff] %v5551
                %v5553 = vld [vmem:[%s5467 + $0x90] sm:$0xff]
                %5554 = vst [vmem:[%s5468 + $0x90] sm:$0xff] %v5553
                %v5555 = vld [vmem:[%s5467 + $0xb8] sm:$0xff]
                %5556 = vst [vmem:[%s5468 + $0xb8] sm:$0xff] %v5555
                %v5557 = vld [vmem:[%s5467 + $0xe0] sm:$0xff]
                %5558 = vst [vmem:[%s5468 + $0xe0] sm:$0xff] %v5557
                %v5559 = vld [vmem:[%s5467 + $0x108] sm:$0xff]
                %5560 = vst [vmem:[%s5468 + $0x108] sm:$0xff] %v5559
                %v5561 = vld [vmem:[%s5467 + $0x130] sm:$0xff]
                %5562 = vst [vmem:[%s5468 + $0x130] sm:$0xff] %v5561
                %v5563 = vld [vmem:[%s5467 + $0x158] sm:$0xff]
                %5564 = vst [vmem:[%s5468 + $0x158] sm:$0xff] %v5563
                %v5565 = vld [vmem:[%s5467 + $0x180] sm:$0xff]
                %5566 = vst [vmem:[%s5468 + $0x180] sm:$0xff] %v5565
                %v5567 = vld [vmem:[%s5467 + $0x1a8] sm:$0xff]
                %5568 = vst [vmem:[%s5468 + $0x1a8] sm:$0xff] %v5567
                %v5569 = vld [vmem:[%s5467 + $0x1d0] sm:$0xff]
                %5570 = vst [vmem:[%s5468 + $0x1d0] sm:$0xff] %v5569
                %v5571 = vld [vmem:[%s5467 + $0x1f8] sm:$0xff]
                %5572 = vst [vmem:[%s5468 + $0x1f8] sm:$0xff] %v5571
                %v5573 = vld [vmem:[%s5467 + $0x20] sm:$0xff]
                %5574 = vst [vmem:[%s5468 + $0x20] sm:$0xff] %v5573
                %v5575 = vld [vmem:[%s5467 + $0x48] sm:$0xff]
                %5576 = vst [vmem:[%s5468 + $0x48] sm:$0xff] %v5575
                %v5577 = vld [vmem:[%s5467 + $0x70] sm:$0xff]
                %5578 = vst [vmem:[%s5468 + $0x70] sm:$0xff] %v5577
                %v5579 = vld [vmem:[%s5467 + $0x98] sm:$0xff]
                %5580 = vst [vmem:[%s5468 + $0x98] sm:$0xff] %v5579
                %v5581 = vld [vmem:[%s5467 + $0xc0] sm:$0xff]
                %5582 = vst [vmem:[%s5468 + $0xc0] sm:$0xff] %v5581
                %v5583 = vld [vmem:[%s5467 + $0xe8] sm:$0xff]
                %5584 = vst [vmem:[%s5468 + $0xe8] sm:$0xff] %v5583
                %v5585 = vld [vmem:[%s5467 + $0x110] sm:$0xff]
                %5586 = vst [vmem:[%s5468 + $0x110] sm:$0xff] %v5585
                %v5587 = vld [vmem:[%s5467 + $0x138] sm:$0xff]
                %5588 = vst [vmem:[%s5468 + $0x138] sm:$0xff] %v5587
                %v5589 = vld [vmem:[%s5467 + $0x160] sm:$0xff]
                %5590 = vst [vmem:[%s5468 + $0x160] sm:$0xff] %v5589
                %v5591 = vld [vmem:[%s5467 + $0x188] sm:$0xff]
                %5592 = vst [vmem:[%s5468 + $0x188] sm:$0xff] %v5591
                %v5593 = vld [vmem:[%s5467 + $0x1b0] sm:$0xff]
                %5594 = vst [vmem:[%s5468 + $0x1b0] sm:$0xff] %v5593
                %v5595 = vld [vmem:[%s5467 + $0x1d8] sm:$0xff]
                %5596 = vst [vmem:[%s5468 + $0x1d8] sm:$0xff] %v5595
                %v5597 = vld [vmem:[%s5467 + $0x200] sm:$0xff]
                %5598 = vst [vmem:[%s5468 + $0x200] sm:$0xff] %v5597
                %s5599 = sadd.s32 1, %s5466
                %p5600 = scmp.ge.s32.totalorder %s5599, %s5458
                %s5601 = scalar_select %p5600, 0, %s5599
                %s5602 = smul.u32 %s5601, 520
                %s5603 = smul.u32 %s5601, 520
                %s5604 = scalar_lea.vmem %s5435, %s5602 [#allocation2]
                %s5605 = scalar_lea.vmem %s5452, %s5603
              $region41: #{tpu_custom_call.1} parent=35 // loop_footer
                %s5463 = sadd.s32 %s5461, 1
              $region42: #{tpu_custom_call.1} parent=35 // loop_footer_branch
                %5460 = sbr.rel target = $region38
              $region43: #{tpu_custom_call.1} parent=35 // loop_exit
                _
              %s5606 = sdiv.u32.pop %s5446, 13
              %s5607 = srem.u32.pop %s5446, 13
              %s5608 = smul.u32 %s5606, 13
              %s5609 = smul.u32 40, %s5608
              %s5610 = scalar_lea.vmem %s5435, %s5609 [#allocation2]
              %s5611 = smul.u32 40, %s5608
              %s5612 = scalar_lea.vmem %s5452, %s5611
              // While loop
              $region44: #{tpu_custom_call.1} parent=35 // loop_pre_header
                _
              $region45: #{tpu_custom_call.1} parent=35 // loop_header
                %s5614 = sphi 0, %s5616
                %p5615 = scmp.ge.s32.totalorder %s5614, %s5607
                %s5619 = sphi 0, %s5634
                %s5620 = sphi %s5610, %s5637
                %s5621 = sphi %s5612, %s5638
              $region46: #{tpu_custom_call.1} parent=35 // loop_header_branch
                %5618 = sbr.rel (%p5615) target = $region50
              $region47: #{tpu_custom_call.1} parent=35 // loop_body
                %v5622 = vld [vmem:[%s5620] sm:$0xff]
                %5623 = vst [vmem:[%s5621] sm:$0xff] %v5622
                %v5624 = vld [vmem:[%s5620 + $0x8] sm:$0xff]
                %5625 = vst [vmem:[%s5621 + $0x8] sm:$0xff] %v5624
                %v5626 = vld [vmem:[%s5620 + $0x10] sm:$0xff]
                %5627 = vst [vmem:[%s5621 + $0x10] sm:$0xff] %v5626
                %v5628 = vld [vmem:[%s5620 + $0x18] sm:$0xff]
                %5629 = vst [vmem:[%s5621 + $0x18] sm:$0xff] %v5628
                %v5630 = vld [vmem:[%s5620 + $0x20] sm:$0xff]
                %5631 = vst [vmem:[%s5621 + $0x20] sm:$0xff] %v5630
                %s5632 = sadd.s32 1, %s5619
                %p5633 = scmp.ge.s32.totalorder %s5632, %s5607
                %s5634 = scalar_select %p5633, 0, %s5632
                %s5635 = smul.u32 %s5634, 40
                %s5636 = smul.u32 %s5634, 40
                %s5637 = scalar_lea.vmem %s5610, %s5635 [#allocation2]
                %s5638 = scalar_lea.vmem %s5612, %s5636
              $region48: #{tpu_custom_call.1} parent=35 // loop_footer
                %s5616 = sadd.s32 %s5614, 1
              $region49: #{tpu_custom_call.1} parent=35 // loop_footer_branch
                %5613 = sbr.rel target = $region45
              $region50: #{tpu_custom_call.1} parent=35 // loop_exit
                _
            $region36: #{tpu_custom_call.1} parent=31 // pred_fallthru
              _
            // Predicated region
            $region51: #{tpu_custom_call.1} parent=31 // pred_check
              _
            $region52: #{tpu_custom_call.1} parent=31 // pred_check_branch
              %5640 = sbr.rel target = $region54
            $region53: #{tpu_custom_call.1} parent=31 // pred_region
              _
            $region54: #{tpu_custom_call.1} parent=31 // pred_fallthru
              _
          $region32: #{tpu_custom_call.1} parent=27 // pred_fallthru
            _
          %5641 = vnop
        $region28: #{tpu_custom_call.1} parent=23 // pred_fallthru
          _
        // Predicated region
        $region55: #{tpu_custom_call.1} parent=23 // pred_check
          %p5642 = pneg %p84
        $region56: #{tpu_custom_call.1} parent=23 // pred_check_branch
          %5644 = sbr.rel (%p5642) target = $region58
        $region57: #{tpu_custom_call.1} parent=23 // pred_region
          %s5645 = smul.u32 107, %s14
          %s5646 = ssub.s32 128, %s5645
          %p5647 = scmp.lt.s32.totalorder %s5646, 107
          %s5648 = scalar_select %p5647, %s5646, 107
          %s5649 = smul.u32 128, %s5648
          %s5650 = smul.u32 %s5649, 5
          %p5651 = scmp.ne.s32.totalorder 0, %s5650
          %s5652 = smul.addr %s5645, 5
          %s5653 = smul.addr %s5652, 8
          %s5654 = scalar_lea.vmem %s2, %s5653
          // Predicated region
          $region59: #{tpu_custom_call.1} parent=57 // pred_check
            %p5655 = pneg %p5651
          $region60: #{tpu_custom_call.1} parent=57 // pred_check_branch
            %5657 = sbr.rel (%p5655) target = $region62
          $region61: #{tpu_custom_call.1} parent=57 // pred_region
            // Predicated region
            $region63: #{tpu_custom_call.1} parent=61 // pred_check
              _
            $region64: #{tpu_custom_call.1} parent=61 // pred_check_branch
              %5659 = sbr.rel (0) target = $region66
            $region65: #{tpu_custom_call.1} parent=61 // pred_region
              %s5660 = sdiv.u32.pop %s5648, 13
              %s5661 = srem.u32.pop %s5648, 13
              // While loop
              $region67: #{tpu_custom_call.1} parent=65 // loop_pre_header
                _
              $region68: #{tpu_custom_call.1} parent=65 // loop_header
                %s5663 = sphi 0, %s5665
                %p5664 = scmp.ge.s32.totalorder %s5663, %s5660
                %s5668 = sphi 0, %s5803
                %s5669 = sphi %s5439, %s5806
                %s5670 = sphi %s5654, %s5807
              $region69: #{tpu_custom_call.1} parent=65 // loop_header_branch
                %5667 = sbr.rel (%p5664) target = $region73
              $region70: #{tpu_custom_call.1} parent=65 // loop_body
                %v5671 = vld [vmem:[%s5669] sm:$0xff]
                %5672 = vst [vmem:[%s5670] sm:$0xff] %v5671
                %v5673 = vld [vmem:[%s5669 + $0x28] sm:$0xff]
                %5674 = vst [vmem:[%s5670 + $0x28] sm:$0xff] %v5673
                %v5675 = vld [vmem:[%s5669 + $0x50] sm:$0xff]
                %5676 = vst [vmem:[%s5670 + $0x50] sm:$0xff] %v5675
                %v5677 = vld [vmem:[%s5669 + $0x78] sm:$0xff]
                %5678 = vst [vmem:[%s5670 + $0x78] sm:$0xff] %v5677
                %v5679 = vld [vmem:[%s5669 + $0xa0] sm:$0xff]
                %5680 = vst [vmem:[%s5670 + $0xa0] sm:$0xff] %v5679
                %v5681 = vld [vmem:[%s5669 + $0xc8] sm:$0xff]
                %5682 = vst [vmem:[%s5670 + $0xc8] sm:$0xff] %v5681
                %v5683 = vld [vmem:[%s5669 + $0xf0] sm:$0xff]
                %5684 = vst [vmem:[%s5670 + $0xf0] sm:$0xff] %v5683
                %v5685 = vld [vmem:[%s5669 + $0x118] sm:$0xff]
                %5686 = vst [vmem:[%s5670 + $0x118] sm:$0xff] %v5685
                %v5687 = vld [vmem:[%s5669 + $0x140] sm:$0xff]
                %5688 = vst [vmem:[%s5670 + $0x140] sm:$0xff] %v5687
                %v5689 = vld [vmem:[%s5669 + $0x168] sm:$0xff]
                %5690 = vst [vmem:[%s5670 + $0x168] sm:$0xff] %v5689
                %v5691 = vld [vmem:[%s5669 + $0x190] sm:$0xff]
                %5692 = vst [vmem:[%s5670 + $0x190] sm:$0xff] %v5691
                %v5693 = vld [vmem:[%s5669 + $0x1b8] sm:$0xff]
                %5694 = vst [vmem:[%s5670 + $0x1b8] sm:$0xff] %v5693
                %v5695 = vld [vmem:[%s5669 + $0x1e0] sm:$0xff]
                %5696 = vst [vmem:[%s5670 + $0x1e0] sm:$0xff] %v5695
                %v5697 = vld [vmem:[%s5669 + $0x8] sm:$0xff]
                %5698 = vst [vmem:[%s5670 + $0x8] sm:$0xff] %v5697
                %v5699 = vld [vmem:[%s5669 + $0x30] sm:$0xff]
                %5700 = vst [vmem:[%s5670 + $0x30] sm:$0xff] %v5699
                %v5701 = vld [vmem:[%s5669 + $0x58] sm:$0xff]
                %5702 = vst [vmem:[%s5670 + $0x58] sm:$0xff] %v5701
                %v5703 = vld [vmem:[%s5669 + $0x80] sm:$0xff]
                %5704 = vst [vmem:[%s5670 + $0x80] sm:$0xff] %v5703
                %v5705 = vld [vmem:[%s5669 + $0xa8] sm:$0xff]
                %5706 = vst [vmem:[%s5670 + $0xa8] sm:$0xff] %v5705
                %v5707 = vld [vmem:[%s5669 + $0xd0] sm:$0xff]
                %5708 = vst [vmem:[%s5670 + $0xd0] sm:$0xff] %v5707
                %v5709 = vld [vmem:[%s5669 + $0xf8] sm:$0xff]
                %5710 = vst [vmem:[%s5670 + $0xf8] sm:$0xff] %v5709
                %v5711 = vld [vmem:[%s5669 + $0x120] sm:$0xff]
                %5712 = vst [vmem:[%s5670 + $0x120] sm:$0xff] %v5711
                %v5713 = vld [vmem:[%s5669 + $0x148] sm:$0xff]
                %5714 = vst [vmem:[%s5670 + $0x148] sm:$0xff] %v5713
                %v5715 = vld [vmem:[%s5669 + $0x170] sm:$0xff]
                %5716 = vst [vmem:[%s5670 + $0x170] sm:$0xff] %v5715
                %v5717 = vld [vmem:[%s5669 + $0x198] sm:$0xff]
                %5718 = vst [vmem:[%s5670 + $0x198] sm:$0xff] %v5717
                %v5719 = vld [vmem:[%s5669 + $0x1c0] sm:$0xff]
                %5720 = vst [vmem:[%s5670 + $0x1c0] sm:$0xff] %v5719
                %v5721 = vld [vmem:[%s5669 + $0x1e8] sm:$0xff]
                %5722 = vst [vmem:[%s5670 + $0x1e8] sm:$0xff] %v5721
                %v5723 = vld [vmem:[%s5669 + $0x10] sm:$0xff]
                %5724 = vst [vmem:[%s5670 + $0x10] sm:$0xff] %v5723
                %v5725 = vld [vmem:[%s5669 + $0x38] sm:$0xff]
                %5726 = vst [vmem:[%s5670 + $0x38] sm:$0xff] %v5725
                %v5727 = vld [vmem:[%s5669 + $0x60] sm:$0xff]
                %5728 = vst [vmem:[%s5670 + $0x60] sm:$0xff] %v5727
                %v5729 = vld [vmem:[%s5669 + $0x88] sm:$0xff]
                %5730 = vst [vmem:[%s5670 + $0x88] sm:$0xff] %v5729
                %v5731 = vld [vmem:[%s5669 + $0xb0] sm:$0xff]
                %5732 = vst [vmem:[%s5670 + $0xb0] sm:$0xff] %v5731
                %v5733 = vld [vmem:[%s5669 + $0xd8] sm:$0xff]
                %5734 = vst [vmem:[%s5670 + $0xd8] sm:$0xff] %v5733
                %v5735 = vld [vmem:[%s5669 + $0x100] sm:$0xff]
                %5736 = vst [vmem:[%s5670 + $0x100] sm:$0xff] %v5735
                %v5737 = vld [vmem:[%s5669 + $0x128] sm:$0xff]
                %5738 = vst [vmem:[%s5670 + $0x128] sm:$0xff] %v5737
                %v5739 = vld [vmem:[%s5669 + $0x150] sm:$0xff]
                %5740 = vst [vmem:[%s5670 + $0x150] sm:$0xff] %v5739
                %v5741 = vld [vmem:[%s5669 + $0x178] sm:$0xff]
                %5742 = vst [vmem:[%s5670 + $0x178] sm:$0xff] %v5741
                %v5743 = vld [vmem:[%s5669 + $0x1a0] sm:$0xff]
                %5744 = vst [vmem:[%s5670 + $0x1a0] sm:$0xff] %v5743
                %v5745 = vld [vmem:[%s5669 + $0x1c8] sm:$0xff]
                %5746 = vst [vmem:[%s5670 + $0x1c8] sm:$0xff] %v5745
                %v5747 = vld [vmem:[%s5669 + $0x1f0] sm:$0xff]
                %5748 = vst [vmem:[%s5670 + $0x1f0] sm:$0xff] %v5747
                %v5749 = vld [vmem:[%s5669 + $0x18] sm:$0xff]
                %5750 = vst [vmem:[%s5670 + $0x18] sm:$0xff] %v5749
                %v5751 = vld [vmem:[%s5669 + $0x40] sm:$0xff]
                %5752 = vst [vmem:[%s5670 + $0x40] sm:$0xff] %v5751
                %v5753 = vld [vmem:[%s5669 + $0x68] sm:$0xff]
                %5754 = vst [vmem:[%s5670 + $0x68] sm:$0xff] %v5753
                %v5755 = vld [vmem:[%s5669 + $0x90] sm:$0xff]
                %5756 = vst [vmem:[%s5670 + $0x90] sm:$0xff] %v5755
                %v5757 = vld [vmem:[%s5669 + $0xb8] sm:$0xff]
                %5758 = vst [vmem:[%s5670 + $0xb8] sm:$0xff] %v5757
                %v5759 = vld [vmem:[%s5669 + $0xe0] sm:$0xff]
                %5760 = vst [vmem:[%s5670 + $0xe0] sm:$0xff] %v5759
                %v5761 = vld [vmem:[%s5669 + $0x108] sm:$0xff]
                %5762 = vst [vmem:[%s5670 + $0x108] sm:$0xff] %v5761
                %v5763 = vld [vmem:[%s5669 + $0x130] sm:$0xff]
                %5764 = vst [vmem:[%s5670 + $0x130] sm:$0xff] %v5763
                %v5765 = vld [vmem:[%s5669 + $0x158] sm:$0xff]
                %5766 = vst [vmem:[%s5670 + $0x158] sm:$0xff] %v5765
                %v5767 = vld [vmem:[%s5669 + $0x180] sm:$0xff]
                %5768 = vst [vmem:[%s5670 + $0x180] sm:$0xff] %v5767
                %v5769 = vld [vmem:[%s5669 + $0x1a8] sm:$0xff]
                %5770 = vst [vmem:[%s5670 + $0x1a8] sm:$0xff] %v5769
                %v5771 = vld [vmem:[%s5669 + $0x1d0] sm:$0xff]
                %5772 = vst [vmem:[%s5670 + $0x1d0] sm:$0xff] %v5771
                %v5773 = vld [vmem:[%s5669 + $0x1f8] sm:$0xff]
                %5774 = vst [vmem:[%s5670 + $0x1f8] sm:$0xff] %v5773
                %v5775 = vld [vmem:[%s5669 + $0x20] sm:$0xff]
                %5776 = vst [vmem:[%s5670 + $0x20] sm:$0xff] %v5775
                %v5777 = vld [vmem:[%s5669 + $0x48] sm:$0xff]
                %5778 = vst [vmem:[%s5670 + $0x48] sm:$0xff] %v5777
                %v5779 = vld [vmem:[%s5669 + $0x70] sm:$0xff]
                %5780 = vst [vmem:[%s5670 + $0x70] sm:$0xff] %v5779
                %v5781 = vld [vmem:[%s5669 + $0x98] sm:$0xff]
                %5782 = vst [vmem:[%s5670 + $0x98] sm:$0xff] %v5781
                %v5783 = vld [vmem:[%s5669 + $0xc0] sm:$0xff]
                %5784 = vst [vmem:[%s5670 + $0xc0] sm:$0xff] %v5783
                %v5785 = vld [vmem:[%s5669 + $0xe8] sm:$0xff]
                %5786 = vst [vmem:[%s5670 + $0xe8] sm:$0xff] %v5785
                %v5787 = vld [vmem:[%s5669 + $0x110] sm:$0xff]
                %5788 = vst [vmem:[%s5670 + $0x110] sm:$0xff] %v5787
                %v5789 = vld [vmem:[%s5669 + $0x138] sm:$0xff]
                %5790 = vst [vmem:[%s5670 + $0x138] sm:$0xff] %v5789
                %v5791 = vld [vmem:[%s5669 + $0x160] sm:$0xff]
                %5792 = vst [vmem:[%s5670 + $0x160] sm:$0xff] %v5791
                %v5793 = vld [vmem:[%s5669 + $0x188] sm:$0xff]
                %5794 = vst [vmem:[%s5670 + $0x188] sm:$0xff] %v5793
                %v5795 = vld [vmem:[%s5669 + $0x1b0] sm:$0xff]
                %5796 = vst [vmem:[%s5670 + $0x1b0] sm:$0xff] %v5795
                %v5797 = vld [vmem:[%s5669 + $0x1d8] sm:$0xff]
                %5798 = vst [vmem:[%s5670 + $0x1d8] sm:$0xff] %v5797
                %v5799 = vld [vmem:[%s5669 + $0x200] sm:$0xff]
                %5800 = vst [vmem:[%s5670 + $0x200] sm:$0xff] %v5799
                %s5801 = sadd.s32 1, %s5668
                %p5802 = scmp.ge.s32.totalorder %s5801, %s5660
                %s5803 = scalar_select %p5802, 0, %s5801
                %s5804 = smul.u32 %s5803, 520
                %s5805 = smul.u32 %s5803, 520
                %s5806 = scalar_lea.vmem %s5439, %s5804 [#allocation3]
                %s5807 = scalar_lea.vmem %s5654, %s5805
              $region71: #{tpu_custom_call.1} parent=65 // loop_footer
                %s5665 = sadd.s32 %s5663, 1
              $region72: #{tpu_custom_call.1} parent=65 // loop_footer_branch
                %5662 = sbr.rel target = $region68
              $region73: #{tpu_custom_call.1} parent=65 // loop_exit
                _
              %s5808 = sdiv.u32.pop %s5648, 13
              %s5809 = srem.u32.pop %s5648, 13
              %s5810 = smul.u32 %s5808, 13
              %s5811 = smul.u32 40, %s5810
              %s5812 = scalar_lea.vmem %s5439, %s5811 [#allocation3]
              %s5813 = smul.u32 40, %s5810
              %s5814 = scalar_lea.vmem %s5654, %s5813
              // While loop
              $region74: #{tpu_custom_call.1} parent=65 // loop_pre_header
                _
              $region75: #{tpu_custom_call.1} parent=65 // loop_header
                %s5816 = sphi 0, %s5818
                %p5817 = scmp.ge.s32.totalorder %s5816, %s5809
                %s5821 = sphi 0, %s5836
                %s5822 = sphi %s5812, %s5839
                %s5823 = sphi %s5814, %s5840
              $region76: #{tpu_custom_call.1} parent=65 // loop_header_branch
                %5820 = sbr.rel (%p5817) target = $region80
              $region77: #{tpu_custom_call.1} parent=65 // loop_body
                %v5824 = vld [vmem:[%s5822] sm:$0xff]
                %5825 = vst [vmem:[%s5823] sm:$0xff] %v5824
                %v5826 = vld [vmem:[%s5822 + $0x8] sm:$0xff]
                %5827 = vst [vmem:[%s5823 + $0x8] sm:$0xff] %v5826
                %v5828 = vld [vmem:[%s5822 + $0x10] sm:$0xff]
                %5829 = vst [vmem:[%s5823 + $0x10] sm:$0xff] %v5828
                %v5830 = vld [vmem:[%s5822 + $0x18] sm:$0xff]
                %5831 = vst [vmem:[%s5823 + $0x18] sm:$0xff] %v5830
                %v5832 = vld [vmem:[%s5822 + $0x20] sm:$0xff]
                %5833 = vst [vmem:[%s5823 + $0x20] sm:$0xff] %v5832
                %s5834 = sadd.s32 1, %s5821
                %p5835 = scmp.ge.s32.totalorder %s5834, %s5809
                %s5836 = scalar_select %p5835, 0, %s5834
                %s5837 = smul.u32 %s5836, 40
                %s5838 = smul.u32 %s5836, 40
                %s5839 = scalar_lea.vmem %s5812, %s5837 [#allocation3]
                %s5840 = scalar_lea.vmem %s5814, %s5838
              $region78: #{tpu_custom_call.1} parent=65 // loop_footer
                %s5818 = sadd.s32 %s5816, 1
              $region79: #{tpu_custom_call.1} parent=65 // loop_footer_branch
                %5815 = sbr.rel target = $region75
              $region80: #{tpu_custom_call.1} parent=65 // loop_exit
                _
            $region66: #{tpu_custom_call.1} parent=61 // pred_fallthru
              _
            // Predicated region
            $region81: #{tpu_custom_call.1} parent=61 // pred_check
              _
            $region82: #{tpu_custom_call.1} parent=61 // pred_check_branch
              %5842 = sbr.rel target = $region84
            $region83: #{tpu_custom_call.1} parent=61 // pred_region
              _
            $region84: #{tpu_custom_call.1} parent=61 // pred_fallthru
              _
          $region62: #{tpu_custom_call.1} parent=57 // pred_fallthru
            _
          %5843 = vnop
        $region58: #{tpu_custom_call.1} parent=23 // pred_fallthru
          _
      $region24: #{tpu_custom_call.1} parent=5 // pred_fallthru
        _
      %p5844 = scmp.le.s32.totalorder 2, %s9
      // Predicated region
      $region85: #{tpu_custom_call.1} parent=5 // pred_check
        %p5845 = pneg %p5844
      $region86: #{tpu_custom_call.1} parent=5 // pred_check_branch
        %5847 = sbr.rel (%p5845) target = $region88
      $region87: #{tpu_custom_call.1} parent=5 // pred_region
        %s5848 = ssub.s32 %s9, 2
        // Predicated region
        $region89: #{tpu_custom_call.1} parent=87 // pred_check
          %p5849 = pneg %p64
        $region90: #{tpu_custom_call.1} parent=87 // pred_check_branch
          %5851 = sbr.rel (%p5849) target = $region92
        $region91: #{tpu_custom_call.1} parent=87 // pred_region
          %s5852 = sand.u32 %s49, 1
          %s5853 = sand.u32 %s49, 1
          %s5854 = smul.addr %s5853, 4280
          %s5855 = scalar_lea.vmem [#allocation2], %s5854
        $region92: #{tpu_custom_call.1} parent=87 // pred_fallthru
          _
        // Predicated region
        $region93: #{tpu_custom_call.1} parent=87 // pred_check
          %p5856 = pneg %p90
        $region94: #{tpu_custom_call.1} parent=87 // pred_check_branch
          %5858 = sbr.rel (%p5856) target = $region96
        $region95: #{tpu_custom_call.1} parent=87 // pred_region
          %s5859 = sand.u32 %s75, 1
          %s5860 = sand.u32 %s75, 1
          %s5861 = smul.addr %s5860, 4280
          %s5862 = scalar_lea.vmem [#allocation3], %s5861
        $region96: #{tpu_custom_call.1} parent=87 // pred_fallthru
          _
      $region88: #{tpu_custom_call.1} parent=5 // pred_fallthru
        _
    $region6: #{tpu_custom_call.1} parent=1 // loop_footer
      %s13 = sadd.s32 1, %s9
    $region7: #{tpu_custom_call.1} parent=1 // loop_footer_branch
      %8 = sbr.rel target = $region3
    $region8: #{tpu_custom_call.1} parent=1 // loop_exit
      _

</llo_original>
